<compile_context>
chip_gen: v7x
topology: tpu7x:2x2x1
jax: 0.10.0
libtpu: 0.0.40
codegen_flags: <defaults>
</compile_context>

<pallas_src>
import math
import functools

import numpy as np
import jax
import jax.numpy as jnp
from jax import lax
from jax.experimental import pallas as pl
from jax.experimental.pallas import tpu as pltpu

NEG_INF = -1e30
SQRT_2_INV = 1.0 / math.sqrt(2.0)


# ----------------------- small synthetic WavLMConfig -----------------------
class Cfg:
    hidden_size = 32
    num_attention_heads = 4
    intermediate_size = 64
    num_hidden_layers = 2
    num_conv_pos_embeddings = 16
    num_conv_pos_embedding_groups = 4
    num_buckets = 32
    max_bucket_distance = 128
    layer_norm_eps = 1e-5
    conv_kernel = (10, 3, 3, 3, 3, 2, 2)
    conv_stride = (5, 2, 2, 2, 2, 2, 2)
    mask_time_prob = 0.05      # training-only branch (not executed in eval)
    mask_feature_prob = 0.0


# ------------------------------ tiling helper -------------------------------
def _pick_tile(dim, target, align):
    """Largest tile <= target that divides dim and is `align`-aligned; else full dim."""
    if dim <= target:
        return dim
    t = (target // align) * align
    while t >= align:
        if dim % t == 0:
            return t
        t -= align
    return dim


def _gelu(y):
    # exact (erf) GELU, matching torch.nn.GELU default, in f32
    return 0.5 * y * (1.0 + lax.erf(y * SQRT_2_INV))


# ------------------------------ Pallas kernels ------------------------------
def _matmul_kernel(x_ref, w_ref, b_ref, o_ref, acc_ref, *, act):
    @pl.when(pl.program_id(2) == 0)
    def _():
        acc_ref[...] = jnp.zeros_like(acc_ref)

    a = x_ref[...].astype(jnp.bfloat16)
    w = w_ref[...].astype(jnp.bfloat16)
    acc_ref[...] += jnp.dot(a, w, preferred_element_type=jnp.float32)

    @pl.when(pl.program_id(2) == pl.num_programs(2) - 1)
    def _():
        y = acc_ref[...] + b_ref[...].astype(jnp.float32)
        if act == "gelu":
            y = _gelu(y)
        elif act == "relu":
            y = jnp.maximum(y, 0.0)
        o_ref[...] = y.astype(o_ref.dtype)


def pallas_linear(x2d, w, b, act=None, tm=256, tn=256, tk=512):
    M, K = x2d.shape
    N = w.shape[1]
    tm = _pick_tile(M, tm, 128)
    tn = _pick_tile(N, tn, 128)
    tk = _pick_tile(K, tk, 128)
    return pl.pallas_call(
        functools.partial(_matmul_kernel, act=act),
        out_shape=jax.ShapeDtypeStruct((M, N), jnp.float32),
        grid=(M // tm, N // tn, K // tk),
        in_specs=[
            pl.BlockSpec((tm, tk), lambda i, j, k: (i, k)),
            pl.BlockSpec((tk, tn), lambda i, j, k: (k, j)),
            pl.BlockSpec((1, tn), lambda i, j, k: (0, j)),
        ],
        out_specs=pl.BlockSpec((tm, tn), lambda i, j, k: (i, j)),
        scratch_shapes=[pltpu.VMEM((tm, tn), jnp.float32)],
        compiler_params=pltpu.CompilerParams(
            dimension_semantics=("parallel", "parallel", "arbitrary")),
    )(x2d, w, b.reshape(1, N))


def _ffn_kernel(x_ref, w1_ref, b1_ref, w2_ref, b2_ref, o_ref, acc_ref):
    # fused FF1(GELU) -> FF2, K-tiled over the intermediate dim (last grid axis)
    j = pl.program_id(1)

    @pl.when(j == 0)
    def _():
        acc_ref[...] = jnp.zeros_like(acc_ref)

    x = x_ref[...].astype(jnp.bfloat16)
    t = jnp.dot(x, w1_ref[...].astype(jnp.bfloat16),
                preferred_element_type=jnp.float32)
    t = _gelu(t + b1_ref[...].astype(jnp.float32))
    acc_ref[...] += jnp.dot(t.astype(jnp.bfloat16),
                            w2_ref[...].astype(jnp.bfloat16),
                            preferred_element_type=jnp.float32)

    @pl.when(j == pl.num_programs(1) - 1)
    def _():
        o_ref[...] = (acc_ref[...] + b2_ref[...].astype(jnp.float32)).astype(o_ref.dtype)


def pallas_ffn(x2d, w1, b1, w2, b2, tm=256, ti=512):
    M, H = x2d.shape
    I = w1.shape[1]
    tm = _pick_tile(M, tm, 128)
    ti = _pick_tile(I, ti, 128)
    return pl.pallas_call(
        _ffn_kernel,
        out_shape=jax.ShapeDtypeStruct((M, H), jnp.float32),
        grid=(M // tm, I // ti),
        in_specs=[
            pl.BlockSpec((tm, H), lambda i, j: (i, 0)),
            pl.BlockSpec((H, ti), lambda i, j: (0, j)),
            pl.BlockSpec((1, ti), lambda i, j: (0, j)),
            pl.BlockSpec((ti, H), lambda i, j: (j, 0)),
            pl.BlockSpec((1, H), lambda i, j: (0, 0)),
        ],
        out_specs=pl.BlockSpec((tm, H), lambda i, j: (i, 0)),
        scratch_shapes=[pltpu.VMEM((tm, H), jnp.float32)],
        compiler_params=pltpu.CompilerParams(
            dimension_semantics=("parallel", "arbitrary")),
    )(x2d, w1, b1.reshape(1, I), w2, b2.reshape(1, H))


def _add_ln_kernel(r_ref, x_ref, g_ref, b_ref, o_ref, *, eps, relu):
    x = r_ref[...].astype(jnp.float32) + x_ref[...].astype(jnp.float32)
    mu = jnp.mean(x, axis=-1, keepdims=True)
    var = jnp.mean((x - mu) ** 2, axis=-1, keepdims=True)
    y = (x - mu) * lax.rsqrt(var + eps)
    y = y * g_ref[...].astype(jnp.float32) + b_ref[...].astype(jnp.float32)
    if relu:
        y = jnp.maximum(y, 0.0)
    o_ref[...] = y.astype(o_ref.dtype)


def pallas_add_layernorm(res2d, x2d, g, b, eps, relu=False, tm=512):
    M, H = res2d.shape
    tm = _pick_tile(M, tm, 8)
    return pl.pallas_call(
        functools.partial(_add_ln_kernel, eps=eps, relu=relu),
        out_shape=jax.ShapeDtypeStruct((M, H), jnp.float32),
        grid=(M // tm,),
        in_specs=[
            pl.BlockSpec((tm, H), lambda i: (i, 0)),
            pl.BlockSpec((tm, H), lambda i: (i, 0)),
            pl.BlockSpec((1, H), lambda i: (0, 0)),
            pl.BlockSpec((1, H), lambda i: (0, 0)),
        ],
        out_specs=pl.BlockSpec((tm, H), lambda i: (i, 0)),
        compiler_params=pltpu.CompilerParams(dimension_semantics=("parallel",)),
    )(res2d, x2d, g.reshape(1, H), b.reshape(1, H))


def _attn_kernel(q_ref, k_ref, v_ref, bias_ref, gate_ref, mask_ref, o_ref):
    # one batch per grid step; all heads at once (wider effective matmul).
    q = q_ref[...][0].astype(jnp.bfloat16)            # (nH, T, dh), scale pre-folded
    k = k_ref[...][0].astype(jnp.bfloat16)            # (nH, T, dh)
    v = v_ref[...][0].astype(jnp.bfloat16)            # (nH, T, dh)
    bias = bias_ref[...].astype(jnp.float32)          # (nH, T, T) shared across batch
    gate = gate_ref[...][0].astype(jnp.float32)       # (nH, T, 1)
    madd = mask_ref[...][0, 0].astype(jnp.float32)    # (1, T)

    s = jnp.einsum('hqd,hkd->hqk', q, k, preferred_element_type=jnp.float32)
    s = s + gate * bias + madd[None, :, :]            # gated rel-pos bias built in-kernel
    m = jnp.max(s, axis=-1, keepdims=True)
    p = jnp.exp(s - m)
    l = jnp.sum(p, axis=-1, keepdims=True)
    p = p * pl.reciprocal(l, approx=True)
    out = jnp.einsum('hqk,hkd->hqd', p.astype(jnp.bfloat16), v,
                     preferred_element_type=jnp.float32)
    o_ref[...] = out[None].astype(o_ref.dtype)


def pallas_attention(q, k, v, pos_bias, gate, mask_add):
    # TODO(synk): for large T convert to flash-style online softmax over KV tiles
    # so the (T, T) score block never exceeds VMEM (matters on v7x's 64 MiB).
    B, nH, T, dh = q.shape
    return pl.pallas_call(
        _attn_kernel,
        out_shape=jax.ShapeDtypeStruct((B, nH, T, dh), jnp.float32),
        grid=(B,),
        in_specs=[
            pl.BlockSpec((1, nH, T, dh), lambda b: (b, 0, 0, 0)),
            pl.BlockSpec((1, nH, T, dh), lambda b: (b, 0, 0, 0)),
            pl.BlockSpec((1, nH, T, dh), lambda b: (b, 0, 0, 0)),
            pl.BlockSpec((nH, T, T), lambda b: (0, 0, 0)),
            pl.BlockSpec((1, nH, T, 1), lambda b: (b, 0, 0, 0)),
            pl.BlockSpec((1, 1, 1, T), lambda b: (b, 0, 0, 0)),
        ],
        out_specs=pl.BlockSpec((1, nH, T, dh), lambda b: (b, 0, 0, 0)),
        compiler_params=pltpu.CompilerParams(dimension_semantics=("parallel",)),
    )(q, k, v, pos_bias, gate, mask_add)


def _posconv_kernel(x_ref, w_ref, b_ref, o_ref, *, K, T):
    # grouped positional Conv1d, one (batch, group) tile per step;
    # the K-window slices are generated from the VMEM copy of x (no im2col in HBM).
    x = x_ref[...][0, 0]                               # (T_pad, cg)
    w = w_ref[...][0]                                  # (K, cg, cg)
    cg = o_ref.shape[-1]
    acc = jnp.zeros((T, cg), jnp.float32)
    for kk in range(K):                                # K is a small static constant
        xk = x[kk:kk + T, :].astype(jnp.bfloat16)
        wk = w[kk].astype(jnp.bfloat16)
        acc = acc + jnp.dot(xk, wk, preferred_element_type=jnp.float32)
    y = acc + b_ref[...][0].astype(jnp.float32)        # (T, cg) + (1, cg)
    y = _gelu(y)
    o_ref[...] = y[None, None].astype(o_ref.dtype)


def pallas_pos_conv(xg_pad, w_g, b_g, T):
    B, g, Tp, cg = xg_pad.shape
    K = w_g.shape[1]
    return pl.pallas_call(
        functools.partial(_posconv_kernel, K=K, T=T),
        out_shape=jax.ShapeDtypeStruct((B, g, T, cg), jnp.float32),
        grid=(B, g),
        in_specs=[
            pl.BlockSpec((1, 1, Tp, cg), lambda b, gi: (b, gi, 0, 0)),
            pl.BlockSpec((1, K, cg, cg), lambda b, gi: (gi, 0, 0, 0)),
            pl.BlockSpec((1, 1, cg), lambda b, gi: (gi, 0, 0)),
        ],
        out_specs=pl.BlockSpec((1, 1, T, cg), lambda b, gi: (b, gi, 0, 0)),
        compiler_params=pltpu.CompilerParams(
            dimension_semantics=("parallel", "parallel")),
    )(xg_pad, w_g, b_g)


# ------------------------------- model glue --------------------------------
def feat_extract_output_lengths(lengths, cfg):
    l = lengths
    for k, s in zip(cfg.conv_kernel, cfg.conv_stride):
        l = (l - k) // s + 1
    return l


def compute_position_bias(rel_embed, T, cfg):
    # T5-style bidirectional relative-position buckets (WavLM compute_bias)
    nb = cfg.num_buckets // 2
    ctx = np.arange(T)[:, None]
    mem = np.arange(T)[None, :]
    rel = mem - ctx
    buckets = (rel > 0).astype(np.int64) * nb
    rel_abs = np.abs(rel)
    max_exact = nb // 2
    is_small = rel_abs < max_exact
    rel_large = (np.log(np.maximum(rel_abs, 1) / max_exact)
                 / math.log(cfg.max_bucket_distance / max_exact)
                 * (nb - max_exact))
    rel_large = np.minimum((max_exact + rel_large).astype(np.int64), nb - 1)
    buckets = buckets + np.where(is_small, rel_abs, rel_large)
    vals = rel_embed[jnp.asarray(buckets, jnp.int32)]          # (T, T, nH)
    return jnp.transpose(vals, (2, 0, 1)).astype(jnp.float32)  # (nH, T, T)


def prepare_inference_params(params, cfg, T):
    """Hoist all weight reshaping / fusion / bucket tables out of the traced fwd."""
    H = cfg.hidden_size
    nH = cfg.num_attention_heads
    dh = H // nH
    scale = dh ** -0.5
    K = cfg.num_conv_pos_embeddings
    g = cfg.num_conv_pos_embedding_groups
    cg = H // g

    # TODO(synk): PyTorch weight_norm (g*v/||v||) assumed already folded into pos_conv w.
    w = params["pos_conv"]["w"]                        # (Cout=H, Cin/g=cg, K)
    wg = w.reshape(g, cg, cg, K)                       # (g, co, ci, k)
    wg = jnp.transpose(wg, (0, 3, 2, 1))               # (g, k, ci, co)
    prep = {
        "pos_conv": {"w": wg.astype(jnp.bfloat16),
                     "b": params["pos_conv"]["b"].reshape(g, 1, cg)},
        "ln": params["ln"],
        "pos_bias": compute_position_bias(params["rel_attn_embed"], T, cfg),
        "layers": [],
    }
    for lp in params["layers"]:
        qkv_w = jnp.concatenate([lp["q_w"] * scale, lp["k_w"], lp["v_w"]], axis=1)
        qkv_b = jnp.concatenate([lp["q_b"] * scale, lp["k_b"], lp["v_b"]])
        prep["layers"].append({
            "qkv_w": qkv_w.astype(jnp.bfloat16), "qkv_b": qkv_b,
            "o_w": lp["o_w"].astype(jnp.bfloat16), "o_b": lp["o_b"],
            "gru_w": lp["gru_w"], "gru_b": lp["gru_b"], "gru_const": lp["gru_const"],
            "ln1_g": lp["ln1_g"], "ln1_b": lp["ln1_b"],
            "ff1_w": lp["ff1_w"].astype(jnp.bfloat16), "ff1_b": lp["ff1_b"],
            "ff2_w": lp["ff2_w"].astype(jnp.bfloat16), "ff2_b": lp["ff2_b"],
            "ln2_g": lp["ln2_g"], "ln2_b": lp["ln2_b"],
        })
    return prep


def pos_conv_embed(p, x, cfg):
    B, T, H = x.shape
    K = cfg.num_conv_pos_embeddings
    g = cfg.num_conv_pos_embedding_groups
    cg = H // g
    pad = K // 2
    # (B, T, H) -> (B, g, T_pad, cg): group axis explicit so each kernel step
    # only loads its own group's channels (no K x / g x duplication in HBM).
    xg = x.reshape(B, T, g, cg).transpose(0, 2, 1, 3)
    xg = jnp.pad(xg, ((0, 0), (0, 0), (pad, pad), (0, 0)))
    out = pallas_pos_conv(xg, p["w"], p["b"], T)       # (B, g, T, cg)
    # even kernel: WavLMSamePadLayer drops the trailing frame -> taking the first
    # T output positions (as done in the kernel) is equivalent.
    return out.transpose(0, 2, 1, 3).reshape(B, T, H)


def encoder_layer(p, h, pos_bias, mask_add, cfg, final_relu):
    B, T, H = h.shape
    nH = cfg.num_attention_heads
    dh = H // nH
    eps = cfg.layer_norm_eps

    x2 = h.reshape(B * T, H)

    # fused Q/K/V projection (attention scale pre-folded into the Q columns)
    qkv = pallas_linear(x2, p["qkv_w"], p["qkv_b"])                 # (B*T, 3H)
    qkv = qkv.reshape(B, T, 3, nH, dh).transpose(2, 0, 3, 1, 4)     # (3, B, nH, T, dh)
    q, k, v = qkv[0], qkv[1], qkv[2]

    # WavLM gated relative-position gate (tiny N=8 projection -> leave to XLA)
    g_in = h.reshape(B, T, nH, dh).transpose(0, 2, 1, 3)            # (B, nH, T, dh)
    gproj = jnp.einsum('bhtd,de->bhte', g_in, p["gru_w"]) + p["gru_b"]
    gproj = gproj.reshape(B, nH, T, 2, 4).sum(-1)
    gates = jax.nn.sigmoid(gproj)
    gate_out = (gates[..., 0:1]
                * (gates[..., 1:2] * p["gru_const"].reshape(1, nH, 1, 1) - 1.0)
                + 2.0)                                              # (B, nH, T, 1)

    attn = pallas_attention(q, k, v, pos_bias, gate_out, mask_add)  # (B, nH, T, dh)
    attn = attn.transpose(0, 2, 1, 3).reshape(B * T, H)
    attn = pallas_linear(attn, p["o_w"], p["o_b"])

    # residual + LN fused; dropout = identity in eval
    h1 = pallas_add_layernorm(x2, attn, p["ln1_g"], p["ln1_b"], eps)
    ff = pallas_ffn(h1, p["ff1_w"], p["ff1_b"], p["ff2_w"], p["ff2_b"])
    h2 = pallas_add_layernorm(h1, ff, p["ln2_g"], p["ln2_b"], eps,
                              relu=final_relu)   # wrapper ReLU folded into last LN
    return h2.reshape(B, T, H)


def wavlm_wrapper_forward(prep, x, length, cfg):
    """WavLMEncoderWrapper.forward (eval mode): mask from lengths -> encoder -> ReLU."""
    B, T, H = x.shape
    out_len = feat_extract_output_lengths(length, cfg)
    mask = jnp.arange(T)[None, :] < out_len[:, None]                 # (B, T) bool
    # TODO(synk): training-time SpecAugment masking (_compute_mask_indices /
    # masked_spec_embed fill) only runs when self.training; eval path here.

    # --- WavLMEncoder ---
    h = jnp.where(mask[:, :, None], x, 0.0)                          # zero padded tokens
    pos = pos_conv_embed(prep["pos_conv"], h, cfg)
    h = pallas_add_layernorm(h.reshape(B * T, H), pos.reshape(B * T, H),
                             prep["ln"]["g"], prep["ln"]["b"],
                             cfg.layer_norm_eps).reshape(B, T, H)
    mask_add = jnp.where(mask, 0.0, NEG_INF).astype(jnp.float32).reshape(B, 1, 1, T)

    n_layers = len(prep["layers"])
    for li, lp in enumerate(prep["layers"]):
        h = encoder_layer(lp, h, prep["pos_bias"], mask_add, cfg,
                          final_relu=(li == n_layers - 1))
    return h                                                          # reps = relu(enc_out), fused


# ------------------------------ param init ---------------------------------
def init_params(cfg, key):
    H = cfg.hidden_size
    nH = cfg.num_attention_heads
    dh = H // nH
    I = cfg.intermediate_size
    K = cfg.num_conv_pos_embeddings
    g = cfg.num_conv_pos_embedding_groups
    keys = iter(jax.random.split(key, 256))

    def w(shape, scale=0.02):
        return scale * jax.random.normal(next(keys), shape, jnp.float32)

    params = {
        "masked_spec_embed": jax.random.uniform(next(keys), (H,), jnp.float32),  # unused in eval
        "pos_conv": {"w": w((H, H // g, K)), "b": w((H,))},
        "ln": {"g": jnp.ones((H,), jnp.float32), "b": jnp.zeros((H,), jnp.float32)},
        "rel_attn_embed": w((cfg.num_buckets, nH)),
        "layers": [],
    }
    for _ in range(cfg.num_hidden_layers):
        params["layers"].append({
            "q_w": w((H, H)), "q_b": w((H,)),
            "k_w": w((H, H)), "k_b": w((H,)),
            "v_w": w((H, H)), "v_b": w((H,)),
            "o_w": w((H, H)), "o_b": w((H,)),
            "gru_w": w((dh, 8)), "gru_b": w((8,)),
            "gru_const": jnp.ones((nH,), jnp.float32),
            "ln1_g": jnp.ones((H,), jnp.float32), "ln1_b": jnp.zeros((H,), jnp.float32),
            "ff1_w": w((H, I)), "ff1_b": w((I,)),
            "ff2_w": w((I, H)), "ff2_b": w((H,)),
            "ln2_g": jnp.ones((H,), jnp.float32), "ln2_b": jnp.zeros((H,), jnp.float32),
        })
    return params


# ---------------------------------- main ------------------------------------
if __name__ == "__main__":
    cfg = Cfg()
    key = jax.random.PRNGKey(0)
    k_param, k_x = jax.random.split(key)

    B, T, H = 2, 8, cfg.hidden_size
    x = jax.random.normal(k_x, (B, T, H), jnp.float32)          # hidden_states (B, T, H)
    # raw waveform sample lengths -> feature lengths [8, 6] after the conv stack
    length = jnp.array([2700, 2000], jnp.int32)

    params = init_params(cfg, k_param)
    prep = prepare_inference_params(params, cfg, T)             # hoisted out of traced fwd

    fwd = jax.jit(functools.partial(wavlm_wrapper_forward, cfg=cfg))
    reps = fwd(prep, x, length)
    reps = jax.block_until_ready(reps)

    assert reps.shape == (B, T, H)
    assert bool(jnp.all(jnp.isfinite(reps)))
    assert bool(jnp.all(reps >= 0.0))   # final ReLU (fused into last add+LN kernel)
    print("KERNEL_OK")
</pallas_src>

<mosaic_0001>
module attributes {stable_mosaic.version = 11 : i64} {
  func.func @_posconv_kernel(%arg0: i32, %arg1: i32, %arg2: memref<1x1x24x8xf32, #tpu.memory_space<vmem>>, %arg3: memref<1x16x8x8xbf16, #tpu.memory_space<vmem>>, %arg4: memref<1x1x8xf32, #tpu.memory_space<vmem>>, %arg5: memref<1x1x8x8xf32, #tpu.memory_space<vmem>>) attributes {dimension_semantics = [#tpu.dimension_semantics<parallel>, #tpu.dimension_semantics<parallel>], iteration_bounds = array<i64: 2, 4>, scalar_prefetch = 0 : i64, scratch_operands = 0 : i64, tpu.core_type = #tpu.core_type<tc>, window_params = [{transform_indices = @transform_0, window_bounds = array<i64: 1, 1, 24, 8>}, {transform_indices = @transform_1, window_bounds = array<i64: 1, 16, 8, 8>}, {transform_indices = @transform_2, window_bounds = array<i64: 1, 1, 8>}, {transform_indices = @transform_3, window_bounds = array<i64: 1, 1, 8, 8>}]} {
    %c0 = arith.constant 0 : index
    %c0_0 = arith.constant 0 : index
    %c0_1 = arith.constant 0 : index
    %c0_2 = arith.constant 0 : index
    %0 = vector.load %arg2[%c0, %c0_0, %c0_1, %c0_2] : memref<1x1x24x8xf32, #tpu.memory_space<vmem>>, vector<1x1x24x8xf32>
    %1 = vector.shape_cast %0 : vector<1x1x24x8xf32> to vector<24x8xf32>
    %c0_3 = arith.constant 0 : index
    %c0_4 = arith.constant 0 : index
    %c0_5 = arith.constant 0 : index
    %c0_6 = arith.constant 0 : index
    %2 = vector.load %arg3[%c0_3, %c0_4, %c0_5, %c0_6] : memref<1x16x8x8xbf16, #tpu.memory_space<vmem>>, vector<1x16x8x8xbf16>
    %3 = vector.shape_cast %2 : vector<1x16x8x8xbf16> to vector<16x8x8xbf16>
    %cst = arith.constant 0.000000e+00 : f32
    %4 = vector.broadcast %cst : f32 to vector<8x8xf32>
    %5 = vector.extract_strided_slice %1 {offsets = [0, 0], sizes = [8, 8], strides = [1, 1]} : vector<24x8xf32> to vector<8x8xf32>
    %6 = arith.truncf %5 : vector<8x8xf32> to vector<8x8xbf16>
    %7 = vector.extract_strided_slice %3 {offsets = [0, 0, 0], sizes = [1, 8, 8], strides = [1, 1, 1]} : vector<16x8x8xbf16> to vector<1x8x8xbf16>
    %8 = vector.shape_cast %7 : vector<1x8x8xbf16> to vector<8x8xbf16>
    %cst_7 = arith.constant dense<0.000000e+00> : vector<8x8xf32>
    %9 = tpu.matmul %6, %8, %cst_7 {dimension_numbers = #tpu.dot_dimension_numbers<[1], [0], [0], [1], [0, 0, 1, 1], [], []>} : vector<8x8xbf16>, vector<8x8xbf16>, vector<8x8xf32> -> vector<8x8xf32>
    %10 = arith.addf %4, %9 : vector<8x8xf32>
    %11 = vector.extract_strided_slice %1 {offsets = [1, 0], sizes = [8, 8], strides = [1, 1]} : vector<24x8xf32> to vector<8x8xf32>
    %12 = arith.truncf %11 : vector<8x8xf32> to vector<8x8xbf16>
    %13 = vector.extract_strided_slice %3 {offsets = [1, 0, 0], sizes = [1, 8, 8], strides = [1, 1, 1]} : vector<16x8x8xbf16> to vector<1x8x8xbf16>
    %14 = vector.shape_cast %13 : vector<1x8x8xbf16> to vector<8x8xbf16>
    %cst_8 = arith.constant dense<0.000000e+00> : vector<8x8xf32>
    %15 = tpu.matmul %12, %14, %cst_8 {dimension_numbers = #tpu.dot_dimension_numbers<[1], [0], [0], [1], [0, 0, 1, 1], [], []>} : vector<8x8xbf16>, vector<8x8xbf16>, vector<8x8xf32> -> vector<8x8xf32>
    %16 = arith.addf %10, %15 : vector<8x8xf32>
    %17 = vector.extract_strided_slice %1 {offsets = [2, 0], sizes = [8, 8], strides = [1, 1]} : vector<24x8xf32> to vector<8x8xf32>
    %18 = arith.truncf %17 : vector<8x8xf32> to vector<8x8xbf16>
    %19 = vector.extract_strided_slice %3 {offsets = [2, 0, 0], sizes = [1, 8, 8], strides = [1, 1, 1]} : vector<16x8x8xbf16> to vector<1x8x8xbf16>
    %20 = vector.shape_cast %19 : vector<1x8x8xbf16> to vector<8x8xbf16>
    %cst_9 = arith.constant dense<0.000000e+00> : vector<8x8xf32>
    %21 = tpu.matmul %18, %20, %cst_9 {dimension_numbers = #tpu.dot_dimension_numbers<[1], [0], [0], [1], [0, 0, 1, 1], [], []>} : vector<8x8xbf16>, vector<8x8xbf16>, vector<8x8xf32> -> vector<8x8xf32>
    %22 = arith.addf %16, %21 : vector<8x8xf32>
    %23 = vector.extract_strided_slice %1 {offsets = [3, 0], sizes = [8, 8], strides = [1, 1]} : vector<24x8xf32> to vector<8x8xf32>
    %24 = arith.truncf %23 : vector<8x8xf32> to vector<8x8xbf16>
    %25 = vector.extract_strided_slice %3 {offsets = [3, 0, 0], sizes = [1, 8, 8], strides = [1, 1, 1]} : vector<16x8x8xbf16> to vector<1x8x8xbf16>
    %26 = vector.shape_cast %25 : vector<1x8x8xbf16> to vector<8x8xbf16>
    %cst_10 = arith.constant dense<0.000000e+00> : vector<8x8xf32>
    %27 = tpu.matmul %24, %26, %cst_10 {dimension_numbers = #tpu.dot_dimension_numbers<[1], [0], [0], [1], [0, 0, 1, 1], [], []>} : vector<8x8xbf16>, vector<8x8xbf16>, vector<8x8xf32> -> vector<8x8xf32>
    %28 = arith.addf %22, %27 : vector<8x8xf32>
    %29 = vector.extract_strided_slice %1 {offsets = [4, 0], sizes = [8, 8], strides = [1, 1]} : vector<24x8xf32> to vector<8x8xf32>
    %30 = arith.truncf %29 : vector<8x8xf32> to vector<8x8xbf16>
    %31 = vector.extract_strided_slice %3 {offsets = [4, 0, 0], sizes = [1, 8, 8], strides = [1, 1, 1]} : vector<16x8x8xbf16> to vector<1x8x8xbf16>
    %32 = vector.shape_cast %31 : vector<1x8x8xbf16> to vector<8x8xbf16>
    %cst_11 = arith.constant dense<0.000000e+00> : vector<8x8xf32>
    %33 = tpu.matmul %30, %32, %cst_11 {dimension_numbers = #tpu.dot_dimension_numbers<[1], [0], [0], [1], [0, 0, 1, 1], [], []>} : vector<8x8xbf16>, vector<8x8xbf16>, vector<8x8xf32> -> vector<8x8xf32>
    %34 = arith.addf %28, %33 : vector<8x8xf32>
    %35 = vector.extract_strided_slice %1 {offsets = [5, 0], sizes = [8, 8], strides = [1, 1]} : vector<24x8xf32> to vector<8x8xf32>
    %36 = arith.truncf %35 : vector<8x8xf32> to vector<8x8xbf16>
    %37 = vector.extract_strided_slice %3 {offsets = [5, 0, 0], sizes = [1, 8, 8], strides = [1, 1, 1]} : vector<16x8x8xbf16> to vector<1x8x8xbf16>
    %38 = vector.shape_cast %37 : vector<1x8x8xbf16> to vector<8x8xbf16>
    %cst_12 = arith.constant dense<0.000000e+00> : vector<8x8xf32>
    %39 = tpu.matmul %36, %38, %cst_12 {dimension_numbers = #tpu.dot_dimension_numbers<[1], [0], [0], [1], [0, 0, 1, 1], [], []>} : vector<8x8xbf16>, vector<8x8xbf16>, vector<8x8xf32> -> vector<8x8xf32>
    %40 = arith.addf %34, %39 : vector<8x8xf32>
    %41 = vector.extract_strided_slice %1 {offsets = [6, 0], sizes = [8, 8], strides = [1, 1]} : vector<24x8xf32> to vector<8x8xf32>
    %42 = arith.truncf %41 : vector<8x8xf32> to vector<8x8xbf16>
    %43 = vector.extract_strided_slice %3 {offsets = [6, 0, 0], sizes = [1, 8, 8], strides = [1, 1, 1]} : vector<16x8x8xbf16> to vector<1x8x8xbf16>
    %44 = vector.shape_cast %43 : vector<1x8x8xbf16> to vector<8x8xbf16>
    %cst_13 = arith.constant dense<0.000000e+00> : vector<8x8xf32>
    %45 = tpu.matmul %42, %44, %cst_13 {dimension_numbers = #tpu.dot_dimension_numbers<[1], [0], [0], [1], [0, 0, 1, 1], [], []>} : vector<8x8xbf16>, vector<8x8xbf16>, vector<8x8xf32> -> vector<8x8xf32>
    %46 = arith.addf %40, %45 : vector<8x8xf32>
    %47 = vector.extract_strided_slice %1 {offsets = [7, 0], sizes = [8, 8], strides = [1, 1]} : vector<24x8xf32> to vector<8x8xf32>
    %48 = arith.truncf %47 : vector<8x8xf32> to vector<8x8xbf16>
    %49 = vector.extract_strided_slice %3 {offsets = [7, 0, 0], sizes = [1, 8, 8], strides = [1, 1, 1]} : vector<16x8x8xbf16> to vector<1x8x8xbf16>
    %50 = vector.shape_cast %49 : vector<1x8x8xbf16> to vector<8x8xbf16>
    %cst_14 = arith.constant dense<0.000000e+00> : vector<8x8xf32>
    %51 = tpu.matmul %48, %50, %cst_14 {dimension_numbers = #tpu.dot_dimension_numbers<[1], [0], [0], [1], [0, 0, 1, 1], [], []>} : vector<8x8xbf16>, vector<8x8xbf16>, vector<8x8xf32> -> vector<8x8xf32>
    %52 = arith.addf %46, %51 : vector<8x8xf32>
    %53 = vector.extract_strided_slice %1 {offsets = [8, 0], sizes = [8, 8], strides = [1, 1]} : vector<24x8xf32> to vector<8x8xf32>
    %54 = arith.truncf %53 : vector<8x8xf32> to vector<8x8xbf16>
    %55 = vector.extract_strided_slice %3 {offsets = [8, 0, 0], sizes = [1, 8, 8], strides = [1, 1, 1]} : vector<16x8x8xbf16> to vector<1x8x8xbf16>
    %56 = vector.shape_cast %55 : vector<1x8x8xbf16> to vector<8x8xbf16>
    %cst_15 = arith.constant dense<0.000000e+00> : vector<8x8xf32>
    %57 = tpu.matmul %54, %56, %cst_15 {dimension_numbers = #tpu.dot_dimension_numbers<[1], [0], [0], [1], [0, 0, 1, 1], [], []>} : vector<8x8xbf16>, vector<8x8xbf16>, vector<8x8xf32> -> vector<8x8xf32>
    %58 = arith.addf %52, %57 : vector<8x8xf32>
    %59 = vector.extract_strided_slice %1 {offsets = [9, 0], sizes = [8, 8], strides = [1, 1]} : vector<24x8xf32> to vector<8x8xf32>
    %60 = arith.truncf %59 : vector<8x8xf32> to vector<8x8xbf16>
    %61 = vector.extract_strided_slice %3 {offsets = [9, 0, 0], sizes = [1, 8, 8], strides = [1, 1, 1]} : vector<16x8x8xbf16> to vector<1x8x8xbf16>
    %62 = vector.shape_cast %61 : vector<1x8x8xbf16> to vector<8x8xbf16>
    %cst_16 = arith.constant dense<0.000000e+00> : vector<8x8xf32>
    %63 = tpu.matmul %60, %62, %cst_16 {dimension_numbers = #tpu.dot_dimension_numbers<[1], [0], [0], [1], [0, 0, 1, 1], [], []>} : vector<8x8xbf16>, vector<8x8xbf16>, vector<8x8xf32> -> vector<8x8xf32>
    %64 = arith.addf %58, %63 : vector<8x8xf32>
    %65 = vector.extract_strided_slice %1 {offsets = [10, 0], sizes = [8, 8], strides = [1, 1]} : vector<24x8xf32> to vector<8x8xf32>
    %66 = arith.truncf %65 : vector<8x8xf32> to vector<8x8xbf16>
    %67 = vector.extract_strided_slice %3 {offsets = [10, 0, 0], sizes = [1, 8, 8], strides = [1, 1, 1]} : vector<16x8x8xbf16> to vector<1x8x8xbf16>
    %68 = vector.shape_cast %67 : vector<1x8x8xbf16> to vector<8x8xbf16>
    %cst_17 = arith.constant dense<0.000000e+00> : vector<8x8xf32>
    %69 = tpu.matmul %66, %68, %cst_17 {dimension_numbers = #tpu.dot_dimension_numbers<[1], [0], [0], [1], [0, 0, 1, 1], [], []>} : vector<8x8xbf16>, vector<8x8xbf16>, vector<8x8xf32> -> vector<8x8xf32>
    %70 = arith.addf %64, %69 : vector<8x8xf32>
    %71 = vector.extract_strided_slice %1 {offsets = [11, 0], sizes = [8, 8], strides = [1, 1]} : vector<24x8xf32> to vector<8x8xf32>
    %72 = arith.truncf %71 : vector<8x8xf32> to vector<8x8xbf16>
    %73 = vector.extract_strided_slice %3 {offsets = [11, 0, 0], sizes = [1, 8, 8], strides = [1, 1, 1]} : vector<16x8x8xbf16> to vector<1x8x8xbf16>
    %74 = vector.shape_cast %73 : vector<1x8x8xbf16> to vector<8x8xbf16>
    %cst_18 = arith.constant dense<0.000000e+00> : vector<8x8xf32>
    %75 = tpu.matmul %72, %74, %cst_18 {dimension_numbers = #tpu.dot_dimension_numbers<[1], [0], [0], [1], [0, 0, 1, 1], [], []>} : vector<8x8xbf16>, vector<8x8xbf16>, vector<8x8xf32> -> vector<8x8xf32>
    %76 = arith.addf %70, %75 : vector<8x8xf32>
    %77 = vector.extract_strided_slice %1 {offsets = [12, 0], sizes = [8, 8], strides = [1, 1]} : vector<24x8xf32> to vector<8x8xf32>
    %78 = arith.truncf %77 : vector<8x8xf32> to vector<8x8xbf16>
    %79 = vector.extract_strided_slice %3 {offsets = [12, 0, 0], sizes = [1, 8, 8], strides = [1, 1, 1]} : vector<16x8x8xbf16> to vector<1x8x8xbf16>
    %80 = vector.shape_cast %79 : vector<1x8x8xbf16> to vector<8x8xbf16>
    %cst_19 = arith.constant dense<0.000000e+00> : vector<8x8xf32>
    %81 = tpu.matmul %78, %80, %cst_19 {dimension_numbers = #tpu.dot_dimension_numbers<[1], [0], [0], [1], [0, 0, 1, 1], [], []>} : vector<8x8xbf16>, vector<8x8xbf16>, vector<8x8xf32> -> vector<8x8xf32>
    %82 = arith.addf %76, %81 : vector<8x8xf32>
    %83 = vector.extract_strided_slice %1 {offsets = [13, 0], sizes = [8, 8], strides = [1, 1]} : vector<24x8xf32> to vector<8x8xf32>
    %84 = arith.truncf %83 : vector<8x8xf32> to vector<8x8xbf16>
    %85 = vector.extract_strided_slice %3 {offsets = [13, 0, 0], sizes = [1, 8, 8], strides = [1, 1, 1]} : vector<16x8x8xbf16> to vector<1x8x8xbf16>
    %86 = vector.shape_cast %85 : vector<1x8x8xbf16> to vector<8x8xbf16>
    %cst_20 = arith.constant dense<0.000000e+00> : vector<8x8xf32>
    %87 = tpu.matmul %84, %86, %cst_20 {dimension_numbers = #tpu.dot_dimension_numbers<[1], [0], [0], [1], [0, 0, 1, 1], [], []>} : vector<8x8xbf16>, vector<8x8xbf16>, vector<8x8xf32> -> vector<8x8xf32>
    %88 = arith.addf %82, %87 : vector<8x8xf32>
    %89 = vector.extract_strided_slice %1 {offsets = [14, 0], sizes = [8, 8], strides = [1, 1]} : vector<24x8xf32> to vector<8x8xf32>
    %90 = arith.truncf %89 : vector<8x8xf32> to vector<8x8xbf16>
    %91 = vector.extract_strided_slice %3 {offsets = [14, 0, 0], sizes = [1, 8, 8], strides = [1, 1, 1]} : vector<16x8x8xbf16> to vector<1x8x8xbf16>
    %92 = vector.shape_cast %91 : vector<1x8x8xbf16> to vector<8x8xbf16>
    %cst_21 = arith.constant dense<0.000000e+00> : vector<8x8xf32>
    %93 = tpu.matmul %90, %92, %cst_21 {dimension_numbers = #tpu.dot_dimension_numbers<[1], [0], [0], [1], [0, 0, 1, 1], [], []>} : vector<8x8xbf16>, vector<8x8xbf16>, vector<8x8xf32> -> vector<8x8xf32>
    %94 = arith.addf %88, %93 : vector<8x8xf32>
    %95 = vector.extract_strided_slice %1 {offsets = [15, 0], sizes = [8, 8], strides = [1, 1]} : vector<24x8xf32> to vector<8x8xf32>
    %96 = arith.truncf %95 : vector<8x8xf32> to vector<8x8xbf16>
    %97 = vector.extract_strided_slice %3 {offsets = [15, 0, 0], sizes = [1, 8, 8], strides = [1, 1, 1]} : vector<16x8x8xbf16> to vector<1x8x8xbf16>
    %98 = vector.shape_cast %97 : vector<1x8x8xbf16> to vector<8x8xbf16>
    %cst_22 = arith.constant dense<0.000000e+00> : vector<8x8xf32>
    %99 = tpu.matmul %96, %98, %cst_22 {dimension_numbers = #tpu.dot_dimension_numbers<[1], [0], [0], [1], [0, 0, 1, 1], [], []>} : vector<8x8xbf16>, vector<8x8xbf16>, vector<8x8xf32> -> vector<8x8xf32>
    %100 = arith.addf %94, %99 : vector<8x8xf32>
    %c0_23 = arith.constant 0 : index
    %c0_24 = arith.constant 0 : index
    %c0_25 = arith.constant 0 : index
    %101 = vector.load %arg4[%c0_23, %c0_24, %c0_25] : memref<1x1x8xf32, #tpu.memory_space<vmem>>, vector<1x1x8xf32>
    %102 = vector.shape_cast %101 : vector<1x1x8xf32> to vector<1x8xf32>
    %103 = vector.broadcast %102 : vector<1x8xf32> to vector<8x8xf32>
    %104 = arith.addf %100, %103 : vector<8x8xf32>
    %cst_26 = arith.constant 5.000000e-01 : f32
    %105 = vector.broadcast %cst_26 : f32 to vector<8x8xf32>
    %106 = arith.mulf %105, %104 : vector<8x8xf32>
    %cst_27 = arith.constant 0.707106769 : f32
    %107 = vector.broadcast %cst_27 : f32 to vector<8x8xf32>
    %108 = arith.mulf %104, %107 : vector<8x8xf32>
    %109 = math.erf %108 : vector<8x8xf32>
    %cst_28 = arith.constant 1.000000e+00 : f32
    %110 = vector.broadcast %cst_28 : f32 to vector<8x8xf32>
    %111 = arith.addf %110, %109 : vector<8x8xf32>
    %112 = arith.mulf %106, %111 : vector<8x8xf32>
    %113 = vector.shape_cast %112 : vector<8x8xf32> to vector<1x1x8x8xf32>
    %c0_29 = arith.constant 0 : index
    %c0_30 = arith.constant 0 : index
    %c0_31 = arith.constant 0 : index
    %c0_32 = arith.constant 0 : index
    %114 = vector.load %arg5[%c0_29, %c0_30, %c0_31, %c0_32] : memref<1x1x8x8xf32, #tpu.memory_space<vmem>>, vector<1x1x8x8xf32>
    tpu.vector_store %arg5[%c0_29, %c0_30, %c0_31, %c0_32], %113 {strides = array<i32>} : memref<1x1x8x8xf32, #tpu.memory_space<vmem>>, vector<1x1x8x8xf32>,
    return
  }
  func.func @transform_0(%arg0: i32, %arg1: i32) -> (i32, i32, i32, i32) {
    %c0_i32 = arith.constant 0 : i32
    %c0_i32_0 = arith.constant 0 : i32
    %c0_i32_1 = arith.constant 0 : i32
    return %arg0, %arg1, %c0_i32, %c0_i32_0 : i32, i32, i32, i32
  }
  func.func @transform_1(%arg0: i32, %arg1: i32) -> (i32, i32, i32, i32) {
    %c0_i32 = arith.constant 0 : i32
    %c0_i32_0 = arith.constant 0 : i32
    %c0_i32_1 = arith.constant 0 : i32
    %c0_i32_2 = arith.constant 0 : i32
    return %arg1, %c0_i32, %c0_i32_0, %c0_i32_1 : i32, i32, i32, i32
  }
  func.func @transform_2(%arg0: i32, %arg1: i32) -> (i32, i32, i32) {
    %c0_i32 = arith.constant 0 : i32
    %c0_i32_0 = arith.constant 0 : i32
    %c0_i32_1 = arith.constant 0 : i32
    return %arg1, %c0_i32, %c0_i32_0 : i32, i32, i32
  }
  func.func @transform_3(%arg0: i32, %arg1: i32) -> (i32, i32, i32, i32) {
    %c0_i32 = arith.constant 0 : i32
    %c0_i32_0 = arith.constant 0 : i32
    %c0_i32_1 = arith.constant 0 : i32
    return %arg0, %arg1, %c0_i32, %c0_i32_0 : i32, i32, i32, i32
  }
}

module attributes {stable_mosaic.version = 11 : i64} {
  func.func @_add_ln_kernel(%arg0: i32, %arg1: memref<16x32xf32, #tpu.memory_space<vmem>>, %arg2: memref<16x32xf32, #tpu.memory_space<vmem>>, %arg3: memref<1x32xf32, #tpu.memory_space<vmem>>, %arg4: memref<1x32xf32, #tpu.memory_space<vmem>>, %arg5: memref<16x32xf32, #tpu.memory_space<vmem>>) attributes {dimension_semantics = [#tpu.dimension_semantics<parallel>], iteration_bounds = array<i64: 1>, scalar_prefetch = 0 : i64, scratch_operands = 0 : i64, tpu.core_type = #tpu.core_type<tc>, window_params = [{transform_indices = @transform_0, window_bounds = array<i64: 16, 32>}, {transform_indices = @transform_1, window_bounds = array<i64: 16, 32>}, {pipeline_mode = #tpu.pipeline_mode<synchronous>, transform_indices = @transform_2, window_bounds = array<i64: 1, 32>}, {pipeline_mode = #tpu.pipeline_mode<synchronous>, transform_indices = @transform_3, window_bounds = array<i64: 1, 32>}, {transform_indices = @transform_4, window_bounds = array<i64: 16, 32>}]} {
    %c0 = arith.constant 0 : index
    %c0_0 = arith.constant 0 : index
    %0 = vector.load %arg1[%c0, %c0_0] : memref<16x32xf32, #tpu.memory_space<vmem>>, vector<16x32xf32>
    %c0_1 = arith.constant 0 : index
    %c0_2 = arith.constant 0 : index
    %1 = vector.load %arg2[%c0_1, %c0_2] : memref<16x32xf32, #tpu.memory_space<vmem>>, vector<16x32xf32>
    %2 = arith.addf %0, %1 : vector<16x32xf32>
    %cst = arith.constant dense<0.000000e+00> : vector<16xf32>
    %3 = vector.multi_reduction <add>, %2, %cst [1] : vector<16x32xf32> to vector<16xf32>
    %4 = vector.shape_cast %3 : vector<16xf32> to vector<16x1xf32>
    %cst_3 = arith.constant 3.200000e+01 : f32
    %5 = vector.broadcast %cst_3 : f32 to vector<16x1xf32>
    %6 = arith.divf %4, %5 : vector<16x1xf32>
    %7 = vector.broadcast %6 : vector<16x1xf32> to vector<16x32xf32>
    %8 = arith.subf %2, %7 : vector<16x32xf32>
    %9 = arith.mulf %8, %8 : vector<16x32xf32>
    %cst_4 = arith.constant dense<0.000000e+00> : vector<16xf32>
    %10 = vector.multi_reduction <add>, %9, %cst_4 [1] : vector<16x32xf32> to vector<16xf32>
    %11 = vector.shape_cast %10 : vector<16xf32> to vector<16x1xf32>
    %cst_5 = arith.constant 3.200000e+01 : f32
    %12 = vector.broadcast %cst_5 : f32 to vector<16x1xf32>
    %13 = arith.divf %11, %12 : vector<16x1xf32>
    %14 = vector.broadcast %6 : vector<16x1xf32> to vector<16x32xf32>
    %15 = arith.subf %2, %14 : vector<16x32xf32>
    %cst_6 = arith.constant 9.99999974E-6 : f32
    %16 = vector.broadcast %cst_6 : f32 to vector<16x1xf32>
    %17 = arith.addf %13, %16 : vector<16x1xf32>
    %18 = math.rsqrt %17 : vector<16x1xf32>
    %19 = vector.broadcast %18 : vector<16x1xf32> to vector<16x32xf32>
    %20 = arith.mulf %15, %19 : vector<16x32xf32>
    %c0_7 = arith.constant 0 : index
    %c0_8 = arith.constant 0 : index
    %21 = vector.load %arg3[%c0_7, %c0_8] : memref<1x32xf32, #tpu.memory_space<vmem>>, vector<1x32xf32>
    %22 = vector.broadcast %21 : vector<1x32xf32> to vector<16x32xf32>
    %23 = arith.mulf %20, %22 : vector<16x32xf32>
    %c0_9 = arith.constant 0 : index
    %c0_10 = arith.constant 0 : index
    %24 = vector.load %arg4[%c0_9, %c0_10] : memref<1x32xf32, #tpu.memory_space<vmem>>, vector<1x32xf32>
    %25 = vector.broadcast %24 : vector<1x32xf32> to vector<16x32xf32>
    %26 = arith.addf %23, %25 : vector<16x32xf32>
    %c0_11 = arith.constant 0 : index
    %c0_12 = arith.constant 0 : index
    %27 = vector.load %arg5[%c0_11, %c0_12] : memref<16x32xf32, #tpu.memory_space<vmem>>, vector<16x32xf32>
    tpu.vector_store %arg5[%c0_11, %c0_12], %26 {strides = array<i32>} : memref<16x32xf32, #tpu.memory_space<vmem>>, vector<16x32xf32>,
    return
  }
  func.func @transform_0(%arg0: i32) -> (i32, i32) {
    %c0_i32 = arith.constant 0 : i32
    %c0_i32_0 = arith.constant 0 : i32
    return %arg0, %c0_i32 : i32, i32
  }
  func.func @transform_1(%arg0: i32) -> (i32, i32) {
    %c0_i32 = arith.constant 0 : i32
    %c0_i32_0 = arith.constant 0 : i32
    return %arg0, %c0_i32 : i32, i32
  }
  func.func @transform_2(%arg0: i32) -> (i32, i32) {
    %c0_i32 = arith.constant 0 : i32
    %c0_i32_0 = arith.constant 0 : i32
    %c0_i32_1 = arith.constant 0 : i32
    return %c0_i32, %c0_i32_0 : i32, i32
  }
  func.func @transform_3(%arg0: i32) -> (i32, i32) {
    %c0_i32 = arith.constant 0 : i32
    %c0_i32_0 = arith.constant 0 : i32
    %c0_i32_1 = arith.constant 0 : i32
    return %c0_i32, %c0_i32_0 : i32, i32
  }
  func.func @transform_4(%arg0: i32) -> (i32, i32) {
    %c0_i32 = arith.constant 0 : i32
    %c0_i32_0 = arith.constant 0 : i32
    return %arg0, %c0_i32 : i32, i32
  }
}

module attributes {stable_mosaic.version = 11 : i64} {
  func.func @_matmul_kernel(%arg0: i32, %arg1: i32, %arg2: i32, %arg3: memref<16x32xf32, #tpu.memory_space<vmem>>, %arg4: memref<32x96xbf16, #tpu.memory_space<vmem>>, %arg5: memref<1x96xf32, #tpu.memory_space<vmem>>, %arg6: memref<16x96xf32, #tpu.memory_space<vmem>>, %arg7: memref<16x96xf32, #tpu.memory_space<vmem>>) attributes {dimension_semantics = [#tpu.dimension_semantics<parallel>, #tpu.dimension_semantics<parallel>, #tpu.dimension_semantics<arbitrary>], iteration_bounds = array<i64: 1, 1, 1>, scalar_prefetch = 0 : i64, scratch_operands = 1 : i64, tpu.core_type = #tpu.core_type<tc>, window_params = [{transform_indices = @transform_0, window_bounds = array<i64: 16, 32>}, {transform_indices = @transform_1, window_bounds = array<i64: 32, 96>}, {transform_indices = @transform_2, window_bounds = array<i64: 1, 96>}, {transform_indices = @transform_3, window_bounds = array<i64: 16, 96>}]} {
    %c0_i32 = arith.constant 0 : i32
    %0 = arith.cmpi eq, %arg2, %c0_i32 : i32
    %1 = arith.extui %0 : i1 to i32
    %c0_i32_0 = arith.constant 0 : i32
    %2 = arith.cmpi ne, %1, %c0_i32_0 : i32
    scf.if %2 {
      %cst_10 = arith.constant 0.000000e+00 : f32
      %13 = vector.broadcast %cst_10 : f32 to vector<16x96xf32>
      %c0_11 = arith.constant 0 : index
      %c0_12 = arith.constant 0 : index
      %14 = vector.load %arg7[%c0_11, %c0_12] : memref<16x96xf32, #tpu.memory_space<vmem>>, vector<16x96xf32>
      tpu.vector_store %arg7[%c0_11, %c0_12], %13 {strides = array<i32>} : memref<16x96xf32, #tpu.memory_space<vmem>>, vector<16x96xf32>,
    } else {
    }
    %c0 = arith.constant 0 : index
    %c0_1 = arith.constant 0 : index
    %3 = vector.load %arg3[%c0, %c0_1] : memref<16x32xf32, #tpu.memory_space<vmem>>, vector<16x32xf32>
    %4 = arith.truncf %3 : vector<16x32xf32> to vector<16x32xbf16>
    %c0_2 = arith.constant 0 : index
    %c0_3 = arith.constant 0 : index
    %5 = vector.load %arg4[%c0_2, %c0_3] : memref<32x96xbf16, #tpu.memory_space<vmem>>, vector<32x96xbf16>
    %c0_4 = arith.constant 0 : index
    %c0_5 = arith.constant 0 : index
    %6 = vector.load %arg7[%c0_4, %c0_5] : memref<16x96xf32, #tpu.memory_space<vmem>>, vector<16x96xf32>
    %cst = arith.constant dense<0.000000e+00> : vector<16x96xf32>
    %7 = tpu.matmul %4, %5, %cst {dimension_numbers = #tpu.dot_dimension_numbers<[1], [0], [0], [1], [0, 0, 1, 1], [], []>} : vector<16x32xbf16>, vector<32x96xbf16>, vector<16x96xf32> -> vector<16x96xf32>
    %8 = arith.addf %6, %7 : vector<16x96xf32>
    %c0_6 = arith.constant 0 : index
    %c0_7 = arith.constant 0 : index
    %9 = vector.load %arg7[%c0_6, %c0_7] : memref<16x96xf32, #tpu.memory_space<vmem>>, vector<16x96xf32>
    tpu.vector_store %arg7[%c0_6, %c0_7], %8 {strides = array<i32>} : memref<16x96xf32, #tpu.memory_space<vmem>>, vector<16x96xf32>,
    %c0_i32_8 = arith.constant 0 : i32
    %10 = arith.cmpi eq, %arg2, %c0_i32_8 : i32
    %11 = arith.extui %10 : i1 to i32
    %c0_i32_9 = arith.constant 0 : i32
    %12 = arith.cmpi ne, %11, %c0_i32_9 : i32
    scf.if %12 {
      %c0_10 = arith.constant 0 : index
      %c0_11 = arith.constant 0 : index
      %13 = vector.load %arg7[%c0_10, %c0_11] : memref<16x96xf32, #tpu.memory_space<vmem>>, vector<16x96xf32>
      %c0_12 = arith.constant 0 : index
      %c0_13 = arith.constant 0 : index
      %14 = vector.load %arg5[%c0_12, %c0_13] : memref<1x96xf32, #tpu.memory_space<vmem>>, vector<1x96xf32>
      %15 = vector.broadcast %14 : vector<1x96xf32> to vector<16x96xf32>
      %16 = arith.addf %13, %15 : vector<16x96xf32>
      %c0_14 = arith.constant 0 : index
      %c0_15 = arith.constant 0 : index
      %17 = vector.load %arg6[%c0_14, %c0_15] : memref<16x96xf32, #tpu.memory_space<vmem>>, vector<16x96xf32>
      tpu.vector_store %arg6[%c0_14, %c0_15], %16 {strides = array<i32>} : memref<16x96xf32, #tpu.memory_space<vmem>>, vector<16x96xf32>,
    } else {
    }
    return
  }
  func.func @transform_0(%arg0: i32, %arg1: i32, %arg2: i32) -> (i32, i32) {
    %c0_i32 = arith.constant 0 : i32
    return %arg0, %arg2 : i32, i32
  }
  func.func @transform_1(%arg0: i32, %arg1: i32, %arg2: i32) -> (i32, i32) {
    %c0_i32 = arith.constant 0 : i32
    return %arg2, %arg1 : i32, i32
  }
  func.func @transform_2(%arg0: i32, %arg1: i32, %arg2: i32) -> (i32, i32) {
    %c0_i32 = arith.constant 0 : i32
    %c0_i32_0 = arith.constant 0 : i32
    return %c0_i32, %arg1 : i32, i32
  }
  func.func @transform_3(%arg0: i32, %arg1: i32, %arg2: i32) -> (i32, i32) {
    %c0_i32 = arith.constant 0 : i32
    return %arg0, %arg1 : i32, i32
  }
}

module attributes {stable_mosaic.version = 11 : i64} {
  func.func @_attn_kernel(%arg0: i32, %arg1: memref<1x4x8x8xf32, #tpu.memory_space<vmem>>, %arg2: memref<1x4x8x8xf32, #tpu.memory_space<vmem>>, %arg3: memref<1x4x8x8xf32, #tpu.memory_space<vmem>>, %arg4: memref<4x8x8xf32, #tpu.memory_space<vmem>>, %arg5: memref<1x4x8x1xf32, #tpu.memory_space<vmem>>, %arg6: memref<1x1x1x8xf32, #tpu.memory_space<vmem>>, %arg7: memref<1x4x8x8xf32, #tpu.memory_space<vmem>>) attributes {dimension_semantics = [#tpu.dimension_semantics<parallel>], iteration_bounds = array<i64: 2>, scalar_prefetch = 0 : i64, scratch_operands = 0 : i64, tpu.core_type = #tpu.core_type<tc>, window_params = [{transform_indices = @transform_0, window_bounds = array<i64: 1, 4, 8, 8>}, {transform_indices = @transform_1, window_bounds = array<i64: 1, 4, 8, 8>}, {transform_indices = @transform_2, window_bounds = array<i64: 1, 4, 8, 8>}, {pipeline_mode = #tpu.pipeline_mode<synchronous>, transform_indices = @transform_3, window_bounds = array<i64: 4, 8, 8>}, {transform_indices = @transform_4, window_bounds = array<i64: 1, 4, 8, 1>}, {transform_indices = @transform_5, window_bounds = array<i64: 1, 1, 1, 8>}, {transform_indices = @transform_6, window_bounds = array<i64: 1, 4, 8, 8>}]} {
    %c0 = arith.constant 0 : index
    %c0_0 = arith.constant 0 : index
    %c0_1 = arith.constant 0 : index
    %c0_2 = arith.constant 0 : index
    %0 = vector.load %arg1[%c0, %c0_0, %c0_1, %c0_2] : memref<1x4x8x8xf32, #tpu.memory_space<vmem>>, vector<1x4x8x8xf32>
    %1 = vector.shape_cast %0 : vector<1x4x8x8xf32> to vector<4x8x8xf32>
    %2 = arith.truncf %1 : vector<4x8x8xf32> to vector<4x8x8xbf16>
    %c0_3 = arith.constant 0 : index
    %c0_4 = arith.constant 0 : index
    %c0_5 = arith.constant 0 : index
    %c0_6 = arith.constant 0 : index
    %3 = vector.load %arg2[%c0_3, %c0_4, %c0_5, %c0_6] : memref<1x4x8x8xf32, #tpu.memory_space<vmem>>, vector<1x4x8x8xf32>
    %4 = vector.shape_cast %3 : vector<1x4x8x8xf32> to vector<4x8x8xf32>
    %5 = arith.truncf %4 : vector<4x8x8xf32> to vector<4x8x8xbf16>
    %c0_7 = arith.constant 0 : index
    %c0_8 = arith.constant 0 : index
    %c0_9 = arith.constant 0 : index
    %c0_10 = arith.constant 0 : index
    %6 = vector.load %arg3[%c0_7, %c0_8, %c0_9, %c0_10] : memref<1x4x8x8xf32, #tpu.memory_space<vmem>>, vector<1x4x8x8xf32>
    %7 = vector.shape_cast %6 : vector<1x4x8x8xf32> to vector<4x8x8xf32>
    %8 = arith.truncf %7 : vector<4x8x8xf32> to vector<4x8x8xbf16>
    %c0_11 = arith.constant 0 : index
    %c0_12 = arith.constant 0 : index
    %c0_13 = arith.constant 0 : index
    %9 = vector.load %arg4[%c0_11, %c0_12, %c0_13] : memref<4x8x8xf32, #tpu.memory_space<vmem>>, vector<4x8x8xf32>
    %c0_14 = arith.constant 0 : index
    %c0_15 = arith.constant 0 : index
    %c0_16 = arith.constant 0 : index
    %c0_17 = arith.constant 0 : index
    %10 = vector.load %arg5[%c0_14, %c0_15, %c0_16, %c0_17] : memref<1x4x8x1xf32, #tpu.memory_space<vmem>>, vector<1x4x8x1xf32>
    %11 = vector.shape_cast %10 : vector<1x4x8x1xf32> to vector<4x8x1xf32>
    %c0_18 = arith.constant 0 : index
    %c0_19 = arith.constant 0 : index
    %c0_20 = arith.constant 0 : index
    %c0_21 = arith.constant 0 : index
    %12 = vector.load %arg6[%c0_18, %c0_19, %c0_20, %c0_21] : memref<1x1x1x8xf32, #tpu.memory_space<vmem>>, vector<1x1x1x8xf32>
    %13 = vector.shape_cast %12 : vector<1x1x1x8xf32> to vector<1x8xf32>
    "tpu.trace_start"() <{level = 10 : i32, message = "hqd,hkd->hqk"}> : () -> ()
    %cst = arith.constant dense<0.000000e+00> : vector<4x8x8xf32>
    %14 = tpu.matmul %2, %5, %cst {dimension_numbers = #tpu.dot_dimension_numbers<[2], [2], [1], [1], [0, 0, 0, 1, 1, 1], [0], [0]>} : vector<4x8x8xbf16>, vector<4x8x8xbf16>, vector<4x8x8xf32> -> vector<4x8x8xf32>
    "tpu.trace_stop"() : () -> ()
    %15 = vector.broadcast %11 : vector<4x8x1xf32> to vector<4x8x8xf32>
    %16 = arith.mulf %15, %9 : vector<4x8x8xf32>
    %17 = arith.addf %14, %16 : vector<4x8x8xf32>
    %18 = vector.shape_cast %13 : vector<1x8xf32> to vector<1x1x8xf32>
    %19 = vector.broadcast %18 : vector<1x1x8xf32> to vector<4x8x8xf32>
    %20 = arith.addf %17, %19 : vector<4x8x8xf32>
    %cst_22 = arith.constant dense<0xFF800000> : vector<4x8xf32>
    %21 = vector.multi_reduction <maximumf>, %20, %cst_22 [2] : vector<4x8x8xf32> to vector<4x8xf32>
    %22 = vector.shape_cast %21 : vector<4x8xf32> to vector<4x8x1xf32>
    %23 = vector.broadcast %22 : vector<4x8x1xf32> to vector<4x8x8xf32>
    %24 = arith.subf %20, %23 : vector<4x8x8xf32>
    %25 = math.exp %24 : vector<4x8x8xf32>
    %cst_23 = arith.constant dense<0.000000e+00> : vector<4x8xf32>
    %26 = vector.multi_reduction <add>, %25, %cst_23 [2] : vector<4x8x8xf32> to vector<4x8xf32>
    %27 = vector.shape_cast %26 : vector<4x8xf32> to vector<4x8x1xf32>
    %28 = tpu.reciprocal %27 {approx = true} : vector<4x8x1xf32> -> vector<4x8x1xf32>
    %29 = vector.broadcast %28 : vector<4x8x1xf32> to vector<4x8x8xf32>
    %30 = arith.mulf %25, %29 : vector<4x8x8xf32>
    %31 = arith.truncf %30 : vector<4x8x8xf32> to vector<4x8x8xbf16>
    "tpu.trace_start"() <{level = 10 : i32, message = "hqk,hkd->hqd"}> : () -> ()
    %cst_24 = arith.constant dense<0.000000e+00> : vector<4x8x8xf32>
    %32 = tpu.matmul %31, %8, %cst_24 {dimension_numbers = #tpu.dot_dimension_numbers<[2], [1], [1], [2], [0, 0, 0, 1, 1, 2], [0], [0]>} : vector<4x8x8xbf16>, vector<4x8x8xbf16>, vector<4x8x8xf32> -> vector<4x8x8xf32>
    "tpu.trace_stop"() : () -> ()
    %33 = vector.shape_cast %32 : vector<4x8x8xf32> to vector<1x4x8x8xf32>
    %c0_25 = arith.constant 0 : index
    %c0_26 = arith.constant 0 : index
    %c0_27 = arith.constant 0 : index
    %c0_28 = arith.constant 0 : index
    %34 = vector.load %arg7[%c0_25, %c0_26, %c0_27, %c0_28] : memref<1x4x8x8xf32, #tpu.memory_space<vmem>>, vector<1x4x8x8xf32>
    tpu.vector_store %arg7[%c0_25, %c0_26, %c0_27, %c0_28], %33 {strides = array<i32>} : memref<1x4x8x8xf32, #tpu.memory_space<vmem>>, vector<1x4x8x8xf32>,
    return
  }
  func.func @transform_0(%arg0: i32) -> (i32, i32, i32, i32) {
    %c0_i32 = arith.constant 0 : i32
    %c0_i32_0 = arith.constant 0 : i32
    %c0_i32_1 = arith.constant 0 : i32
    %c0_i32_2 = arith.constant 0 : i32
    return %arg0, %c0_i32, %c0_i32_0, %c0_i32_1 : i32, i32, i32, i32
  }
  func.func @transform_1(%arg0: i32) -> (i32, i32, i32, i32) {
    %c0_i32 = arith.constant 0 : i32
    %c0_i32_0 = arith.constant 0 : i32
    %c0_i32_1 = arith.constant 0 : i32
    %c0_i32_2 = arith.constant 0 : i32
    return %arg0, %c0_i32, %c0_i32_0, %c0_i32_1 : i32, i32, i32, i32
  }
  func.func @transform_2(%arg0: i32) -> (i32, i32, i32, i32) {
    %c0_i32 = arith.constant 0 : i32
    %c0_i32_0 = arith.constant 0 : i32
    %c0_i32_1 = arith.constant 0 : i32
    %c0_i32_2 = arith.constant 0 : i32
    return %arg0, %c0_i32, %c0_i32_0, %c0_i32_1 : i32, i32, i32, i32
  }
  func.func @transform_3(%arg0: i32) -> (i32, i32, i32) {
    %c0_i32 = arith.constant 0 : i32
    %c0_i32_0 = arith.constant 0 : i32
    %c0_i32_1 = arith.constant 0 : i32
    %c0_i32_2 = arith.constant 0 : i32
    return %c0_i32, %c0_i32_0, %c0_i32_1 : i32, i32, i32
  }
  func.func @transform_4(%arg0: i32) -> (i32, i32, i32, i32) {
    %c0_i32 = arith.constant 0 : i32
    %c0_i32_0 = arith.constant 0 : i32
    %c0_i32_1 = arith.constant 0 : i32
    %c0_i32_2 = arith.constant 0 : i32
    return %arg0, %c0_i32, %c0_i32_0, %c0_i32_1 : i32, i32, i32, i32
  }
  func.func @transform_5(%arg0: i32) -> (i32, i32, i32, i32) {
    %c0_i32 = arith.constant 0 : i32
    %c0_i32_0 = arith.constant 0 : i32
    %c0_i32_1 = arith.constant 0 : i32
    %c0_i32_2 = arith.constant 0 : i32
    return %arg0, %c0_i32, %c0_i32_0, %c0_i32_1 : i32, i32, i32, i32
  }
  func.func @transform_6(%arg0: i32) -> (i32, i32, i32, i32) {
    %c0_i32 = arith.constant 0 : i32
    %c0_i32_0 = arith.constant 0 : i32
    %c0_i32_1 = arith.constant 0 : i32
    %c0_i32_2 = arith.constant 0 : i32
    return %arg0, %c0_i32, %c0_i32_0, %c0_i32_1 : i32, i32, i32, i32
  }
}

module attributes {stable_mosaic.version = 11 : i64} {
  func.func @_matmul_kernel(%arg0: i32, %arg1: i32, %arg2: i32, %arg3: memref<16x32xf32, #tpu.memory_space<vmem>>, %arg4: memref<32x32xbf16, #tpu.memory_space<vmem>>, %arg5: memref<1x32xf32, #tpu.memory_space<vmem>>, %arg6: memref<16x32xf32, #tpu.memory_space<vmem>>, %arg7: memref<16x32xf32, #tpu.memory_space<vmem>>) attributes {dimension_semantics = [#tpu.dimension_semantics<parallel>, #tpu.dimension_semantics<parallel>, #tpu.dimension_semantics<arbitrary>], iteration_bounds = array<i64: 1, 1, 1>, scalar_prefetch = 0 : i64, scratch_operands = 1 : i64, tpu.core_type = #tpu.core_type<tc>, window_params = [{transform_indices = @transform_0, window_bounds = array<i64: 16, 32>}, {transform_indices = @transform_1, window_bounds = array<i64: 32, 32>}, {transform_indices = @transform_2, window_bounds = array<i64: 1, 32>}, {transform_indices = @transform_3, window_bounds = array<i64: 16, 32>}]} {
    %c0_i32 = arith.constant 0 : i32
    %0 = arith.cmpi eq, %arg2, %c0_i32 : i32
    %1 = arith.extui %0 : i1 to i32
    %c0_i32_0 = arith.constant 0 : i32
    %2 = arith.cmpi ne, %1, %c0_i32_0 : i32
    scf.if %2 {
      %cst_10 = arith.constant 0.000000e+00 : f32
      %13 = vector.broadcast %cst_10 : f32 to vector<16x32xf32>
      %c0_11 = arith.constant 0 : index
      %c0_12 = arith.constant 0 : index
      %14 = vector.load %arg7[%c0_11, %c0_12] : memref<16x32xf32, #tpu.memory_space<vmem>>, vector<16x32xf32>
      tpu.vector_store %arg7[%c0_11, %c0_12], %13 {strides = array<i32>} : memref<16x32xf32, #tpu.memory_space<vmem>>, vector<16x32xf32>,
    } else {
    }
    %c0 = arith.constant 0 : index
    %c0_1 = arith.constant 0 : index
    %3 = vector.load %arg3[%c0, %c0_1] : memref<16x32xf32, #tpu.memory_space<vmem>>, vector<16x32xf32>
    %4 = arith.truncf %3 : vector<16x32xf32> to vector<16x32xbf16>
    %c0_2 = arith.constant 0 : index
    %c0_3 = arith.constant 0 : index
    %5 = vector.load %arg4[%c0_2, %c0_3] : memref<32x32xbf16, #tpu.memory_space<vmem>>, vector<32x32xbf16>
    %c0_4 = arith.constant 0 : index
    %c0_5 = arith.constant 0 : index
    %6 = vector.load %arg7[%c0_4, %c0_5] : memref<16x32xf32, #tpu.memory_space<vmem>>, vector<16x32xf32>
    %cst = arith.constant dense<0.000000e+00> : vector<16x32xf32>
    %7 = tpu.matmul %4, %5, %cst {dimension_numbers = #tpu.dot_dimension_numbers<[1], [0], [0], [1], [0, 0, 1, 1], [], []>} : vector<16x32xbf16>, vector<32x32xbf16>, vector<16x32xf32> -> vector<16x32xf32>
    %8 = arith.addf %6, %7 : vector<16x32xf32>
    %c0_6 = arith.constant 0 : index
    %c0_7 = arith.constant 0 : index
    %9 = vector.load %arg7[%c0_6, %c0_7] : memref<16x32xf32, #tpu.memory_space<vmem>>, vector<16x32xf32>
    tpu.vector_store %arg7[%c0_6, %c0_7], %8 {strides = array<i32>} : memref<16x32xf32, #tpu.memory_space<vmem>>, vector<16x32xf32>,
    %c0_i32_8 = arith.constant 0 : i32
    %10 = arith.cmpi eq, %arg2, %c0_i32_8 : i32
    %11 = arith.extui %10 : i1 to i32
    %c0_i32_9 = arith.constant 0 : i32
    %12 = arith.cmpi ne, %11, %c0_i32_9 : i32
    scf.if %12 {
      %c0_10 = arith.constant 0 : index
      %c0_11 = arith.constant 0 : index
      %13 = vector.load %arg7[%c0_10, %c0_11] : memref<16x32xf32, #tpu.memory_space<vmem>>, vector<16x32xf32>
      %c0_12 = arith.constant 0 : index
      %c0_13 = arith.constant 0 : index
      %14 = vector.load %arg5[%c0_12, %c0_13] : memref<1x32xf32, #tpu.memory_space<vmem>>, vector<1x32xf32>
      %15 = vector.broadcast %14 : vector<1x32xf32> to vector<16x32xf32>
      %16 = arith.addf %13, %15 : vector<16x32xf32>
      %c0_14 = arith.constant 0 : index
      %c0_15 = arith.constant 0 : index
      %17 = vector.load %arg6[%c0_14, %c0_15] : memref<16x32xf32, #tpu.memory_space<vmem>>, vector<16x32xf32>
      tpu.vector_store %arg6[%c0_14, %c0_15], %16 {strides = array<i32>} : memref<16x32xf32, #tpu.memory_space<vmem>>, vector<16x32xf32>,
    } else {
    }
    return
  }
  func.func @transform_0(%arg0: i32, %arg1: i32, %arg2: i32) -> (i32, i32) {
    %c0_i32 = arith.constant 0 : i32
    return %arg0, %arg2 : i32, i32
  }
  func.func @transform_1(%arg0: i32, %arg1: i32, %arg2: i32) -> (i32, i32) {
    %c0_i32 = arith.constant 0 : i32
    return %arg2, %arg1 : i32, i32
  }
  func.func @transform_2(%arg0: i32, %arg1: i32, %arg2: i32) -> (i32, i32) {
    %c0_i32 = arith.constant 0 : i32
    %c0_i32_0 = arith.constant 0 : i32
    return %c0_i32, %arg1 : i32, i32
  }
  func.func @transform_3(%arg0: i32, %arg1: i32, %arg2: i32) -> (i32, i32) {
    %c0_i32 = arith.constant 0 : i32
    return %arg0, %arg1 : i32, i32
  }
}

module attributes {stable_mosaic.version = 11 : i64} {
  func.func @_add_ln_kernel(%arg0: i32, %arg1: memref<16x32xf32, #tpu.memory_space<vmem>>, %arg2: memref<16x32xf32, #tpu.memory_space<vmem>>, %arg3: memref<1x32xf32, #tpu.memory_space<vmem>>, %arg4: memref<1x32xf32, #tpu.memory_space<vmem>>, %arg5: memref<16x32xf32, #tpu.memory_space<vmem>>) attributes {dimension_semantics = [#tpu.dimension_semantics<parallel>], iteration_bounds = array<i64: 1>, scalar_prefetch = 0 : i64, scratch_operands = 0 : i64, tpu.core_type = #tpu.core_type<tc>, window_params = [{transform_indices = @transform_0, window_bounds = array<i64: 16, 32>}, {transform_indices = @transform_1, window_bounds = array<i64: 16, 32>}, {pipeline_mode = #tpu.pipeline_mode<synchronous>, transform_indices = @transform_2, window_bounds = array<i64: 1, 32>}, {pipeline_mode = #tpu.pipeline_mode<synchronous>, transform_indices = @transform_3, window_bounds = array<i64: 1, 32>}, {transform_indices = @transform_4, window_bounds = array<i64: 16, 32>}]} {
    %c0 = arith.constant 0 : index
    %c0_0 = arith.constant 0 : index
    %0 = vector.load %arg1[%c0, %c0_0] : memref<16x32xf32, #tpu.memory_space<vmem>>, vector<16x32xf32>
    %c0_1 = arith.constant 0 : index
    %c0_2 = arith.constant 0 : index
    %1 = vector.load %arg2[%c0_1, %c0_2] : memref<16x32xf32, #tpu.memory_space<vmem>>, vector<16x32xf32>
    %2 = arith.addf %0, %1 : vector<16x32xf32>
    %cst = arith.constant dense<0.000000e+00> : vector<16xf32>
    %3 = vector.multi_reduction <add>, %2, %cst [1] : vector<16x32xf32> to vector<16xf32>
    %4 = vector.shape_cast %3 : vector<16xf32> to vector<16x1xf32>
    %cst_3 = arith.constant 3.200000e+01 : f32
    %5 = vector.broadcast %cst_3 : f32 to vector<16x1xf32>
    %6 = arith.divf %4, %5 : vector<16x1xf32>
    %7 = vector.broadcast %6 : vector<16x1xf32> to vector<16x32xf32>
    %8 = arith.subf %2, %7 : vector<16x32xf32>
    %9 = arith.mulf %8, %8 : vector<16x32xf32>
    %cst_4 = arith.constant dense<0.000000e+00> : vector<16xf32>
    %10 = vector.multi_reduction <add>, %9, %cst_4 [1] : vector<16x32xf32> to vector<16xf32>
    %11 = vector.shape_cast %10 : vector<16xf32> to vector<16x1xf32>
    %cst_5 = arith.constant 3.200000e+01 : f32
    %12 = vector.broadcast %cst_5 : f32 to vector<16x1xf32>
    %13 = arith.divf %11, %12 : vector<16x1xf32>
    %14 = vector.broadcast %6 : vector<16x1xf32> to vector<16x32xf32>
    %15 = arith.subf %2, %14 : vector<16x32xf32>
    %cst_6 = arith.constant 9.99999974E-6 : f32
    %16 = vector.broadcast %cst_6 : f32 to vector<16x1xf32>
    %17 = arith.addf %13, %16 : vector<16x1xf32>
    %18 = math.rsqrt %17 : vector<16x1xf32>
    %19 = vector.broadcast %18 : vector<16x1xf32> to vector<16x32xf32>
    %20 = arith.mulf %15, %19 : vector<16x32xf32>
    %c0_7 = arith.constant 0 : index
    %c0_8 = arith.constant 0 : index
    %21 = vector.load %arg3[%c0_7, %c0_8] : memref<1x32xf32, #tpu.memory_space<vmem>>, vector<1x32xf32>
    %22 = vector.broadcast %21 : vector<1x32xf32> to vector<16x32xf32>
    %23 = arith.mulf %20, %22 : vector<16x32xf32>
    %c0_9 = arith.constant 0 : index
    %c0_10 = arith.constant 0 : index
    %24 = vector.load %arg4[%c0_9, %c0_10] : memref<1x32xf32, #tpu.memory_space<vmem>>, vector<1x32xf32>
    %25 = vector.broadcast %24 : vector<1x32xf32> to vector<16x32xf32>
    %26 = arith.addf %23, %25 : vector<16x32xf32>
    %cst_11 = arith.constant 0.000000e+00 : f32
    %27 = vector.broadcast %cst_11 : f32 to vector<16x32xf32>
    %28 = arith.maximumf %26, %27 : vector<16x32xf32>
    %c0_12 = arith.constant 0 : index
    %c0_13 = arith.constant 0 : index
    %29 = vector.load %arg5[%c0_12, %c0_13] : memref<16x32xf32, #tpu.memory_space<vmem>>, vector<16x32xf32>
    tpu.vector_store %arg5[%c0_12, %c0_13], %28 {strides = array<i32>} : memref<16x32xf32, #tpu.memory_space<vmem>>, vector<16x32xf32>,
    return
  }
  func.func @transform_0(%arg0: i32) -> (i32, i32) {
    %c0_i32 = arith.constant 0 : i32
    %c0_i32_0 = arith.constant 0 : i32
    return %arg0, %c0_i32 : i32, i32
  }
  func.func @transform_1(%arg0: i32) -> (i32, i32) {
    %c0_i32 = arith.constant 0 : i32
    %c0_i32_0 = arith.constant 0 : i32
    return %arg0, %c0_i32 : i32, i32
  }
  func.func @transform_2(%arg0: i32) -> (i32, i32) {
    %c0_i32 = arith.constant 0 : i32
    %c0_i32_0 = arith.constant 0 : i32
    %c0_i32_1 = arith.constant 0 : i32
    return %c0_i32, %c0_i32_0 : i32, i32
  }
  func.func @transform_3(%arg0: i32) -> (i32, i32) {
    %c0_i32 = arith.constant 0 : i32
    %c0_i32_0 = arith.constant 0 : i32
    %c0_i32_1 = arith.constant 0 : i32
    return %c0_i32, %c0_i32_0 : i32, i32
  }
  func.func @transform_4(%arg0: i32) -> (i32, i32) {
    %c0_i32 = arith.constant 0 : i32
    %c0_i32_0 = arith.constant 0 : i32
    return %arg0, %c0_i32 : i32, i32
  }
}

module attributes {stable_mosaic.version = 11 : i64} {
  func.func @_ffn_kernel(%arg0: i32, %arg1: i32, %arg2: memref<16x32xf32, #tpu.memory_space<vmem>>, %arg3: memref<32x64xbf16, #tpu.memory_space<vmem>>, %arg4: memref<1x64xf32, #tpu.memory_space<vmem>>, %arg5: memref<64x32xbf16, #tpu.memory_space<vmem>>, %arg6: memref<1x32xf32, #tpu.memory_space<vmem>>, %arg7: memref<16x32xf32, #tpu.memory_space<vmem>>, %arg8: memref<16x32xf32, #tpu.memory_space<vmem>>) attributes {dimension_semantics = [#tpu.dimension_semantics<parallel>, #tpu.dimension_semantics<arbitrary>], iteration_bounds = array<i64: 1, 1>, scalar_prefetch = 0 : i64, scratch_operands = 1 : i64, tpu.core_type = #tpu.core_type<tc>, window_params = [{transform_indices = @transform_0, window_bounds = array<i64: 16, 32>}, {transform_indices = @transform_1, window_bounds = array<i64: 32, 64>}, {transform_indices = @transform_2, window_bounds = array<i64: 1, 64>}, {transform_indices = @transform_3, window_bounds = array<i64: 64, 32>}, {pipeline_mode = #tpu.pipeline_mode<synchronous>, transform_indices = @transform_4, window_bounds = array<i64: 1, 32>}, {transform_indices = @transform_5, window_bounds = array<i64: 16, 32>}]} {
    %c0_i32 = arith.constant 0 : i32
    %0 = arith.cmpi eq, %arg1, %c0_i32 : i32
    %1 = arith.extui %0 : i1 to i32
    %c0_i32_0 = arith.constant 0 : i32
    %2 = arith.cmpi ne, %1, %c0_i32_0 : i32
    scf.if %2 {
      %cst_18 = arith.constant 0.000000e+00 : f32
      %27 = vector.broadcast %cst_18 : f32 to vector<16x32xf32>
      %c0_19 = arith.constant 0 : index
      %c0_20 = arith.constant 0 : index
      %28 = vector.load %arg8[%c0_19, %c0_20] : memref<16x32xf32, #tpu.memory_space<vmem>>, vector<16x32xf32>
      tpu.vector_store %arg8[%c0_19, %c0_20], %27 {strides = array<i32>} : memref<16x32xf32, #tpu.memory_space<vmem>>, vector<16x32xf32>,
    } else {
    }
    %c0 = arith.constant 0 : index
    %c0_1 = arith.constant 0 : index
    %3 = vector.load %arg2[%c0, %c0_1] : memref<16x32xf32, #tpu.memory_space<vmem>>, vector<16x32xf32>
    %4 = arith.truncf %3 : vector<16x32xf32> to vector<16x32xbf16>
    %c0_2 = arith.constant 0 : index
    %c0_3 = arith.constant 0 : index
    %5 = vector.load %arg3[%c0_2, %c0_3] : memref<32x64xbf16, #tpu.memory_space<vmem>>, vector<32x64xbf16>
    %cst = arith.constant dense<0.000000e+00> : vector<16x64xf32>
    %6 = tpu.matmul %4, %5, %cst {dimension_numbers = #tpu.dot_dimension_numbers<[1], [0], [0], [1], [0, 0, 1, 1], [], []>} : vector<16x32xbf16>, vector<32x64xbf16>, vector<16x64xf32> -> vector<16x64xf32>
    %c0_4 = arith.constant 0 : index
    %c0_5 = arith.constant 0 : index
    %7 = vector.load %arg4[%c0_4, %c0_5] : memref<1x64xf32, #tpu.memory_space<vmem>>, vector<1x64xf32>
    %8 = vector.broadcast %7 : vector<1x64xf32> to vector<16x64xf32>
    %9 = arith.addf %6, %8 : vector<16x64xf32>
    %cst_6 = arith.constant 5.000000e-01 : f32
    %10 = vector.broadcast %cst_6 : f32 to vector<16x64xf32>
    %11 = arith.mulf %10, %9 : vector<16x64xf32>
    %cst_7 = arith.constant 0.707106769 : f32
    %12 = vector.broadcast %cst_7 : f32 to vector<16x64xf32>
    %13 = arith.mulf %9, %12 : vector<16x64xf32>
    %14 = math.erf %13 : vector<16x64xf32>
    %cst_8 = arith.constant 1.000000e+00 : f32
    %15 = vector.broadcast %cst_8 : f32 to vector<16x64xf32>
    %16 = arith.addf %15, %14 : vector<16x64xf32>
    %17 = arith.mulf %11, %16 : vector<16x64xf32>
    %c0_9 = arith.constant 0 : index
    %c0_10 = arith.constant 0 : index
    %18 = vector.load %arg8[%c0_9, %c0_10] : memref<16x32xf32, #tpu.memory_space<vmem>>, vector<16x32xf32>
    %19 = arith.truncf %17 : vector<16x64xf32> to vector<16x64xbf16>
    %c0_11 = arith.constant 0 : index
    %c0_12 = arith.constant 0 : index
    %20 = vector.load %arg5[%c0_11, %c0_12] : memref<64x32xbf16, #tpu.memory_space<vmem>>, vector<64x32xbf16>
    %cst_13 = arith.constant dense<0.000000e+00> : vector<16x32xf32>
    %21 = tpu.matmul %19, %20, %cst_13 {dimension_numbers = #tpu.dot_dimension_numbers<[1], [0], [0], [1], [0, 0, 1, 1], [], []>} : vector<16x64xbf16>, vector<64x32xbf16>, vector<16x32xf32> -> vector<16x32xf32>
    %22 = arith.addf %18, %21 : vector<16x32xf32>
    %c0_14 = arith.constant 0 : index
    %c0_15 = arith.constant 0 : index
    %23 = vector.load %arg8[%c0_14, %c0_15] : memref<16x32xf32, #tpu.memory_space<vmem>>, vector<16x32xf32>
    tpu.vector_store %arg8[%c0_14, %c0_15], %22 {strides = array<i32>} : memref<16x32xf32, #tpu.memory_space<vmem>>, vector<16x32xf32>,
    %c0_i32_16 = arith.constant 0 : i32
    %24 = arith.cmpi eq, %arg1, %c0_i32_16 : i32
    %25 = arith.extui %24 : i1 to i32
    %c0_i32_17 = arith.constant 0 : i32
    %26 = arith.cmpi ne, %25, %c0_i32_17 : i32
    scf.if %26 {
      %c0_18 = arith.constant 0 : index
      %c0_19 = arith.constant 0 : index
      %27 = vector.load %arg8[%c0_18, %c0_19] : memref<16x32xf32, #tpu.memory_space<vmem>>, vector<16x32xf32>
      %c0_20 = arith.constant 0 : index
      %c0_21 = arith.constant 0 : index
      %28 = vector.load %arg6[%c0_20, %c0_21] : memref<1x32xf32, #tpu.memory_space<vmem>>, vector<1x32xf32>
      %29 = vector.broadcast %28 : vector<1x32xf32> to vector<16x32xf32>
      %30 = arith.addf %27, %29 : vector<16x32xf32>
      %c0_22 = arith.constant 0 : index
      %c0_23 = arith.constant 0 : index
      %31 = vector.load %arg7[%c0_22, %c0_23] : memref<16x32xf32, #tpu.memory_space<vmem>>, vector<16x32xf32>
      tpu.vector_store %arg7[%c0_22, %c0_23], %30 {strides = array<i32>} : memref<16x32xf32, #tpu.memory_space<vmem>>, vector<16x32xf32>,
    } else {
    }
    return
  }
  func.func @transform_0(%arg0: i32, %arg1: i32) -> (i32, i32) {
    %c0_i32 = arith.constant 0 : i32
    %c0_i32_0 = arith.constant 0 : i32
    return %arg0, %c0_i32 : i32, i32
  }
  func.func @transform_1(%arg0: i32, %arg1: i32) -> (i32, i32) {
    %c0_i32 = arith.constant 0 : i32
    %c0_i32_0 = arith.constant 0 : i32
    return %c0_i32, %arg1 : i32, i32
  }
  func.func @transform_2(%arg0: i32, %arg1: i32) -> (i32, i32) {
    %c0_i32 = arith.constant 0 : i32
    %c0_i32_0 = arith.constant 0 : i32
    return %c0_i32, %arg1 : i32, i32
  }
  func.func @transform_3(%arg0: i32, %arg1: i32) -> (i32, i32) {
    %c0_i32 = arith.constant 0 : i32
    %c0_i32_0 = arith.constant 0 : i32
    return %arg1, %c0_i32 : i32, i32
  }
  func.func @transform_4(%arg0: i32, %arg1: i32) -> (i32, i32) {
    %c0_i32 = arith.constant 0 : i32
    %c0_i32_0 = arith.constant 0 : i32
    %c0_i32_1 = arith.constant 0 : i32
    return %c0_i32, %c0_i32_0 : i32, i32
  }
  func.func @transform_5(%arg0: i32, %arg1: i32) -> (i32, i32) {
    %c0_i32 = arith.constant 0 : i32
    %c0_i32_0 = arith.constant 0 : i32
    return %arg0, %c0_i32 : i32, i32
  }
}

</mosaic_0001>

<llo_original>
// kernel: wavlm_wrapper_forward.15
$region0: #{wavlm_wrapper_forward.15}
  #allocation0 [shape = 'u32[]', space=smem, size = 0x4, offset = 0x4, fixed_abs, tag = 'smem constant byte address 0x4 - core index']
  #allocation1 [shape = 'u32[144,128]{1,0:T(1,128)}', space=vmem, size = 0x12000, scoped, tag = 'internal scratch']
  %s0 = inlined_call_operand.vmem [shape: f32[16,32], index: 0, kind: input, shape index: {}]
  %s1 = inlined_call_operand.vmem [shape: f32[16,32], index: 1, kind: input, shape index: {}]
  %s2 = inlined_call_operand.vmem [shape: f32[1,32], index: 2, kind: input, shape index: {}]
  %s3 = inlined_call_operand.vmem [shape: f32[1,32], index: 3, kind: input, shape index: {}]
  %s4 = inlined_call_operand.vmem [shape: f32[16,32], index: 4, kind: output, shape index: {}]
  %s5 = sld [smem:[#allocation0]]
  $region26: #{wavlm_wrapper_forward.15} parent=0
    _
  %s7 = ssub.s32 1, %s5
  %s8 = scalar_select 0, %s7, %s5
  // Predicated region
  $region2: #{wavlm_wrapper_forward.15} parent=0 // pred_check
    _
  $region3: #{wavlm_wrapper_forward.15} parent=0 // pred_check_branch
    %10 = sbr.rel (0) target = $region5
  $region4: #{wavlm_wrapper_forward.15} parent=0 // pred_region
    _
  $region5: #{wavlm_wrapper_forward.15} parent=0 // pred_fallthru
    _
  // Predicated region
  $region6: #{wavlm_wrapper_forward.15} parent=0 // pred_check
    _
  $region7: #{wavlm_wrapper_forward.15} parent=0 // pred_check_branch
    %12 = sbr.rel (0) target = $region9
  $region8: #{wavlm_wrapper_forward.15} parent=0 // pred_region
    _
  $region9: #{wavlm_wrapper_forward.15} parent=0 // pred_fallthru
    _
  // Predicated region
  $region10: #{wavlm_wrapper_forward.15} parent=0 // pred_check
    _
  $region11: #{wavlm_wrapper_forward.15} parent=0 // pred_check_branch
    %14 = sbr.rel (0) target = $region13
  $region12: #{wavlm_wrapper_forward.15} parent=0 // pred_region
    _
  $region13: #{wavlm_wrapper_forward.15} parent=0 // pred_fallthru
    _
  // Predicated region
  $region14: #{wavlm_wrapper_forward.15} parent=0 // pred_check
    _
  $region15: #{wavlm_wrapper_forward.15} parent=0 // pred_check_branch
    %16 = sbr.rel (0) target = $region17
  $region16: #{wavlm_wrapper_forward.15} parent=0 // pred_region
    _
  $region17: #{wavlm_wrapper_forward.15} parent=0 // pred_fallthru
    _
  %v17 = vld [vmem:[%s0] sm:$0xff]
  %v18 = vld [vmem:[%s0 + $0x8] sm:$0xff]
  %v19 = vld [vmem:[%s1] sm:$0xff]
  %v20 = vld [vmem:[%s1 + $0x8] sm:$0xff]
  %v21 = vadd.f32 %v17, %v19
  %v22 = vadd.f32 %v18, %v20
  %vm23 = vcmask 261120
  %v24 = vsel %vm23, %v21, 0.0
  %25 = vadd.xlane.f32.xlu0 %v24
  %v26 = vpop.xlane.xlu0 %25
  %v27 = vsel %vm23, %v22, 0.0
  %28 = vadd.xlane.f32.xlu0 %v27
  %v29 = vpop.xlane.xlu0 %28
  %v30 = vrcp.pop 32.0
  %v31 = vmul.f32 %v26, %v30
  %v32 = vmul.f32 %v29, %v30
  %v33 = vsub.f32 %v21, %v31
  %v34 = vsub.f32 %v22, %v32
  %v35 = vmul.f32 %v33, %v33
  %v36 = vmul.f32 %v34, %v34
  %v37 = vsel %vm23, %v35, 0.0
  %38 = vadd.xlane.f32.xlu0 %v37
  %v39 = vpop.xlane.xlu0 %38
  %v40 = vsel %vm23, %v36, 0.0
  %41 = vadd.xlane.f32.xlu0 %v40
  %v42 = vpop.xlane.xlu0 %41
  %v43 = vmul.f32 %v39, %v30
  %v44 = vmul.f32 %v42, %v30
  %v45 = vadd.f32 %v43, 1e-05
  %v46 = vadd.f32 %v44, 1e-05
  %v47 = vrsqrt.pop %v45
  %v48 = vrsqrt.pop %v46
  %v49 = vmul.f32 %v33, %v47
  %v50 = vmul.f32 %v34, %v48
  %v51 = vld [vmem:[%s2] sm:$0x1]
  %v53 = vlaneseq
  %v54 = vshrl.u32 %v53, 7
  %v55 = vsub.s32 0, %v54
  %v56 = vrot.slane %v51, %v55
  %v58 = vmul.f32 %v49, %v56
  %v59 = vmul.f32 %v50, %v56
  %v60 = vld [vmem:[%s3] sm:$0x1]
  %v62 = vlaneseq
  %v63 = vshrl.u32 %v62, 7
  %v64 = vsub.s32 0, %v63
  %v65 = vrot.slane %v60, %v64
  %v67 = vadd.f32 %v58, %v65
  %v68 = vadd.f32 %v59, %v65
  %69 = vst.msk [vmem:[%s4] sm:$0xff] %vm23, %v67
  %70 = vst.msk [vmem:[%s4 + $0x8] sm:$0xff] %vm23, %v68
  // Predicated region
  $region18: #{wavlm_wrapper_forward.15} parent=0 // pred_check
    _
  $region19: #{wavlm_wrapper_forward.15} parent=0 // pred_check_branch
    %72 = sbr.rel (0) target = $region21
  $region20: #{wavlm_wrapper_forward.15} parent=0 // pred_region
    _
  $region21: #{wavlm_wrapper_forward.15} parent=0 // pred_fallthru
    _
  // Predicated region
  $region22: #{wavlm_wrapper_forward.15} parent=0 // pred_check
    _
  $region23: #{wavlm_wrapper_forward.15} parent=0 // pred_check_branch
    %74 = sbr.rel (0) target = $region25
  $region24: #{wavlm_wrapper_forward.15} parent=0 // pred_region
    _
  $region25: #{wavlm_wrapper_forward.15} parent=0 // pred_fallthru
    _

// kernel: wavlm_wrapper_forward.16
$region0: #{wavlm_wrapper_forward.16}
  #allocation0 [shape = 'u32[]', space=smem, size = 0x4, offset = 0x4, fixed_abs, tag = 'smem constant byte address 0x4 - core index']
  #allocation1 [shape = 'u32[144,128]{1,0:T(1,128)}', space=vmem, size = 0x12000, scoped, tag = 'internal scratch']
  #allocation2 [shape = 'f32[16,96]{1,0:T(8,128)}', space=vmem, size = 0x2000, scoped, tag = 'scratch operand']
  %s0 = inlined_call_operand.vmem [shape: f32[16,32], index: 0, kind: input, shape index: {}]
  %s1 = inlined_call_operand.vmem [shape: bf16[32,96], index: 1, kind: input, shape index: {}]
  %s2 = inlined_call_operand.vmem [shape: f32[1,96], index: 2, kind: input, shape index: {}]
  %s3 = inlined_call_operand.vmem [shape: f32[16,96], index: 3, kind: output, shape index: {}]
  %s4 = sld [smem:[#allocation0]]
  $region30: #{wavlm_wrapper_forward.16} parent=0
    _
  %s6 = ssub.s32 1, %s4
  %s7 = scalar_select 0, %s6, %s4
  // Predicated region
  $region2: #{wavlm_wrapper_forward.16} parent=0 // pred_check
    _
  $region3: #{wavlm_wrapper_forward.16} parent=0 // pred_check_branch
    %9 = sbr.rel (0) target = $region5
  $region4: #{wavlm_wrapper_forward.16} parent=0 // pred_region
    _
  $region5: #{wavlm_wrapper_forward.16} parent=0 // pred_fallthru
    _
  // Predicated region
  $region6: #{wavlm_wrapper_forward.16} parent=0 // pred_check
    _
  $region7: #{wavlm_wrapper_forward.16} parent=0 // pred_check_branch
    %11 = sbr.rel (0) target = $region9
  $region8: #{wavlm_wrapper_forward.16} parent=0 // pred_region
    _
  $region9: #{wavlm_wrapper_forward.16} parent=0 // pred_fallthru
    _
  // Predicated region
  $region10: #{wavlm_wrapper_forward.16} parent=0 // pred_check
    _
  $region11: #{wavlm_wrapper_forward.16} parent=0 // pred_check_branch
    %13 = sbr.rel (0) target = $region13
  $region12: #{wavlm_wrapper_forward.16} parent=0 // pred_region
    _
  $region13: #{wavlm_wrapper_forward.16} parent=0 // pred_fallthru
    _
  %p15 = scmp.eq.s32.totalorder 0, 0
  // Predicated region
  $region14: #{wavlm_wrapper_forward.16} parent=0 // pred_check
    %p16 = pneg %p15
  $region15: #{wavlm_wrapper_forward.16} parent=0 // pred_check_branch
    %18 = sbr.rel (%p16) target = $region17
  $region16: #{wavlm_wrapper_forward.16} parent=0 // pred_region
    %vm19 = vcmask 785408
    %20 = vst.msk [vmem:[#allocation2] sm:$0xff] %vm19, 0.0
    %21 = vst.msk [vmem:[#allocation2 + $0x8] sm:$0xff] %vm19, 0.0
  $region17: #{wavlm_wrapper_forward.16} parent=0 // pred_fallthru
    _
  %v22 = vld [vmem:[%s0] sm:$0xff]
  %v23 = vld [vmem:[%s0 + $0x8] sm:$0xff]
  %v24 = vpack.c.bf16 %v23, %v22
  %v25 = vld [vmem:[%s1] sm:$0xf]
  %v26 = vld [vmem:[%s1 + $0x4] sm:$0xf]
  %v27 = vld [vmem:[%s1 + $0x8] sm:$0xf]
  %v28 = vld [vmem:[%s1 + $0xc] sm:$0xf]
  %v29 = vld [vmem:[#allocation2] sm:$0xff]
  %v30 = vld [vmem:[#allocation2 + $0x8] sm:$0xff]
  %v35 = vunpack.c.l.b16 %v25
  %v36 = vunpack.c.l.b16 %v26
  %v37 = vunpack.c.l.b16 %v27
  %v38 = vunpack.c.l.b16 %v28
  %v39 = vpack.c.b16 %v36, %v35
  %v40 = vpack.c.b16 %v38, %v37
  %vm43 = vcmask 261120
  %v45 = vsel %vm43, %v24, 0
  %47 = vmatprep.subr.bf16.mxu0 0
  %48 = vmatpush1.bf16.msra.mxu0 %v39
  %49 = vmatprep.subr.bf16.mxu0 0
  %50 = vmatpush1.bf16.msra.mxu0 %v40
  %51 = vmatprep.subr.bf16.mxu0 0
  %52 = vmatpush1.bf16.msra.mxu0 0
  %53 = vmatprep.subr.bf16.mxu0 0
  %54 = vmatpush1.bf16.msra.mxu0 0
  %55 = vmatprep.subr.bf16.mxu0 0
  %56 = vmatpush1.bf16.msra.mxu0 0
  %57 = vmatprep.subr.bf16.mxu0 0
  %58 = vmatpush1.bf16.msra.mxu0 0
  %59 = vmatprep.subr.bf16.mxu0 0
  %60 = vmatpush1.bf16.msra.mxu0 0
  %61 = vmatprep.subr.bf16.mxu0 0
  %62 = vmatpush1.bf16.msra.mxu0 0
  %63 = vmatprep.subr.bf16.mxu0 0
  %64 = vmatpush1.bf16.msra.mxu0 0
  %65 = vmatprep.subr.bf16.mxu0 0
  %66 = vmatpush1.bf16.msra.mxu0 0
  %67 = vmatprep.subr.bf16.mxu0 0
  %68 = vmatpush1.bf16.msra.mxu0 0
  %69 = vmatprep.subr.bf16.mxu0 0
  %70 = vmatpush1.bf16.msra.mxu0 0
  %71 = vmatprep.subr.bf16.mxu0 0
  %72 = vmatpush1.bf16.msra.mxu0 0
  %73 = vmatprep.subr.bf16.mxu0 0
  %74 = vmatpush1.bf16.msra.mxu0 0
  %75 = vmatprep.subr.bf16.mxu0 0
  %76 = vmatpush1.bf16.msra.mxu0 0
  %77 = vmatprep.subr.bf16.mxu0 0
  %78 = vmatpush1.bf16.msra.mxu0 0
  %79 = vmatprep.mubr.bf16.mxu0 0
  %80 = vmatmul.mubr.bf16.gmra.mrb[0].mxu0 %v45
  %v81 = vpop.f32.mrb[0].mxu0
  %v82 = vadd.f32 0.0, %v81
  %v83 = vpop.f32.mrb[0].mxu0
  %v84 = vpop.f32.mrb[0].mxu0
  %v85 = vadd.f32 0.0, %v84
  %v86 = vpop.f32.mrb[0].mxu0
  %87 = vdwg.mxu0
  %v88 = vadd.f32 %v29, %v82
  %v89 = vadd.f32 %v30, %v85
  %vm90 = vcmask 785408
  %91 = vst.msk [vmem:[#allocation2] sm:$0xff] %vm90, %v88
  %92 = vst.msk [vmem:[#allocation2 + $0x8] sm:$0xff] %vm90, %v89
  // Predicated region
  $region18: #{wavlm_wrapper_forward.16} parent=0 // pred_check
    %p93 = pneg %p15
  $region19: #{wavlm_wrapper_forward.16} parent=0 // pred_check_branch
    %95 = sbr.rel (%p93) target = $region21
  $region20: #{wavlm_wrapper_forward.16} parent=0 // pred_region
    %v96 = vld [vmem:[#allocation2] sm:$0xff]
    %v97 = vld [vmem:[#allocation2 + $0x8] sm:$0xff]
    %v98 = vld [vmem:[%s2] sm:$0x1]
    %v100 = vlaneseq
    %v101 = vshrl.u32 %v100, 7
    %v102 = vsub.s32 0, %v101
    %v103 = vrot.slane %v98, %v102
    %v105 = vadd.f32 %v96, %v103
    %v106 = vadd.f32 %v97, %v103
    %107 = vst.msk [vmem:[%s3] sm:$0xff] %vm90, %v105
    %108 = vst.msk [vmem:[%s3 + $0x8] sm:$0xff] %vm90, %v106
  $region21: #{wavlm_wrapper_forward.16} parent=0 // pred_fallthru
    _
  // Predicated region
  $region22: #{wavlm_wrapper_forward.16} parent=0 // pred_check
    _
  $region23: #{wavlm_wrapper_forward.16} parent=0 // pred_check_branch
    %110 = sbr.rel (0) target = $region25
  $region24: #{wavlm_wrapper_forward.16} parent=0 // pred_region
    _
  $region25: #{wavlm_wrapper_forward.16} parent=0 // pred_fallthru
    _
  // Predicated region
  $region26: #{wavlm_wrapper_forward.16} parent=0 // pred_check
    _
  $region27: #{wavlm_wrapper_forward.16} parent=0 // pred_check_branch
    %112 = sbr.rel (0) target = $region29
  $region28: #{wavlm_wrapper_forward.16} parent=0 // pred_region
    _
  $region29: #{wavlm_wrapper_forward.16} parent=0 // pred_fallthru
    _

// kernel: wavlm_wrapper_forward.14
$region0: #{wavlm_wrapper_forward.14}
  #allocation0 [shape = 'u32[]', space=smem, size = 0x4, offset = 0x4, fixed_abs, tag = 'smem constant byte address 0x4 - core index']
  #allocation1 [shape = 'u32[144,128]{1,0:T(1,128)}', space=vmem, size = 0x12000, scoped, tag = 'internal scratch']
  %s0 = inlined_call_operand.vmem [shape: f32[2,4,24,8], index: 0, kind: input, shape index: {}]
  %s1 = inlined_call_operand.vmem [shape: bf16[4,16,8,8], index: 1, kind: input, shape index: {}]
  %s2 = inlined_call_operand.vmem [shape: f32[4,1,8], index: 2, kind: input, shape index: {}]
  %s3 = inlined_call_operand.vmem [shape: f32[2,4,8,8], index: 3, kind: output, shape index: {}]
  %s4 = sld [smem:[#allocation0]]
  $region45: #{wavlm_wrapper_forward.14} parent=0
    _
  %s6 = ssub.s32 1, %s4
  %s7 = scalar_select 0, %s6, %s4
  loop: start=0, step=1, limit=10
  $region2: #{wavlm_wrapper_forward.14} parent=0 // loop_pre_header
    _
  $region3: #{wavlm_wrapper_forward.14} parent=0 // loop_header
    %s9 = sphi 0, %s13
    %p10 = scmp.ge.s32.totalorder %s9, 10
    %s16 = sphi 0, %s28
    %s17 = sphi 0, %s24
    %s18 = sphi 0, %s16
    %s19 = sphi 0, %s17
    %s20 = sphi 0, %s18
    %s21 = sphi 0, %s19
    %s33 = sphi 0, %s35
    %s36 = sphi 0, %s33
    %s37 = sphi 0, %s36
    %s53 = sphi 0, %s37
    %s59 = sphi 0, %s61
    %s62 = sphi 0, %s59
    %s63 = sphi 0, %s62
    %s79 = sphi 0, %s63
    %s85 = sphi 0, %s87
    %s88 = sphi 0, %s85
    %s89 = sphi 0, %s88
    %s105 = sphi 0, %s89
    %s113 = sphi 0, %s115
    %s116 = sphi 0, %s113
    %s117 = sphi 0, %s116
    %s133 = sphi 0, %s117
  $region4: #{wavlm_wrapper_forward.14} parent=0 // loop_header_branch
    %12 = sbr.rel (%p10) target = $region8
  $region5: #{wavlm_wrapper_forward.14} parent=0 // loop_body
    %s14 = ssub.s32 %s9, 1
    %s15 = ssub.s32 %s9, 2
    %s22 = sadd.s32 1, %s17
    %p23 = scmp.ge.s32.totalorder %s22, 4
    %s24 = scalar_select %p23, 0, %s22
    %s25 = sadd.s32 1, %s16
    %s26 = scalar_select %p23, %s25, %s16
    %p27 = scmp.ge.s32.totalorder %s26, 2
    %s28 = scalar_select %p27, 0, %s26
    %s29 = ssub.s32 %s16, %s28
    %s30 = ssub.s32 %s17, %s24
    %s31 = sor.u32 %s29, %s30
    %p32 = scmp.eq.s32.totalorder %s31, 0
    %s34 = sadd.s32 %s33, 1
    %s35 = scalar_select %p32, %s33, %s34
    %p38 = pneg %p32
    %p39 = scmp.eq.s32.totalorder %s9, 7
    %p40 = por %p38, %p39
    %p41 = scmp.ne.s32.totalorder %s33, %s36
    %p42 = scmp.eq.s32.totalorder %s9, 0
    %p43 = por %p41, %p42
    %p44 = scmp.ne.s32.totalorder %s33, %s36
    %p45 = scmp.eq.s32.totalorder %s14, 7
    %p46 = por %p44, %p45
    %p47 = scmp.ne.s32.totalorder %s36, %s37
    %p48 = scmp.eq.s32.totalorder %s14, 0
    %p49 = por %p47, %p48
    %p50 = scmp.ne.s32.totalorder %s36, %s37
    %p51 = scmp.eq.s32.totalorder %s15, 7
    %p52 = por %p50, %p51
    %p54 = scmp.ne.s32.totalorder %s37, %s53
    %p55 = scmp.eq.s32.totalorder %s15, 0
    %p56 = por %p54, %p55
    %s57 = ssub.s32 %s17, %s24
    %p58 = scmp.eq.s32.totalorder %s57, 0
    %s60 = sadd.s32 %s59, 1
    %s61 = scalar_select %p58, %s59, %s60
    %p64 = pneg %p58
    %p65 = scmp.eq.s32.totalorder %s9, 7
    %p66 = por %p64, %p65
    %p67 = scmp.ne.s32.totalorder %s59, %s62
    %p68 = scmp.eq.s32.totalorder %s9, 0
    %p69 = por %p67, %p68
    %p70 = scmp.ne.s32.totalorder %s59, %s62
    %p71 = scmp.eq.s32.totalorder %s14, 7
    %p72 = por %p70, %p71
    %p73 = scmp.ne.s32.totalorder %s62, %s63
    %p74 = scmp.eq.s32.totalorder %s14, 0
    %p75 = por %p73, %p74
    %p76 = scmp.ne.s32.totalorder %s62, %s63
    %p77 = scmp.eq.s32.totalorder %s15, 7
    %p78 = por %p76, %p77
    %p80 = scmp.ne.s32.totalorder %s63, %s79
    %p81 = scmp.eq.s32.totalorder %s15, 0
    %p82 = por %p80, %p81
    %s83 = ssub.s32 %s17, %s24
    %p84 = scmp.eq.s32.totalorder %s83, 0
    %s86 = sadd.s32 %s85, 1
    %s87 = scalar_select %p84, %s85, %s86
    %p90 = pneg %p84
    %p91 = scmp.eq.s32.totalorder %s9, 7
    %p92 = por %p90, %p91
    %p93 = scmp.ne.s32.totalorder %s85, %s88
    %p94 = scmp.eq.s32.totalorder %s9, 0
    %p95 = por %p93, %p94
    %p96 = scmp.ne.s32.totalorder %s85, %s88
    %p97 = scmp.eq.s32.totalorder %s14, 7
    %p98 = por %p96, %p97
    %p99 = scmp.ne.s32.totalorder %s88, %s89
    %p100 = scmp.eq.s32.totalorder %s14, 0
    %p101 = por %p99, %p100
    %p102 = scmp.ne.s32.totalorder %s88, %s89
    %p103 = scmp.eq.s32.totalorder %s15, 7
    %p104 = por %p102, %p103
    %p106 = scmp.ne.s32.totalorder %s89, %s105
    %p107 = scmp.eq.s32.totalorder %s15, 0
    %p108 = por %p106, %p107
    %s109 = ssub.s32 %s16, %s28
    %s110 = ssub.s32 %s17, %s24
    %s111 = sor.u32 %s109, %s110
    %p112 = scmp.eq.s32.totalorder %s111, 0
    %s114 = sadd.s32 %s113, 1
    %s115 = scalar_select %p112, %s113, %s114
    %p118 = pneg %p112
    %p119 = scmp.eq.s32.totalorder %s9, 7
    %p120 = por %p118, %p119
    %p121 = scmp.ne.s32.totalorder %s113, %s116
    %p122 = scmp.eq.s32.totalorder %s9, 0
    %p123 = por %p121, %p122
    %p124 = scmp.ne.s32.totalorder %s113, %s116
    %p125 = scmp.eq.s32.totalorder %s14, 7
    %p126 = por %p124, %p125
    %p127 = scmp.ne.s32.totalorder %s116, %s117
    %p128 = scmp.eq.s32.totalorder %s14, 0
    %p129 = por %p127, %p128
    %p130 = scmp.ne.s32.totalorder %s116, %s117
    %p131 = scmp.eq.s32.totalorder %s15, 7
    %p132 = por %p130, %p131
    %p134 = scmp.ne.s32.totalorder %s117, %s133
    %p135 = scmp.eq.s32.totalorder %s15, 0
    %p136 = por %p134, %p135
    %p137 = scmp.le.s32.totalorder 1, %s9
    %p138 = scmp.lt.s32.totalorder %s9, 9
    %p139 = pnand %p137, %p138
    %p140 = pneg %p139
    // Predicated region
    $region9: #{wavlm_wrapper_forward.14} parent=5 // pred_check
      _
    $region10: #{wavlm_wrapper_forward.14} parent=5 // pred_check_branch
      %142 = sbr.rel (%p139) target = $region12
    $region11: #{wavlm_wrapper_forward.14} parent=5 // pred_region
      %s143 = ssub.s32 %s9, 1
    $region12: #{wavlm_wrapper_forward.14} parent=5 // pred_fallthru
      _
    %p144 = scmp.lt.s32.totalorder %s9, 8
    // Predicated region
    $region13: #{wavlm_wrapper_forward.14} parent=5 // pred_check
      %p145 = pneg %p144
    $region14: #{wavlm_wrapper_forward.14} parent=5 // pred_check_branch
      %147 = sbr.rel (%p145) target = $region16
    $region15: #{wavlm_wrapper_forward.14} parent=5 // pred_region
      // Predicated region
      $region17: #{wavlm_wrapper_forward.14} parent=15 // pred_check
        %p148 = pneg %p43
      $region18: #{wavlm_wrapper_forward.14} parent=15 // pred_check_branch
        %150 = sbr.rel (%p148) target = $region20
      $region19: #{wavlm_wrapper_forward.14} parent=15 // pred_region
        %p151 = scmp.lt.s32.totalorder %s16, 1
        %s152 = scalar_select %p151, %s16, 1
        %p153 = scmp.lt.s32.totalorder %s17, 3
        %s154 = scalar_select %p153, %s17, 3
        %s155 = smul.addr %s154, 3
        %s156 = smul.addr %s152, 12
        %s157 = sadd.s32 %s155, %s156
        %s158 = smul.addr %s157, 8
        %s159 = scalar_lea.vmem %s0, %s158
      $region20: #{wavlm_wrapper_forward.14} parent=15 // pred_fallthru
        _
      // Predicated region
      $region21: #{wavlm_wrapper_forward.14} parent=15 // pred_check
        %p160 = pneg %p69
      $region22: #{wavlm_wrapper_forward.14} parent=15 // pred_check_branch
        %162 = sbr.rel (%p160) target = $region24
      $region23: #{wavlm_wrapper_forward.14} parent=15 // pred_region
        %p163 = scmp.lt.s32.totalorder %s17, 3
        %s164 = scalar_select %p163, %s17, 3
        %s165 = smul.addr %s164, 16
        %s166 = smul.addr %s165, 4
        %s167 = scalar_lea.vmem %s1, %s166
      $region24: #{wavlm_wrapper_forward.14} parent=15 // pred_fallthru
        _
      // Predicated region
      $region25: #{wavlm_wrapper_forward.14} parent=15 // pred_check
        %p168 = pneg %p95
      $region26: #{wavlm_wrapper_forward.14} parent=15 // pred_check_branch
        %170 = sbr.rel (%p168) target = $region28
      $region27: #{wavlm_wrapper_forward.14} parent=15 // pred_region
        %p171 = scmp.lt.s32.totalorder %s17, 3
        %s172 = scalar_select %p171, %s17, 3
        %s173 = scalar_lea.vmem %s2, %s172
      $region28: #{wavlm_wrapper_forward.14} parent=15 // pred_fallthru
        _
    $region16: #{wavlm_wrapper_forward.14} parent=5 // pred_fallthru
      _
    %p174 = scmp.le.s32.totalorder 1, %s9
    %p175 = scmp.lt.s32.totalorder %s9, 9
    %p176 = pnand %p174, %p175
    %p177 = pneg %p176
    // Predicated region
    $region29: #{wavlm_wrapper_forward.14} parent=5 // pred_check
      _
    $region30: #{wavlm_wrapper_forward.14} parent=5 // pred_check_branch
      %179 = sbr.rel (%p176) target = $region32
    $region31: #{wavlm_wrapper_forward.14} parent=5 // pred_region
      %s180 = ssub.s32 %s9, 1
      %p181 = scmp.lt.s32.totalorder %s18, 1
      %s182 = scalar_select %p181, %s18, 1
      %p183 = scmp.lt.s32.totalorder %s19, 3
      %s184 = scalar_select %p183, %s19, 3
      %s185 = smul.addr %s184, 3
      %s186 = smul.addr %s182, 12
      %s187 = sadd.s32 %s185, %s186
      %s188 = smul.addr %s187, 8
      %s189 = scalar_lea.vmem %s0, %s188
      %p190 = pneg %p49
      %p191 = pneg %p46
      %p192 = scmp.lt.s32.totalorder %s19, 3
      %s193 = scalar_select %p192, %s19, 3
      %s194 = smul.addr %s193, 16
      %s195 = smul.addr %s194, 4
      %s196 = scalar_lea.vmem %s1, %s195
      %p197 = pneg %p75
      %p198 = pneg %p72
      %p199 = scmp.lt.s32.totalorder %s19, 3
      %s200 = scalar_select %p199, %s19, 3
      %s201 = scalar_lea.vmem %s2, %s200
      %p202 = pneg %p101
      %p203 = pneg %p98
      %p204 = pneg %p129
      %p205 = pneg %p126
      %p206 = scmp.lt.s32.totalorder %s18, 1
      %s207 = scalar_select %p206, %s18, 1
      %p208 = scmp.lt.s32.totalorder %s19, 3
      %s209 = scalar_select %p208, %s19, 3
      %s210 = smul.addr %s207, 4
      %s211 = sadd.s32 %s209, %s210
      %s212 = smul.addr %s211, 8
      %s213 = scalar_lea.vmem %s3, %s212
      %p214 = scmp.lt.s32.totalorder %s18, 1
      %s215 = scalar_select %p214, %s18, 1
      %p216 = scmp.lt.s32.totalorder %s19, 3
      %s217 = scalar_select %p216, %s19, 3
      %s218 = smul.addr %s217, 3
      %s219 = smul.addr %s215, 12
      %s220 = sadd.s32 %s218, %s219
      %s221 = smul.addr %s220, 8
      %s222 = scalar_lea.vmem %s0, %s221
      %p223 = scmp.lt.s32.totalorder %s19, 3
      %s224 = scalar_select %p223, %s19, 3
      %s225 = smul.addr %s224, 16
      %s226 = smul.addr %s225, 4
      %s227 = scalar_lea.vmem %s1, %s226
      %p228 = scmp.lt.s32.totalorder %s19, 3
      %s229 = scalar_select %p228, %s19, 3
      %s230 = scalar_lea.vmem %s2, %s229
      %p231 = scmp.lt.s32.totalorder %s18, 1
      %s232 = scalar_select %p231, %s18, 1
      %p233 = scmp.lt.s32.totalorder %s19, 3
      %s234 = scalar_select %p233, %s19, 3
      %s235 = smul.addr %s232, 4
      %s236 = sadd.s32 %s234, %s235
      %s237 = smul.addr %s236, 8
      %s238 = scalar_lea.vmem %s3, %s237
      %v240 = vld [vmem:[%s222] sm:$0xff]
      %v241 = vld [vmem:[%s222 + $0x8] sm:$0xff]
      %v242 = vld [vmem:[%s222 + $0x10] sm:$0xff]
      %v243 = vld [vmem:[%s227] sm:$0xf]
      %v244 = vld [vmem:[%s227 + $0x4] sm:$0xf]
      %v245 = vld [vmem:[%s227 + $0x8] sm:$0xf]
      %v246 = vld [vmem:[%s227 + $0xc] sm:$0xf]
      %v247 = vld [vmem:[%s227 + $0x10] sm:$0xf]
      %v248 = vld [vmem:[%s227 + $0x14] sm:$0xf]
      %v249 = vld [vmem:[%s227 + $0x18] sm:$0xf]
      %v250 = vld [vmem:[%s227 + $0x1c] sm:$0xf]
      %v251 = vld [vmem:[%s227 + $0x20] sm:$0xf]
      %v252 = vld [vmem:[%s227 + $0x24] sm:$0xf]
      %v253 = vld [vmem:[%s227 + $0x28] sm:$0xf]
      %v254 = vld [vmem:[%s227 + $0x2c] sm:$0xf]
      %v255 = vld [vmem:[%s227 + $0x30] sm:$0xf]
      %v256 = vld [vmem:[%s227 + $0x34] sm:$0xf]
      %v257 = vld [vmem:[%s227 + $0x38] sm:$0xf]
      %v258 = vld [vmem:[%s227 + $0x3c] sm:$0xf]
      %v259 = vpack.c.bf16 %v240, %v240
      %v260 = vpack.c.bf16 %v241, %v240
      %v262 = vshrl.u32 %v260, 16
      %v264 = vshll.u32 %v260, 16
      %v266 = vrot.slane %v264, 1
      %v267 = vor.u32 %v262, %v266
      %vm268 = vcmask 64512
      %v270 = vsel %vm268, %v267, 0
      %vm272 = vcmask 1043456
      %v274 = vsel %vm272, %v244, 0
      %276 = vmatprep.subr.bf16.mxu0 0
      %277 = vmatpush1.bf16.msra.mxu0 %v274
      %278 = vmatprep.subr.bf16.mxu0 0
      %279 = vmatpush1.bf16.msra.mxu0 0
      %280 = vmatprep.subr.bf16.mxu0 0
      %281 = vmatpush1.bf16.msra.mxu0 0
      %282 = vmatprep.subr.bf16.mxu0 0
      %283 = vmatpush1.bf16.msra.mxu0 0
      %284 = vmatprep.subr.bf16.mxu0 0
      %285 = vmatpush1.bf16.msra.mxu0 0
      %286 = vmatprep.subr.bf16.mxu0 0
      %287 = vmatpush1.bf16.msra.mxu0 0
      %288 = vmatprep.subr.bf16.mxu0 0
      %289 = vmatpush1.bf16.msra.mxu0 0
      %290 = vmatprep.subr.bf16.mxu0 0
      %291 = vmatpush1.bf16.msra.mxu0 0
      %292 = vmatprep.subr.bf16.mxu0 0
      %293 = vmatpush1.bf16.msra.mxu0 0
      %294 = vmatprep.subr.bf16.mxu0 0
      %295 = vmatpush1.bf16.msra.mxu0 0
      %296 = vmatprep.subr.bf16.mxu0 0
      %297 = vmatpush1.bf16.msra.mxu0 0
      %298 = vmatprep.subr.bf16.mxu0 0
      %299 = vmatpush1.bf16.msra.mxu0 0
      %300 = vmatprep.subr.bf16.mxu0 0
      %301 = vmatpush1.bf16.msra.mxu0 0
      %302 = vmatprep.subr.bf16.mxu0 0
      %303 = vmatpush1.bf16.msra.mxu0 0
      %304 = vmatprep.subr.bf16.mxu0 0
      %305 = vmatpush1.bf16.msra.mxu0 0
      %306 = vmatprep.subr.bf16.mxu0 0
      %307 = vmatpush1.bf16.msra.mxu0 0
      %308 = vmatprep.mubr.bf16.mxu0 0
      %309 = vmatmul.mubr.bf16.gmra.mrb[0].mxu0 %v270
      %v310 = vpop.f32.mrb[0].mxu0
      %v311 = vadd.f32 0.0, %v310
      %v312 = vpop.f32.mrb[0].mxu0
      %v313 = vpop.f32.mrb[0].mxu0
      %v314 = vpop.f32.mrb[0].mxu0
      %315 = vdwg.mxu0
      %v317 = vsel %vm268, %v259, 0
      %v320 = vsel %vm272, %v243, 0
      %322 = vmatprep.subr.bf16.mxu0 0
      %323 = vmatpush1.bf16.msra.mxu0 %v320
      %324 = vmatprep.subr.bf16.mxu0 0
      %325 = vmatpush1.bf16.msra.mxu0 0
      %326 = vmatprep.subr.bf16.mxu0 0
      %327 = vmatpush1.bf16.msra.mxu0 0
      %328 = vmatprep.subr.bf16.mxu0 0
      %329 = vmatpush1.bf16.msra.mxu0 0
      %330 = vmatprep.subr.bf16.mxu0 0
      %331 = vmatpush1.bf16.msra.mxu0 0
      %332 = vmatprep.subr.bf16.mxu0 0
      %333 = vmatpush1.bf16.msra.mxu0 0
      %334 = vmatprep.subr.bf16.mxu0 0
      %335 = vmatpush1.bf16.msra.mxu0 0
      %336 = vmatprep.subr.bf16.mxu0 0
      %337 = vmatpush1.bf16.msra.mxu0 0
      %338 = vmatprep.subr.bf16.mxu0 0
      %339 = vmatpush1.bf16.msra.mxu0 0
      %340 = vmatprep.subr.bf16.mxu0 0
      %341 = vmatpush1.bf16.msra.mxu0 0
      %342 = vmatprep.subr.bf16.mxu0 0
      %343 = vmatpush1.bf16.msra.mxu0 0
      %344 = vmatprep.subr.bf16.mxu0 0
      %345 = vmatpush1.bf16.msra.mxu0 0
      %346 = vmatprep.subr.bf16.mxu0 0
      %347 = vmatpush1.bf16.msra.mxu0 0
      %348 = vmatprep.subr.bf16.mxu0 0
      %349 = vmatpush1.bf16.msra.mxu0 0
      %350 = vmatprep.subr.bf16.mxu0 0
      %351 = vmatpush1.bf16.msra.mxu0 0
      %352 = vmatprep.subr.bf16.mxu0 0
      %353 = vmatpush1.bf16.msra.mxu0 0
      %354 = vmatprep.mubr.bf16.mxu0 0
      %355 = vmatmul.mubr.bf16.gmra.mrb[0].mxu0 %v317
      %v356 = vpop.f32.mrb[0].mxu0
      %v357 = vadd.f32 %v311, %v356
      %v358 = vpop.f32.mrb[0].mxu0
      %v359 = vpop.f32.mrb[0].mxu0
      %v360 = vpop.f32.mrb[0].mxu0
      %361 = vdwg.mxu0
      %v363 = vrot.slane %v260, 1
      %v365 = vsel %vm268, %v363, 0
      %v368 = vsel %vm272, %v245, 0
      %370 = vmatprep.subr.bf16.mxu0 0
      %371 = vmatpush1.bf16.msra.mxu0 %v368
      %372 = vmatprep.subr.bf16.mxu0 0
      %373 = vmatpush1.bf16.msra.mxu0 0
      %374 = vmatprep.subr.bf16.mxu0 0
      %375 = vmatpush1.bf16.msra.mxu0 0
      %376 = vmatprep.subr.bf16.mxu0 0
      %377 = vmatpush1.bf16.msra.mxu0 0
      %378 = vmatprep.subr.bf16.mxu0 0
      %379 = vmatpush1.bf16.msra.mxu0 0
      %380 = vmatprep.subr.bf16.mxu0 0
      %381 = vmatpush1.bf16.msra.mxu0 0
      %382 = vmatprep.subr.bf16.mxu0 0
      %383 = vmatpush1.bf16.msra.mxu0 0
      %384 = vmatprep.subr.bf16.mxu0 0
      %385 = vmatpush1.bf16.msra.mxu0 0
      %386 = vmatprep.subr.bf16.mxu0 0
      %387 = vmatpush1.bf16.msra.mxu0 0
      %388 = vmatprep.subr.bf16.mxu0 0
      %389 = vmatpush1.bf16.msra.mxu0 0
      %390 = vmatprep.subr.bf16.mxu0 0
      %391 = vmatpush1.bf16.msra.mxu0 0
      %392 = vmatprep.subr.bf16.mxu0 0
      %393 = vmatpush1.bf16.msra.mxu0 0
      %394 = vmatprep.subr.bf16.mxu0 0
      %395 = vmatpush1.bf16.msra.mxu0 0
      %396 = vmatprep.subr.bf16.mxu0 0
      %397 = vmatpush1.bf16.msra.mxu0 0
      %398 = vmatprep.subr.bf16.mxu0 0
      %399 = vmatpush1.bf16.msra.mxu0 0
      %400 = vmatprep.subr.bf16.mxu0 0
      %401 = vmatpush1.bf16.msra.mxu0 0
      %402 = vmatprep.mubr.bf16.mxu0 0
      %403 = vmatmul.mubr.bf16.gmra.mrb[0].mxu0 %v365
      %v404 = vpop.f32.mrb[0].mxu0
      %v405 = vadd.f32 0.0, %v404
      %v406 = vpop.f32.mrb[0].mxu0
      %v407 = vpop.f32.mrb[0].mxu0
      %v408 = vpop.f32.mrb[0].mxu0
      %409 = vdwg.mxu0
      %v410 = vadd.f32 %v357, %v405
      %v411 = vrot.slane %v262, 1
      %v412 = vrot.slane %v264, 2
      %v413 = vor.u32 %v411, %v412
      %v415 = vsel %vm268, %v413, 0
      %v418 = vsel %vm272, %v246, 0
      %420 = vmatprep.subr.bf16.mxu0 0
      %421 = vmatpush1.bf16.msra.mxu0 %v418
      %422 = vmatprep.subr.bf16.mxu0 0
      %423 = vmatpush1.bf16.msra.mxu0 0
      %424 = vmatprep.subr.bf16.mxu0 0
      %425 = vmatpush1.bf16.msra.mxu0 0
      %426 = vmatprep.subr.bf16.mxu0 0
      %427 = vmatpush1.bf16.msra.mxu0 0
      %428 = vmatprep.subr.bf16.mxu0 0
      %429 = vmatpush1.bf16.msra.mxu0 0
      %430 = vmatprep.subr.bf16.mxu0 0
      %431 = vmatpush1.bf16.msra.mxu0 0
      %432 = vmatprep.subr.bf16.mxu0 0
      %433 = vmatpush1.bf16.msra.mxu0 0
      %434 = vmatprep.subr.bf16.mxu0 0
      %435 = vmatpush1.bf16.msra.mxu0 0
      %436 = vmatprep.subr.bf16.mxu0 0
      %437 = vmatpush1.bf16.msra.mxu0 0
      %438 = vmatprep.subr.bf16.mxu0 0
      %439 = vmatpush1.bf16.msra.mxu0 0
      %440 = vmatprep.subr.bf16.mxu0 0
      %441 = vmatpush1.bf16.msra.mxu0 0
      %442 = vmatprep.subr.bf16.mxu0 0
      %443 = vmatpush1.bf16.msra.mxu0 0
      %444 = vmatprep.subr.bf16.mxu0 0
      %445 = vmatpush1.bf16.msra.mxu0 0
      %446 = vmatprep.subr.bf16.mxu0 0
      %447 = vmatpush1.bf16.msra.mxu0 0
      %448 = vmatprep.subr.bf16.mxu0 0
      %449 = vmatpush1.bf16.msra.mxu0 0
      %450 = vmatprep.subr.bf16.mxu0 0
      %451 = vmatpush1.bf16.msra.mxu0 0
      %452 = vmatprep.mubr.bf16.mxu0 0
      %453 = vmatmul.mubr.bf16.gmra.mrb[0].mxu0 %v415
      %v454 = vpop.f32.mrb[0].mxu0
      %v455 = vadd.f32 0.0, %v454
      %v456 = vpop.f32.mrb[0].mxu0
      %v457 = vpop.f32.mrb[0].mxu0
      %v458 = vpop.f32.mrb[0].mxu0
      %459 = vdwg.mxu0
      %v460 = vadd.f32 %v410, %v455
      %v461 = vrot.slane %v260, 2
      %v463 = vsel %vm268, %v461, 0
      %v466 = vsel %vm272, %v247, 0
      %468 = vmatprep.subr.bf16.mxu0 0
      %469 = vmatpush1.bf16.msra.mxu0 %v466
      %470 = vmatprep.subr.bf16.mxu0 0
      %471 = vmatpush1.bf16.msra.mxu0 0
      %472 = vmatprep.subr.bf16.mxu0 0
      %473 = vmatpush1.bf16.msra.mxu0 0
      %474 = vmatprep.subr.bf16.mxu0 0
      %475 = vmatpush1.bf16.msra.mxu0 0
      %476 = vmatprep.subr.bf16.mxu0 0
      %477 = vmatpush1.bf16.msra.mxu0 0
      %478 = vmatprep.subr.bf16.mxu0 0
      %479 = vmatpush1.bf16.msra.mxu0 0
      %480 = vmatprep.subr.bf16.mxu0 0
      %481 = vmatpush1.bf16.msra.mxu0 0
      %482 = vmatprep.subr.bf16.mxu0 0
      %483 = vmatpush1.bf16.msra.mxu0 0
      %484 = vmatprep.subr.bf16.mxu0 0
      %485 = vmatpush1.bf16.msra.mxu0 0
      %486 = vmatprep.subr.bf16.mxu0 0
      %487 = vmatpush1.bf16.msra.mxu0 0
      %488 = vmatprep.subr.bf16.mxu0 0
      %489 = vmatpush1.bf16.msra.mxu0 0
      %490 = vmatprep.subr.bf16.mxu0 0
      %491 = vmatpush1.bf16.msra.mxu0 0
      %492 = vmatprep.subr.bf16.mxu0 0
      %493 = vmatpush1.bf16.msra.mxu0 0
      %494 = vmatprep.subr.bf16.mxu0 0
      %495 = vmatpush1.bf16.msra.mxu0 0
      %496 = vmatprep.subr.bf16.mxu0 0
      %497 = vmatpush1.bf16.msra.mxu0 0
      %498 = vmatprep.subr.bf16.mxu0 0
      %499 = vmatpush1.bf16.msra.mxu0 0
      %500 = vmatprep.mubr.bf16.mxu0 0
      %501 = vmatmul.mubr.bf16.gmra.mrb[0].mxu0 %v463
      %v502 = vpop.f32.mrb[0].mxu0
      %v503 = vadd.f32 0.0, %v502
      %v504 = vpop.f32.mrb[0].mxu0
      %v505 = vpop.f32.mrb[0].mxu0
      %v506 = vpop.f32.mrb[0].mxu0
      %507 = vdwg.mxu0
      %v508 = vadd.f32 %v460, %v503
      %v509 = vrot.slane %v262, 2
      %v510 = vrot.slane %v264, 3
      %v511 = vor.u32 %v509, %v510
      %v513 = vsel %vm268, %v511, 0
      %v516 = vsel %vm272, %v248, 0
      %518 = vmatprep.subr.bf16.mxu0 0
      %519 = vmatpush1.bf16.msra.mxu0 %v516
      %520 = vmatprep.subr.bf16.mxu0 0
      %521 = vmatpush1.bf16.msra.mxu0 0
      %522 = vmatprep.subr.bf16.mxu0 0
      %523 = vmatpush1.bf16.msra.mxu0 0
      %524 = vmatprep.subr.bf16.mxu0 0
      %525 = vmatpush1.bf16.msra.mxu0 0
      %526 = vmatprep.subr.bf16.mxu0 0
      %527 = vmatpush1.bf16.msra.mxu0 0
      %528 = vmatprep.subr.bf16.mxu0 0
      %529 = vmatpush1.bf16.msra.mxu0 0
      %530 = vmatprep.subr.bf16.mxu0 0
      %531 = vmatpush1.bf16.msra.mxu0 0
      %532 = vmatprep.subr.bf16.mxu0 0
      %533 = vmatpush1.bf16.msra.mxu0 0
      %534 = vmatprep.subr.bf16.mxu0 0
      %535 = vmatpush1.bf16.msra.mxu0 0
      %536 = vmatprep.subr.bf16.mxu0 0
      %537 = vmatpush1.bf16.msra.mxu0 0
      %538 = vmatprep.subr.bf16.mxu0 0
      %539 = vmatpush1.bf16.msra.mxu0 0
      %540 = vmatprep.subr.bf16.mxu0 0
      %541 = vmatpush1.bf16.msra.mxu0 0
      %542 = vmatprep.subr.bf16.mxu0 0
      %543 = vmatpush1.bf16.msra.mxu0 0
      %544 = vmatprep.subr.bf16.mxu0 0
      %545 = vmatpush1.bf16.msra.mxu0 0
      %546 = vmatprep.subr.bf16.mxu0 0
      %547 = vmatpush1.bf16.msra.mxu0 0
      %548 = vmatprep.subr.bf16.mxu0 0
      %549 = vmatpush1.bf16.msra.mxu0 0
      %550 = vmatprep.mubr.bf16.mxu0 0
      %551 = vmatmul.mubr.bf16.gmra.mrb[0].mxu0 %v513
      %v552 = vpop.f32.mrb[0].mxu0
      %v553 = vadd.f32 0.0, %v552
      %v554 = vpop.f32.mrb[0].mxu0
      %v555 = vpop.f32.mrb[0].mxu0
      %v556 = vpop.f32.mrb[0].mxu0
      %557 = vdwg.mxu0
      %v558 = vadd.f32 %v508, %v553
      %v559 = vrot.slane %v260, 3
      %v561 = vsel %vm268, %v559, 0
      %v564 = vsel %vm272, %v249, 0
      %566 = vmatprep.subr.bf16.mxu0 0
      %567 = vmatpush1.bf16.msra.mxu0 %v564
      %568 = vmatprep.subr.bf16.mxu0 0
      %569 = vmatpush1.bf16.msra.mxu0 0
      %570 = vmatprep.subr.bf16.mxu0 0
      %571 = vmatpush1.bf16.msra.mxu0 0
      %572 = vmatprep.subr.bf16.mxu0 0
      %573 = vmatpush1.bf16.msra.mxu0 0
      %574 = vmatprep.subr.bf16.mxu0 0
      %575 = vmatpush1.bf16.msra.mxu0 0
      %576 = vmatprep.subr.bf16.mxu0 0
      %577 = vmatpush1.bf16.msra.mxu0 0
      %578 = vmatprep.subr.bf16.mxu0 0
      %579 = vmatpush1.bf16.msra.mxu0 0
      %580 = vmatprep.subr.bf16.mxu0 0
      %581 = vmatpush1.bf16.msra.mxu0 0
      %582 = vmatprep.subr.bf16.mxu0 0
      %583 = vmatpush1.bf16.msra.mxu0 0
      %584 = vmatprep.subr.bf16.mxu0 0
      %585 = vmatpush1.bf16.msra.mxu0 0
      %586 = vmatprep.subr.bf16.mxu0 0
      %587 = vmatpush1.bf16.msra.mxu0 0
      %588 = vmatprep.subr.bf16.mxu0 0
      %589 = vmatpush1.bf16.msra.mxu0 0
      %590 = vmatprep.subr.bf16.mxu0 0
      %591 = vmatpush1.bf16.msra.mxu0 0
      %592 = vmatprep.subr.bf16.mxu0 0
      %593 = vmatpush1.bf16.msra.mxu0 0
      %594 = vmatprep.subr.bf16.mxu0 0
      %595 = vmatpush1.bf16.msra.mxu0 0
      %596 = vmatprep.subr.bf16.mxu0 0
      %597 = vmatpush1.bf16.msra.mxu0 0
      %598 = vmatprep.mubr.bf16.mxu0 0
      %599 = vmatmul.mubr.bf16.gmra.mrb[0].mxu0 %v561
      %v600 = vpop.f32.mrb[0].mxu0
      %v601 = vadd.f32 0.0, %v600
      %v602 = vpop.f32.mrb[0].mxu0
      %v603 = vpop.f32.mrb[0].mxu0
      %v604 = vpop.f32.mrb[0].mxu0
      %605 = vdwg.mxu0
      %v606 = vadd.f32 %v558, %v601
      %v607 = vrot.slane %v262, 3
      %v608 = vrot.slane %v264, 4
      %v609 = vor.u32 %v607, %v608
      %v611 = vsel %vm268, %v609, 0
      %v614 = vsel %vm272, %v250, 0
      %616 = vmatprep.subr.bf16.mxu0 0
      %617 = vmatpush1.bf16.msra.mxu0 %v614
      %618 = vmatprep.subr.bf16.mxu0 0
      %619 = vmatpush1.bf16.msra.mxu0 0
      %620 = vmatprep.subr.bf16.mxu0 0
      %621 = vmatpush1.bf16.msra.mxu0 0
      %622 = vmatprep.subr.bf16.mxu0 0
      %623 = vmatpush1.bf16.msra.mxu0 0
      %624 = vmatprep.subr.bf16.mxu0 0
      %625 = vmatpush1.bf16.msra.mxu0 0
      %626 = vmatprep.subr.bf16.mxu0 0
      %627 = vmatpush1.bf16.msra.mxu0 0
      %628 = vmatprep.subr.bf16.mxu0 0
      %629 = vmatpush1.bf16.msra.mxu0 0
      %630 = vmatprep.subr.bf16.mxu0 0
      %631 = vmatpush1.bf16.msra.mxu0 0
      %632 = vmatprep.subr.bf16.mxu0 0
      %633 = vmatpush1.bf16.msra.mxu0 0
      %634 = vmatprep.subr.bf16.mxu0 0
      %635 = vmatpush1.bf16.msra.mxu0 0
      %636 = vmatprep.subr.bf16.mxu0 0
      %637 = vmatpush1.bf16.msra.mxu0 0
      %638 = vmatprep.subr.bf16.mxu0 0
      %639 = vmatpush1.bf16.msra.mxu0 0
      %640 = vmatprep.subr.bf16.mxu0 0
      %641 = vmatpush1.bf16.msra.mxu0 0
      %642 = vmatprep.subr.bf16.mxu0 0
      %643 = vmatpush1.bf16.msra.mxu0 0
      %644 = vmatprep.subr.bf16.mxu0 0
      %645 = vmatpush1.bf16.msra.mxu0 0
      %646 = vmatprep.subr.bf16.mxu0 0
      %647 = vmatpush1.bf16.msra.mxu0 0
      %648 = vmatprep.mubr.bf16.mxu0 0
      %649 = vmatmul.mubr.bf16.gmra.mrb[0].mxu0 %v611
      %v650 = vpop.f32.mrb[0].mxu0
      %v651 = vadd.f32 0.0, %v650
      %v652 = vpop.f32.mrb[0].mxu0
      %v653 = vpop.f32.mrb[0].mxu0
      %v654 = vpop.f32.mrb[0].mxu0
      %655 = vdwg.mxu0
      %v656 = vadd.f32 %v606, %v651
      %v657 = vpack.c.bf16 %v241, %v241
      %v659 = vsel %vm268, %v657, 0
      %v662 = vsel %vm272, %v251, 0
      %664 = vmatprep.subr.bf16.mxu0 0
      %665 = vmatpush1.bf16.msra.mxu0 %v662
      %666 = vmatprep.subr.bf16.mxu0 0
      %667 = vmatpush1.bf16.msra.mxu0 0
      %668 = vmatprep.subr.bf16.mxu0 0
      %669 = vmatpush1.bf16.msra.mxu0 0
      %670 = vmatprep.subr.bf16.mxu0 0
      %671 = vmatpush1.bf16.msra.mxu0 0
      %672 = vmatprep.subr.bf16.mxu0 0
      %673 = vmatpush1.bf16.msra.mxu0 0
      %674 = vmatprep.subr.bf16.mxu0 0
      %675 = vmatpush1.bf16.msra.mxu0 0
      %676 = vmatprep.subr.bf16.mxu0 0
      %677 = vmatpush1.bf16.msra.mxu0 0
      %678 = vmatprep.subr.bf16.mxu0 0
      %679 = vmatpush1.bf16.msra.mxu0 0
      %680 = vmatprep.subr.bf16.mxu0 0
      %681 = vmatpush1.bf16.msra.mxu0 0
      %682 = vmatprep.subr.bf16.mxu0 0
      %683 = vmatpush1.bf16.msra.mxu0 0
      %684 = vmatprep.subr.bf16.mxu0 0
      %685 = vmatpush1.bf16.msra.mxu0 0
      %686 = vmatprep.subr.bf16.mxu0 0
      %687 = vmatpush1.bf16.msra.mxu0 0
      %688 = vmatprep.subr.bf16.mxu0 0
      %689 = vmatpush1.bf16.msra.mxu0 0
      %690 = vmatprep.subr.bf16.mxu0 0
      %691 = vmatpush1.bf16.msra.mxu0 0
      %692 = vmatprep.subr.bf16.mxu0 0
      %693 = vmatpush1.bf16.msra.mxu0 0
      %694 = vmatprep.subr.bf16.mxu0 0
      %695 = vmatpush1.bf16.msra.mxu0 0
      %696 = vmatprep.mubr.bf16.mxu0 0
      %697 = vmatmul.mubr.bf16.gmra.mrb[0].mxu0 %v659
      %v698 = vpop.f32.mrb[0].mxu0
      %v699 = vadd.f32 0.0, %v698
      %v700 = vpop.f32.mrb[0].mxu0
      %v701 = vpop.f32.mrb[0].mxu0
      %v702 = vpop.f32.mrb[0].mxu0
      %703 = vdwg.mxu0
      %v704 = vadd.f32 %v656, %v699
      %v705 = vpack.c.bf16 %v242, %v241
      %v707 = vshrl.u32 %v705, 16
      %v709 = vshll.u32 %v705, 16
      %v711 = vrot.slane %v709, 1
      %v712 = vor.u32 %v707, %v711
      %v714 = vsel %vm268, %v712, 0
      %v717 = vsel %vm272, %v252, 0
      %719 = vmatprep.subr.bf16.mxu0 0
      %720 = vmatpush1.bf16.msra.mxu0 %v717
      %721 = vmatprep.subr.bf16.mxu0 0
      %722 = vmatpush1.bf16.msra.mxu0 0
      %723 = vmatprep.subr.bf16.mxu0 0
      %724 = vmatpush1.bf16.msra.mxu0 0
      %725 = vmatprep.subr.bf16.mxu0 0
      %726 = vmatpush1.bf16.msra.mxu0 0
      %727 = vmatprep.subr.bf16.mxu0 0
      %728 = vmatpush1.bf16.msra.mxu0 0
      %729 = vmatprep.subr.bf16.mxu0 0
      %730 = vmatpush1.bf16.msra.mxu0 0
      %731 = vmatprep.subr.bf16.mxu0 0
      %732 = vmatpush1.bf16.msra.mxu0 0
      %733 = vmatprep.subr.bf16.mxu0 0
      %734 = vmatpush1.bf16.msra.mxu0 0
      %735 = vmatprep.subr.bf16.mxu0 0
      %736 = vmatpush1.bf16.msra.mxu0 0
      %737 = vmatprep.subr.bf16.mxu0 0
      %738 = vmatpush1.bf16.msra.mxu0 0
      %739 = vmatprep.subr.bf16.mxu0 0
      %740 = vmatpush1.bf16.msra.mxu0 0
      %741 = vmatprep.subr.bf16.mxu0 0
      %742 = vmatpush1.bf16.msra.mxu0 0
      %743 = vmatprep.subr.bf16.mxu0 0
      %744 = vmatpush1.bf16.msra.mxu0 0
      %745 = vmatprep.subr.bf16.mxu0 0
      %746 = vmatpush1.bf16.msra.mxu0 0
      %747 = vmatprep.subr.bf16.mxu0 0
      %748 = vmatpush1.bf16.msra.mxu0 0
      %749 = vmatprep.subr.bf16.mxu0 0
      %750 = vmatpush1.bf16.msra.mxu0 0
      %751 = vmatprep.mubr.bf16.mxu0 0
      %752 = vmatmul.mubr.bf16.gmra.mrb[0].mxu0 %v714
      %v753 = vpop.f32.mrb[0].mxu0
      %v754 = vadd.f32 0.0, %v753
      %v755 = vpop.f32.mrb[0].mxu0
      %v756 = vpop.f32.mrb[0].mxu0
      %v757 = vpop.f32.mrb[0].mxu0
      %758 = vdwg.mxu0
      %v759 = vadd.f32 %v704, %v754
      %v761 = vrot.slane %v705, 1
      %v763 = vsel %vm268, %v761, 0
      %v766 = vsel %vm272, %v253, 0
      %768 = vmatprep.subr.bf16.mxu0 0
      %769 = vmatpush1.bf16.msra.mxu0 %v766
      %770 = vmatprep.subr.bf16.mxu0 0
      %771 = vmatpush1.bf16.msra.mxu0 0
      %772 = vmatprep.subr.bf16.mxu0 0
      %773 = vmatpush1.bf16.msra.mxu0 0
      %774 = vmatprep.subr.bf16.mxu0 0
      %775 = vmatpush1.bf16.msra.mxu0 0
      %776 = vmatprep.subr.bf16.mxu0 0
      %777 = vmatpush1.bf16.msra.mxu0 0
      %778 = vmatprep.subr.bf16.mxu0 0
      %779 = vmatpush1.bf16.msra.mxu0 0
      %780 = vmatprep.subr.bf16.mxu0 0
      %781 = vmatpush1.bf16.msra.mxu0 0
      %782 = vmatprep.subr.bf16.mxu0 0
      %783 = vmatpush1.bf16.msra.mxu0 0
      %784 = vmatprep.subr.bf16.mxu0 0
      %785 = vmatpush1.bf16.msra.mxu0 0
      %786 = vmatprep.subr.bf16.mxu0 0
      %787 = vmatpush1.bf16.msra.mxu0 0
      %788 = vmatprep.subr.bf16.mxu0 0
      %789 = vmatpush1.bf16.msra.mxu0 0
      %790 = vmatprep.subr.bf16.mxu0 0
      %791 = vmatpush1.bf16.msra.mxu0 0
      %792 = vmatprep.subr.bf16.mxu0 0
      %793 = vmatpush1.bf16.msra.mxu0 0
      %794 = vmatprep.subr.bf16.mxu0 0
      %795 = vmatpush1.bf16.msra.mxu0 0
      %796 = vmatprep.subr.bf16.mxu0 0
      %797 = vmatpush1.bf16.msra.mxu0 0
      %798 = vmatprep.subr.bf16.mxu0 0
      %799 = vmatpush1.bf16.msra.mxu0 0
      %800 = vmatprep.mubr.bf16.mxu0 0
      %801 = vmatmul.mubr.bf16.gmra.mrb[0].mxu0 %v763
      %v802 = vpop.f32.mrb[0].mxu0
      %v803 = vadd.f32 0.0, %v802
      %v804 = vpop.f32.mrb[0].mxu0
      %v805 = vpop.f32.mrb[0].mxu0
      %v806 = vpop.f32.mrb[0].mxu0
      %807 = vdwg.mxu0
      %v808 = vadd.f32 %v759, %v803
      %v809 = vrot.slane %v707, 1
      %v810 = vrot.slane %v709, 2
      %v811 = vor.u32 %v809, %v810
      %v813 = vsel %vm268, %v811, 0
      %v816 = vsel %vm272, %v254, 0
      %818 = vmatprep.subr.bf16.mxu0 0
      %819 = vmatpush1.bf16.msra.mxu0 %v816
      %820 = vmatprep.subr.bf16.mxu0 0
      %821 = vmatpush1.bf16.msra.mxu0 0
      %822 = vmatprep.subr.bf16.mxu0 0
      %823 = vmatpush1.bf16.msra.mxu0 0
      %824 = vmatprep.subr.bf16.mxu0 0
      %825 = vmatpush1.bf16.msra.mxu0 0
      %826 = vmatprep.subr.bf16.mxu0 0
      %827 = vmatpush1.bf16.msra.mxu0 0
      %828 = vmatprep.subr.bf16.mxu0 0
      %829 = vmatpush1.bf16.msra.mxu0 0
      %830 = vmatprep.subr.bf16.mxu0 0
      %831 = vmatpush1.bf16.msra.mxu0 0
      %832 = vmatprep.subr.bf16.mxu0 0
      %833 = vmatpush1.bf16.msra.mxu0 0
      %834 = vmatprep.subr.bf16.mxu0 0
      %835 = vmatpush1.bf16.msra.mxu0 0
      %836 = vmatprep.subr.bf16.mxu0 0
      %837 = vmatpush1.bf16.msra.mxu0 0
      %838 = vmatprep.subr.bf16.mxu0 0
      %839 = vmatpush1.bf16.msra.mxu0 0
      %840 = vmatprep.subr.bf16.mxu0 0
      %841 = vmatpush1.bf16.msra.mxu0 0
      %842 = vmatprep.subr.bf16.mxu0 0
      %843 = vmatpush1.bf16.msra.mxu0 0
      %844 = vmatprep.subr.bf16.mxu0 0
      %845 = vmatpush1.bf16.msra.mxu0 0
      %846 = vmatprep.subr.bf16.mxu0 0
      %847 = vmatpush1.bf16.msra.mxu0 0
      %848 = vmatprep.subr.bf16.mxu0 0
      %849 = vmatpush1.bf16.msra.mxu0 0
      %850 = vmatprep.mubr.bf16.mxu0 0
      %851 = vmatmul.mubr.bf16.gmra.mrb[0].mxu0 %v813
      %v852 = vpop.f32.mrb[0].mxu0
      %v853 = vadd.f32 0.0, %v852
      %v854 = vpop.f32.mrb[0].mxu0
      %v855 = vpop.f32.mrb[0].mxu0
      %v856 = vpop.f32.mrb[0].mxu0
      %857 = vdwg.mxu0
      %v858 = vadd.f32 %v808, %v853
      %v859 = vrot.slane %v705, 2
      %v861 = vsel %vm268, %v859, 0
      %v864 = vsel %vm272, %v255, 0
      %866 = vmatprep.subr.bf16.mxu0 0
      %867 = vmatpush1.bf16.msra.mxu0 %v864
      %868 = vmatprep.subr.bf16.mxu0 0
      %869 = vmatpush1.bf16.msra.mxu0 0
      %870 = vmatprep.subr.bf16.mxu0 0
      %871 = vmatpush1.bf16.msra.mxu0 0
      %872 = vmatprep.subr.bf16.mxu0 0
      %873 = vmatpush1.bf16.msra.mxu0 0
      %874 = vmatprep.subr.bf16.mxu0 0
      %875 = vmatpush1.bf16.msra.mxu0 0
      %876 = vmatprep.subr.bf16.mxu0 0
      %877 = vmatpush1.bf16.msra.mxu0 0
      %878 = vmatprep.subr.bf16.mxu0 0
      %879 = vmatpush1.bf16.msra.mxu0 0
      %880 = vmatprep.subr.bf16.mxu0 0
      %881 = vmatpush1.bf16.msra.mxu0 0
      %882 = vmatprep.subr.bf16.mxu0 0
      %883 = vmatpush1.bf16.msra.mxu0 0
      %884 = vmatprep.subr.bf16.mxu0 0
      %885 = vmatpush1.bf16.msra.mxu0 0
      %886 = vmatprep.subr.bf16.mxu0 0
      %887 = vmatpush1.bf16.msra.mxu0 0
      %888 = vmatprep.subr.bf16.mxu0 0
      %889 = vmatpush1.bf16.msra.mxu0 0
      %890 = vmatprep.subr.bf16.mxu0 0
      %891 = vmatpush1.bf16.msra.mxu0 0
      %892 = vmatprep.subr.bf16.mxu0 0
      %893 = vmatpush1.bf16.msra.mxu0 0
      %894 = vmatprep.subr.bf16.mxu0 0
      %895 = vmatpush1.bf16.msra.mxu0 0
      %896 = vmatprep.subr.bf16.mxu0 0
      %897 = vmatpush1.bf16.msra.mxu0 0
      %898 = vmatprep.mubr.bf16.mxu0 0
      %899 = vmatmul.mubr.bf16.gmra.mrb[0].mxu0 %v861
      %v900 = vpop.f32.mrb[0].mxu0
      %v901 = vadd.f32 0.0, %v900
      %v902 = vpop.f32.mrb[0].mxu0
      %v903 = vpop.f32.mrb[0].mxu0
      %v904 = vpop.f32.mrb[0].mxu0
      %905 = vdwg.mxu0
      %v906 = vadd.f32 %v858, %v901
      %v907 = vrot.slane %v707, 2
      %v908 = vrot.slane %v709, 3
      %v909 = vor.u32 %v907, %v908
      %v911 = vsel %vm268, %v909, 0
      %v914 = vsel %vm272, %v256, 0
      %916 = vmatprep.subr.bf16.mxu0 0
      %917 = vmatpush1.bf16.msra.mxu0 %v914
      %918 = vmatprep.subr.bf16.mxu0 0
      %919 = vmatpush1.bf16.msra.mxu0 0
      %920 = vmatprep.subr.bf16.mxu0 0
      %921 = vmatpush1.bf16.msra.mxu0 0
      %922 = vmatprep.subr.bf16.mxu0 0
      %923 = vmatpush1.bf16.msra.mxu0 0
      %924 = vmatprep.subr.bf16.mxu0 0
      %925 = vmatpush1.bf16.msra.mxu0 0
      %926 = vmatprep.subr.bf16.mxu0 0
      %927 = vmatpush1.bf16.msra.mxu0 0
      %928 = vmatprep.subr.bf16.mxu0 0
      %929 = vmatpush1.bf16.msra.mxu0 0
      %930 = vmatprep.subr.bf16.mxu0 0
      %931 = vmatpush1.bf16.msra.mxu0 0
      %932 = vmatprep.subr.bf16.mxu0 0
      %933 = vmatpush1.bf16.msra.mxu0 0
      %934 = vmatprep.subr.bf16.mxu0 0
      %935 = vmatpush1.bf16.msra.mxu0 0
      %936 = vmatprep.subr.bf16.mxu0 0
      %937 = vmatpush1.bf16.msra.mxu0 0
      %938 = vmatprep.subr.bf16.mxu0 0
      %939 = vmatpush1.bf16.msra.mxu0 0
      %940 = vmatprep.subr.bf16.mxu0 0
      %941 = vmatpush1.bf16.msra.mxu0 0
      %942 = vmatprep.subr.bf16.mxu0 0
      %943 = vmatpush1.bf16.msra.mxu0 0
      %944 = vmatprep.subr.bf16.mxu0 0
      %945 = vmatpush1.bf16.msra.mxu0 0
      %946 = vmatprep.subr.bf16.mxu0 0
      %947 = vmatpush1.bf16.msra.mxu0 0
      %948 = vmatprep.mubr.bf16.mxu0 0
      %949 = vmatmul.mubr.bf16.gmra.mrb[0].mxu0 %v911
      %v950 = vpop.f32.mrb[0].mxu0
      %v951 = vadd.f32 0.0, %v950
      %v952 = vpop.f32.mrb[0].mxu0
      %v953 = vpop.f32.mrb[0].mxu0
      %v954 = vpop.f32.mrb[0].mxu0
      %955 = vdwg.mxu0
      %v956 = vadd.f32 %v906, %v951
      %v957 = vrot.slane %v705, 3
      %v959 = vsel %vm268, %v957, 0
      %v962 = vsel %vm272, %v257, 0
      %964 = vmatprep.subr.bf16.mxu0 0
      %965 = vmatpush1.bf16.msra.mxu0 %v962
      %966 = vmatprep.subr.bf16.mxu0 0
      %967 = vmatpush1.bf16.msra.mxu0 0
      %968 = vmatprep.subr.bf16.mxu0 0
      %969 = vmatpush1.bf16.msra.mxu0 0
      %970 = vmatprep.subr.bf16.mxu0 0
      %971 = vmatpush1.bf16.msra.mxu0 0
      %972 = vmatprep.subr.bf16.mxu0 0
      %973 = vmatpush1.bf16.msra.mxu0 0
      %974 = vmatprep.subr.bf16.mxu0 0
      %975 = vmatpush1.bf16.msra.mxu0 0
      %976 = vmatprep.subr.bf16.mxu0 0
      %977 = vmatpush1.bf16.msra.mxu0 0
      %978 = vmatprep.subr.bf16.mxu0 0
      %979 = vmatpush1.bf16.msra.mxu0 0
      %980 = vmatprep.subr.bf16.mxu0 0
      %981 = vmatpush1.bf16.msra.mxu0 0
      %982 = vmatprep.subr.bf16.mxu0 0
      %983 = vmatpush1.bf16.msra.mxu0 0
      %984 = vmatprep.subr.bf16.mxu0 0
      %985 = vmatpush1.bf16.msra.mxu0 0
      %986 = vmatprep.subr.bf16.mxu0 0
      %987 = vmatpush1.bf16.msra.mxu0 0
      %988 = vmatprep.subr.bf16.mxu0 0
      %989 = vmatpush1.bf16.msra.mxu0 0
      %990 = vmatprep.subr.bf16.mxu0 0
      %991 = vmatpush1.bf16.msra.mxu0 0
      %992 = vmatprep.subr.bf16.mxu0 0
      %993 = vmatpush1.bf16.msra.mxu0 0
      %994 = vmatprep.subr.bf16.mxu0 0
      %995 = vmatpush1.bf16.msra.mxu0 0
      %996 = vmatprep.mubr.bf16.mxu0 0
      %997 = vmatmul.mubr.bf16.gmra.mrb[0].mxu0 %v959
      %v998 = vpop.f32.mrb[0].mxu0
      %v999 = vadd.f32 0.0, %v998
      %v1000 = vpop.f32.mrb[0].mxu0
      %v1001 = vpop.f32.mrb[0].mxu0
      %v1002 = vpop.f32.mrb[0].mxu0
      %1003 = vdwg.mxu0
      %v1004 = vadd.f32 %v956, %v999
      %v1005 = vrot.slane %v707, 3
      %v1006 = vrot.slane %v709, 4
      %v1007 = vor.u32 %v1005, %v1006
      %v1009 = vsel %vm268, %v1007, 0
      %v1012 = vsel %vm272, %v258, 0
      %1014 = vmatprep.subr.bf16.mxu0 0
      %1015 = vmatpush1.bf16.msra.mxu0 %v1012
      %1016 = vmatprep.subr.bf16.mxu0 0
      %1017 = vmatpush1.bf16.msra.mxu0 0
      %1018 = vmatprep.subr.bf16.mxu0 0
      %1019 = vmatpush1.bf16.msra.mxu0 0
      %1020 = vmatprep.subr.bf16.mxu0 0
      %1021 = vmatpush1.bf16.msra.mxu0 0
      %1022 = vmatprep.subr.bf16.mxu0 0
      %1023 = vmatpush1.bf16.msra.mxu0 0
      %1024 = vmatprep.subr.bf16.mxu0 0
      %1025 = vmatpush1.bf16.msra.mxu0 0
      %1026 = vmatprep.subr.bf16.mxu0 0
      %1027 = vmatpush1.bf16.msra.mxu0 0
      %1028 = vmatprep.subr.bf16.mxu0 0
      %1029 = vmatpush1.bf16.msra.mxu0 0
      %1030 = vmatprep.subr.bf16.mxu0 0
      %1031 = vmatpush1.bf16.msra.mxu0 0
      %1032 = vmatprep.subr.bf16.mxu0 0
      %1033 = vmatpush1.bf16.msra.mxu0 0
      %1034 = vmatprep.subr.bf16.mxu0 0
      %1035 = vmatpush1.bf16.msra.mxu0 0
      %1036 = vmatprep.subr.bf16.mxu0 0
      %1037 = vmatpush1.bf16.msra.mxu0 0
      %1038 = vmatprep.subr.bf16.mxu0 0
      %1039 = vmatpush1.bf16.msra.mxu0 0
      %1040 = vmatprep.subr.bf16.mxu0 0
      %1041 = vmatpush1.bf16.msra.mxu0 0
      %1042 = vmatprep.subr.bf16.mxu0 0
      %1043 = vmatpush1.bf16.msra.mxu0 0
      %1044 = vmatprep.subr.bf16.mxu0 0
      %1045 = vmatpush1.bf16.msra.mxu0 0
      %1046 = vmatprep.mubr.bf16.mxu0 0
      %1047 = vmatmul.mubr.bf16.gmra.mrb[0].mxu0 %v1009
      %v1048 = vpop.f32.mrb[0].mxu0
      %v1049 = vadd.f32 0.0, %v1048
      %v1050 = vpop.f32.mrb[0].mxu0
      %v1051 = vpop.f32.mrb[0].mxu0
      %v1052 = vpop.f32.mrb[0].mxu0
      %1053 = vdwg.mxu0
      %v1054 = vadd.f32 %v1004, %v1049
      %v1055 = vld [vmem:[%s230] sm:$0x1]
      %v1057 = vlaneseq
      %v1058 = vshrl.u32 %v1057, 7
      %v1059 = vsub.s32 0, %v1058
      %v1060 = vrot.slane %v1055, %v1059
      %v1062 = vadd.f32 %v1054, %v1060
      %v1063 = vmul.f32 %v1062, 0.5
      %v1064 = vmul.f32 %v1062, 0.70710677
      %v1065 = verf.f32.pop %v1064
      %v1066 = vadd.f32 %v1065, 1.0
      %v1067 = vmul.f32 %v1063, %v1066
      %1068 = vst.msk [vmem:[%s238] sm:$0xff] %vm268, %v1067
      %p1069 = scmp.lt.s32.totalorder %s18, 1
      %s1070 = scalar_select %p1069, %s18, 1
      %p1071 = scmp.lt.s32.totalorder %s19, 3
      %s1072 = scalar_select %p1071, %s19, 3
      %s1073 = smul.addr %s1070, 4
      %s1074 = sadd.s32 %s1072, %s1073
      %s1075 = smul.addr %s1074, 8
      %s1076 = scalar_lea.vmem %s3, %s1075
      // Predicated region
      $region33: #{wavlm_wrapper_forward.14} parent=31 // pred_check
        %p1077 = pneg %p126
      $region34: #{wavlm_wrapper_forward.14} parent=31 // pred_check_branch
        %1079 = sbr.rel (%p1077) target = $region36
      $region35: #{wavlm_wrapper_forward.14} parent=31 // pred_region
        _
      $region36: #{wavlm_wrapper_forward.14} parent=31 // pred_fallthru
        _
    $region32: #{wavlm_wrapper_forward.14} parent=5 // pred_fallthru
      _
    %p1080 = scmp.le.s32.totalorder 2, %s9
    // Predicated region
    $region37: #{wavlm_wrapper_forward.14} parent=5 // pred_check
      %p1081 = pneg %p1080
    $region38: #{wavlm_wrapper_forward.14} parent=5 // pred_check_branch
      %1083 = sbr.rel (%p1081) target = $region40
    $region39: #{wavlm_wrapper_forward.14} parent=5 // pred_region
      %s1084 = ssub.s32 %s9, 2
      // Predicated region
      $region41: #{wavlm_wrapper_forward.14} parent=39 // pred_check
        %p1085 = pneg %p132
      $region42: #{wavlm_wrapper_forward.14} parent=39 // pred_check_branch
        %1087 = sbr.rel (%p1085) target = $region44
      $region43: #{wavlm_wrapper_forward.14} parent=39 // pred_region
        %p1088 = scmp.lt.s32.totalorder %s20, 1
        %s1089 = scalar_select %p1088, %s20, 1
        %p1090 = scmp.lt.s32.totalorder %s21, 3
        %s1091 = scalar_select %p1090, %s21, 3
        %s1092 = smul.addr %s1089, 4
        %s1093 = sadd.s32 %s1091, %s1092
        %s1094 = smul.addr %s1093, 8
        %s1095 = scalar_lea.vmem %s3, %s1094
      $region44: #{wavlm_wrapper_forward.14} parent=39 // pred_fallthru
        _
    $region40: #{wavlm_wrapper_forward.14} parent=5 // pred_fallthru
      _
  $region6: #{wavlm_wrapper_forward.14} parent=0 // loop_footer
    %s13 = sadd.s32 1, %s9
  $region7: #{wavlm_wrapper_forward.14} parent=0 // loop_footer_branch
    %8 = sbr.rel target = $region3
  $region8: #{wavlm_wrapper_forward.14} parent=0 // loop_exit
    _

// kernel: wavlm_wrapper_forward.18
$region0: #{wavlm_wrapper_forward.18}
  #allocation0 [shape = 'u32[]', space=smem, size = 0x4, offset = 0x4, fixed_abs, tag = 'smem constant byte address 0x4 - core index']
  #allocation1 [shape = 'u32[144,128]{1,0:T(1,128)}', space=vmem, size = 0x12000, scoped, tag = 'internal scratch']
  #allocation2 [shape = 'f32[16,32]{1,0:T(8,128)}', space=vmem, size = 0x2000, scoped, tag = 'scratch operand']
  %s0 = inlined_call_operand.vmem [shape: f32[16,32], index: 0, kind: input, shape index: {}]
  %s1 = inlined_call_operand.vmem [shape: bf16[32,32], index: 1, kind: input, shape index: {}]
  %s2 = inlined_call_operand.vmem [shape: f32[1,32], index: 2, kind: input, shape index: {}]
  %s3 = inlined_call_operand.vmem [shape: f32[16,32], index: 3, kind: output, shape index: {}]
  %s4 = sld [smem:[#allocation0]]
  $region30: #{wavlm_wrapper_forward.18} parent=0
    _
  %s6 = ssub.s32 1, %s4
  %s7 = scalar_select 0, %s6, %s4
  // Predicated region
  $region2: #{wavlm_wrapper_forward.18} parent=0 // pred_check
    _
  $region3: #{wavlm_wrapper_forward.18} parent=0 // pred_check_branch
    %9 = sbr.rel (0) target = $region5
  $region4: #{wavlm_wrapper_forward.18} parent=0 // pred_region
    _
  $region5: #{wavlm_wrapper_forward.18} parent=0 // pred_fallthru
    _
  // Predicated region
  $region6: #{wavlm_wrapper_forward.18} parent=0 // pred_check
    _
  $region7: #{wavlm_wrapper_forward.18} parent=0 // pred_check_branch
    %11 = sbr.rel (0) target = $region9
  $region8: #{wavlm_wrapper_forward.18} parent=0 // pred_region
    _
  $region9: #{wavlm_wrapper_forward.18} parent=0 // pred_fallthru
    _
  // Predicated region
  $region10: #{wavlm_wrapper_forward.18} parent=0 // pred_check
    _
  $region11: #{wavlm_wrapper_forward.18} parent=0 // pred_check_branch
    %13 = sbr.rel (0) target = $region13
  $region12: #{wavlm_wrapper_forward.18} parent=0 // pred_region
    _
  $region13: #{wavlm_wrapper_forward.18} parent=0 // pred_fallthru
    _
  %p15 = scmp.eq.s32.totalorder 0, 0
  // Predicated region
  $region14: #{wavlm_wrapper_forward.18} parent=0 // pred_check
    %p16 = pneg %p15
  $region15: #{wavlm_wrapper_forward.18} parent=0 // pred_check_branch
    %18 = sbr.rel (%p16) target = $region17
  $region16: #{wavlm_wrapper_forward.18} parent=0 // pred_region
    %vm19 = vcmask 261120
    %20 = vst.msk [vmem:[#allocation2] sm:$0xff] %vm19, 0.0
    %21 = vst.msk [vmem:[#allocation2 + $0x8] sm:$0xff] %vm19, 0.0
  $region17: #{wavlm_wrapper_forward.18} parent=0 // pred_fallthru
    _
  %v22 = vld [vmem:[%s0] sm:$0xff]
  %v23 = vld [vmem:[%s0 + $0x8] sm:$0xff]
  %v24 = vpack.c.bf16 %v23, %v22
  %v25 = vld [vmem:[%s1] sm:$0xf]
  %v26 = vld [vmem:[%s1 + $0x4] sm:$0xf]
  %v27 = vld [vmem:[%s1 + $0x8] sm:$0xf]
  %v28 = vld [vmem:[%s1 + $0xc] sm:$0xf]
  %v29 = vld [vmem:[#allocation2] sm:$0xff]
  %v30 = vld [vmem:[#allocation2 + $0x8] sm:$0xff]
  %v35 = vunpack.c.l.b16 %v25
  %v36 = vunpack.c.l.b16 %v26
  %v37 = vunpack.c.l.b16 %v27
  %v38 = vunpack.c.l.b16 %v28
  %v39 = vpack.c.b16 %v36, %v35
  %v40 = vpack.c.b16 %v38, %v37
  %vm43 = vcmask 261120
  %v45 = vsel %vm43, %v24, 0
  %47 = vmatprep.subr.bf16.mxu0 0
  %48 = vmatpush1.bf16.msra.mxu0 %v39
  %49 = vmatprep.subr.bf16.mxu0 0
  %50 = vmatpush1.bf16.msra.mxu0 %v40
  %51 = vmatprep.subr.bf16.mxu0 0
  %52 = vmatpush1.bf16.msra.mxu0 0
  %53 = vmatprep.subr.bf16.mxu0 0
  %54 = vmatpush1.bf16.msra.mxu0 0
  %55 = vmatprep.subr.bf16.mxu0 0
  %56 = vmatpush1.bf16.msra.mxu0 0
  %57 = vmatprep.subr.bf16.mxu0 0
  %58 = vmatpush1.bf16.msra.mxu0 0
  %59 = vmatprep.subr.bf16.mxu0 0
  %60 = vmatpush1.bf16.msra.mxu0 0
  %61 = vmatprep.subr.bf16.mxu0 0
  %62 = vmatpush1.bf16.msra.mxu0 0
  %63 = vmatprep.subr.bf16.mxu0 0
  %64 = vmatpush1.bf16.msra.mxu0 0
  %65 = vmatprep.subr.bf16.mxu0 0
  %66 = vmatpush1.bf16.msra.mxu0 0
  %67 = vmatprep.subr.bf16.mxu0 0
  %68 = vmatpush1.bf16.msra.mxu0 0
  %69 = vmatprep.subr.bf16.mxu0 0
  %70 = vmatpush1.bf16.msra.mxu0 0
  %71 = vmatprep.subr.bf16.mxu0 0
  %72 = vmatpush1.bf16.msra.mxu0 0
  %73 = vmatprep.subr.bf16.mxu0 0
  %74 = vmatpush1.bf16.msra.mxu0 0
  %75 = vmatprep.subr.bf16.mxu0 0
  %76 = vmatpush1.bf16.msra.mxu0 0
  %77 = vmatprep.subr.bf16.mxu0 0
  %78 = vmatpush1.bf16.msra.mxu0 0
  %79 = vmatprep.mubr.bf16.mxu0 0
  %80 = vmatmul.mubr.bf16.gmra.mrb[0].mxu0 %v45
  %v81 = vpop.f32.mrb[0].mxu0
  %v82 = vadd.f32 0.0, %v81
  %v83 = vpop.f32.mrb[0].mxu0
  %v84 = vpop.f32.mrb[0].mxu0
  %v85 = vadd.f32 0.0, %v84
  %v86 = vpop.f32.mrb[0].mxu0
  %87 = vdwg.mxu0
  %v88 = vadd.f32 %v29, %v82
  %v89 = vadd.f32 %v30, %v85
  %90 = vst.msk [vmem:[#allocation2] sm:$0xff] %vm43, %v88
  %91 = vst.msk [vmem:[#allocation2 + $0x8] sm:$0xff] %vm43, %v89
  // Predicated region
  $region18: #{wavlm_wrapper_forward.18} parent=0 // pred_check
    %p92 = pneg %p15
  $region19: #{wavlm_wrapper_forward.18} parent=0 // pred_check_branch
    %94 = sbr.rel (%p92) target = $region21
  $region20: #{wavlm_wrapper_forward.18} parent=0 // pred_region
    %v95 = vld [vmem:[#allocation2] sm:$0xff]
    %v96 = vld [vmem:[#allocation2 + $0x8] sm:$0xff]
    %v97 = vld [vmem:[%s2] sm:$0x1]
    %v99 = vlaneseq
    %v100 = vshrl.u32 %v99, 7
    %v101 = vsub.s32 0, %v100
    %v102 = vrot.slane %v97, %v101
    %v104 = vadd.f32 %v95, %v102
    %v105 = vadd.f32 %v96, %v102
    %106 = vst.msk [vmem:[%s3] sm:$0xff] %vm43, %v104
    %107 = vst.msk [vmem:[%s3 + $0x8] sm:$0xff] %vm43, %v105
  $region21: #{wavlm_wrapper_forward.18} parent=0 // pred_fallthru
    _
  // Predicated region
  $region22: #{wavlm_wrapper_forward.18} parent=0 // pred_check
    _
  $region23: #{wavlm_wrapper_forward.18} parent=0 // pred_check_branch
    %109 = sbr.rel (0) target = $region25
  $region24: #{wavlm_wrapper_forward.18} parent=0 // pred_region
    _
  $region25: #{wavlm_wrapper_forward.18} parent=0 // pred_fallthru
    _
  // Predicated region
  $region26: #{wavlm_wrapper_forward.18} parent=0 // pred_check
    _
  $region27: #{wavlm_wrapper_forward.18} parent=0 // pred_check_branch
    %111 = sbr.rel (0) target = $region29
  $region28: #{wavlm_wrapper_forward.18} parent=0 // pred_region
    _
  $region29: #{wavlm_wrapper_forward.18} parent=0 // pred_fallthru
    _

// kernel: wavlm_wrapper_forward.27
$region0: #{wavlm_wrapper_forward.27}
  #allocation0 [shape = 'u32[]', space=smem, size = 0x4, offset = 0x4, fixed_abs, tag = 'smem constant byte address 0x4 - core index']
  #allocation1 [shape = 'u32[144,128]{1,0:T(1,128)}', space=vmem, size = 0x12000, scoped, tag = 'internal scratch']
  %s0 = inlined_call_operand.vmem [shape: f32[16,32], index: 0, kind: input, shape index: {}]
  %s1 = inlined_call_operand.vmem [shape: f32[16,32], index: 1, kind: input, shape index: {}]
  %s2 = inlined_call_operand.vmem [shape: f32[1,32], index: 2, kind: input, shape index: {}]
  %s3 = inlined_call_operand.vmem [shape: f32[1,32], index: 3, kind: input, shape index: {}]
  %s4 = inlined_call_operand.hbm [shape: f32[16,32], index: 4, kind: output, shape index: {}]
  %s5 = sld [smem:[#allocation0]]
  $region26: #{wavlm_wrapper_forward.27} parent=0
    _
  %s7 = ssub.s32 1, %s5
  %s8 = scalar_select 0, %s7, %s5
  $region1: #{wavlm_wrapper_forward.27} parent=0
    #allocation2 [shape = 'u8[8192]{0}', space=vmem, size = 0x2000, scoped, tag = 'output window, operand 0, single buffered']
    #allocation3 [shape = 's32[1]{0}', space=sflag, size = 0x4, scoped, tag = 'scoped memory for wavlm_wrapper_forward.27']
    %9 = vsyncpa [#allocation3], 0
    // Predicated region
    $region2: #{wavlm_wrapper_forward.27} parent=1 // pred_check
      _
    $region3: #{wavlm_wrapper_forward.27} parent=1 // pred_check_branch
      %11 = sbr.rel (0) target = $region5
    $region4: #{wavlm_wrapper_forward.27} parent=1 // pred_region
      _
    $region5: #{wavlm_wrapper_forward.27} parent=1 // pred_fallthru
      _
    // Predicated region
    $region6: #{wavlm_wrapper_forward.27} parent=1 // pred_check
      _
    $region7: #{wavlm_wrapper_forward.27} parent=1 // pred_check_branch
      %13 = sbr.rel (0) target = $region9
    $region8: #{wavlm_wrapper_forward.27} parent=1 // pred_region
      _
    $region9: #{wavlm_wrapper_forward.27} parent=1 // pred_fallthru
      _
    // Predicated region
    $region10: #{wavlm_wrapper_forward.27} parent=1 // pred_check
      _
    $region11: #{wavlm_wrapper_forward.27} parent=1 // pred_check_branch
      %15 = sbr.rel (0) target = $region13
    $region12: #{wavlm_wrapper_forward.27} parent=1 // pred_region
      _
    $region13: #{wavlm_wrapper_forward.27} parent=1 // pred_fallthru
      _
    // Predicated region
    $region14: #{wavlm_wrapper_forward.27} parent=1 // pred_check
      _
    $region15: #{wavlm_wrapper_forward.27} parent=1 // pred_check_branch
      %17 = sbr.rel (0) target = $region17
    $region16: #{wavlm_wrapper_forward.27} parent=1 // pred_region
      _
    $region17: #{wavlm_wrapper_forward.27} parent=1 // pred_fallthru
      _
    %v18 = vld [vmem:[%s0] sm:$0xff]
    %v19 = vld [vmem:[%s0 + $0x8] sm:$0xff]
    %v20 = vld [vmem:[%s1] sm:$0xff]
    %v21 = vld [vmem:[%s1 + $0x8] sm:$0xff]
    %v22 = vadd.f32 %v18, %v20
    %v23 = vadd.f32 %v19, %v21
    %vm24 = vcmask 261120
    %v25 = vsel %vm24, %v22, 0.0
    %26 = vadd.xlane.f32.xlu0 %v25
    %v27 = vpop.xlane.xlu0 %26
    %v28 = vsel %vm24, %v23, 0.0
    %29 = vadd.xlane.f32.xlu0 %v28
    %v30 = vpop.xlane.xlu0 %29
    %v31 = vrcp.pop 32.0
    %v32 = vmul.f32 %v27, %v31
    %v33 = vmul.f32 %v30, %v31
    %v34 = vsub.f32 %v22, %v32
    %v35 = vsub.f32 %v23, %v33
    %v36 = vmul.f32 %v34, %v34
    %v37 = vmul.f32 %v35, %v35
    %v38 = vsel %vm24, %v36, 0.0
    %39 = vadd.xlane.f32.xlu0 %v38
    %v40 = vpop.xlane.xlu0 %39
    %v41 = vsel %vm24, %v37, 0.0
    %42 = vadd.xlane.f32.xlu0 %v41
    %v43 = vpop.xlane.xlu0 %42
    %v44 = vmul.f32 %v40, %v31
    %v45 = vmul.f32 %v43, %v31
    %v46 = vadd.f32 %v44, 1e-05
    %v47 = vadd.f32 %v45, 1e-05
    %v48 = vrsqrt.pop %v46
    %v49 = vrsqrt.pop %v47
    %v50 = vmul.f32 %v34, %v48
    %v51 = vmul.f32 %v35, %v49
    %v52 = vld [vmem:[%s2] sm:$0x1]
    %v54 = vlaneseq
    %v55 = vshrl.u32 %v54, 7
    %v56 = vsub.s32 0, %v55
    %v57 = vrot.slane %v52, %v56
    %v59 = vmul.f32 %v50, %v57
    %v60 = vmul.f32 %v51, %v57
    %v61 = vld [vmem:[%s3] sm:$0x1]
    %v63 = vlaneseq
    %v64 = vshrl.u32 %v63, 7
    %v65 = vsub.s32 0, %v64
    %v66 = vrot.slane %v61, %v65
    %v68 = vadd.f32 %v59, %v66
    %v69 = vadd.f32 %v60, %v66
    %v70 = vmax.f32 %v68, 0.0
    %v71 = vmax.f32 %v69, 0.0
    %72 = vst.msk [vmem:[#allocation2] sm:$0xff] %vm24, %v70
    %73 = vst.msk [vmem:[#allocation2 + $0x8] sm:$0xff] %vm24, %v71
    // Predicated region
    $region18: #{wavlm_wrapper_forward.27} parent=1 // pred_check
      _
    $region19: #{wavlm_wrapper_forward.27} parent=1 // pred_check_branch
      %75 = sbr.rel (0) target = $region21
    $region20: #{wavlm_wrapper_forward.27} parent=1 // pred_region
      %s77 = ssub.s32 256, 256
      %78 = vsyncadd [#allocation3], %s77
      %s79 = sshll.u32 [#allocation2], 4
      %s80 = int_to_ptr.vmem [resolvable:$true] %s79
      %85 = dma.vmem_to_hbm [thread:$0]  %s80, 256, %s4, [#allocation3], 128, 128, 8
    $region21: #{wavlm_wrapper_forward.27} parent=1 // pred_fallthru
      _
    // Predicated region
    $region22: #{wavlm_wrapper_forward.27} parent=1 // pred_check
      _
    $region23: #{wavlm_wrapper_forward.27} parent=1 // pred_check_branch
      %87 = sbr.rel (0) target = $region25
    $region24: #{wavlm_wrapper_forward.27} parent=1 // pred_region
      %88 = dma.done [#allocation3], 256
    $region25: #{wavlm_wrapper_forward.27} parent=1 // pred_fallthru
      _
    %89 = vsyncpa [#allocation3], 1

// kernel: wavlm_wrapper_forward.17
$region0: #{wavlm_wrapper_forward.17}
  #allocation0 [shape = 'u32[]', space=smem, size = 0x4, offset = 0x4, fixed_abs, tag = 'smem constant byte address 0x4 - core index']
  #allocation1 [shape = 'u32[144,128]{1,0:T(1,128)}', space=vmem, size = 0x12000, scoped, tag = 'internal scratch']
  %s0 = inlined_call_operand.vmem [shape: f32[2,4,8,8], index: 0, kind: input, shape index: {}]
  %s1 = inlined_call_operand.vmem [shape: f32[2,4,8,8], index: 1, kind: input, shape index: {}]
  %s2 = inlined_call_operand.vmem [shape: f32[2,4,8,8], index: 2, kind: input, shape index: {}]
  %s3 = inlined_call_operand.vmem [shape: f32[4,8,8], index: 3, kind: input, shape index: {}]
  %s4 = inlined_call_operand.vmem [shape: f32[2,4,8,1], index: 4, kind: input, shape index: {}]
  %s5 = inlined_call_operand.vmem [shape: f32[2,1,1,8], index: 5, kind: input, shape index: {}]
  %s6 = inlined_call_operand.vmem [shape: f32[2,4,8,8], index: 6, kind: output, shape index: {}]
  %s7 = sld [smem:[#allocation0]]
  $region57: #{wavlm_wrapper_forward.17} parent=0
    _
  %s9 = ssub.s32 1, %s7
  %s10 = scalar_select 0, %s9, %s7
  loop: start=0, step=1, limit=4
  $region2: #{wavlm_wrapper_forward.17} parent=0 // loop_pre_header
    _
  $region3: #{wavlm_wrapper_forward.17} parent=0 // loop_header
    %s12 = sphi 0, %s16
    %p13 = scmp.ge.s32.totalorder %s12, 4
    %s22 = sphi 0, %s24
    %s25 = sphi 0, %s22
    %s26 = sphi 0, %s25
    %s42 = sphi 0, %s26
    %s48 = sphi 0, %s50
    %s51 = sphi 0, %s48
    %s52 = sphi 0, %s51
    %s68 = sphi 0, %s52
    %s74 = sphi 0, %s76
    %s77 = sphi 0, %s74
    %s78 = sphi 0, %s77
    %s94 = sphi 0, %s78
    %s98 = sphi 0, %s98
    %s100 = sphi 0, %s98
    %s101 = sphi 0, %s100
    %s115 = sphi 0, %s101
    %s121 = sphi 0, %s123
    %s124 = sphi 0, %s121
    %s125 = sphi 0, %s124
    %s141 = sphi 0, %s125
    %s147 = sphi 0, %s149
    %s150 = sphi 0, %s147
    %s151 = sphi 0, %s150
    %s167 = sphi 0, %s151
    %s173 = sphi 0, %s175
    %s176 = sphi 0, %s173
    %s177 = sphi 0, %s176
    %s193 = sphi 0, %s177
  $region4: #{wavlm_wrapper_forward.17} parent=0 // loop_header_branch
    %15 = sbr.rel (%p13) target = $region8
  $region5: #{wavlm_wrapper_forward.17} parent=0 // loop_body
    %s17 = ssub.s32 %s12, 1
    %s18 = ssub.s32 %s12, 2
    %s19 = sadd.s32 %s12, 1
    %s20 = ssub.s32 %s12, %s19
    %p21 = scmp.eq.s32.totalorder %s20, 0
    %s23 = sadd.s32 %s22, 1
    %s24 = scalar_select %p21, %s22, %s23
    %p27 = pneg %p21
    %p28 = scmp.eq.s32.totalorder %s12, 1
    %p29 = por %p27, %p28
    %p30 = scmp.ne.s32.totalorder %s22, %s25
    %p31 = scmp.eq.s32.totalorder %s12, 0
    %p32 = por %p30, %p31
    %p33 = scmp.ne.s32.totalorder %s22, %s25
    %p34 = scmp.eq.s32.totalorder %s17, 1
    %p35 = por %p33, %p34
    %p36 = scmp.ne.s32.totalorder %s25, %s26
    %p37 = scmp.eq.s32.totalorder %s17, 0
    %p38 = por %p36, %p37
    %p39 = scmp.ne.s32.totalorder %s25, %s26
    %p40 = scmp.eq.s32.totalorder %s18, 1
    %p41 = por %p39, %p40
    %p43 = scmp.ne.s32.totalorder %s26, %s42
    %p44 = scmp.eq.s32.totalorder %s18, 0
    %p45 = por %p43, %p44
    %s46 = ssub.s32 %s12, %s19
    %p47 = scmp.eq.s32.totalorder %s46, 0
    %s49 = sadd.s32 %s48, 1
    %s50 = scalar_select %p47, %s48, %s49
    %p53 = pneg %p47
    %p54 = scmp.eq.s32.totalorder %s12, 1
    %p55 = por %p53, %p54
    %p56 = scmp.ne.s32.totalorder %s48, %s51
    %p57 = scmp.eq.s32.totalorder %s12, 0
    %p58 = por %p56, %p57
    %p59 = scmp.ne.s32.totalorder %s48, %s51
    %p60 = scmp.eq.s32.totalorder %s17, 1
    %p61 = por %p59, %p60
    %p62 = scmp.ne.s32.totalorder %s51, %s52
    %p63 = scmp.eq.s32.totalorder %s17, 0
    %p64 = por %p62, %p63
    %p65 = scmp.ne.s32.totalorder %s51, %s52
    %p66 = scmp.eq.s32.totalorder %s18, 1
    %p67 = por %p65, %p66
    %p69 = scmp.ne.s32.totalorder %s52, %s68
    %p70 = scmp.eq.s32.totalorder %s18, 0
    %p71 = por %p69, %p70
    %s72 = ssub.s32 %s12, %s19
    %p73 = scmp.eq.s32.totalorder %s72, 0
    %s75 = sadd.s32 %s74, 1
    %s76 = scalar_select %p73, %s74, %s75
    %p79 = pneg %p73
    %p80 = scmp.eq.s32.totalorder %s12, 1
    %p81 = por %p79, %p80
    %p82 = scmp.ne.s32.totalorder %s74, %s77
    %p83 = scmp.eq.s32.totalorder %s12, 0
    %p84 = por %p82, %p83
    %p85 = scmp.ne.s32.totalorder %s74, %s77
    %p86 = scmp.eq.s32.totalorder %s17, 1
    %p87 = por %p85, %p86
    %p88 = scmp.ne.s32.totalorder %s77, %s78
    %p89 = scmp.eq.s32.totalorder %s17, 0
    %p90 = por %p88, %p89
    %p91 = scmp.ne.s32.totalorder %s77, %s78
    %p92 = scmp.eq.s32.totalorder %s18, 1
    %p93 = por %p91, %p92
    %p95 = scmp.ne.s32.totalorder %s78, %s94
    %p96 = scmp.eq.s32.totalorder %s18, 0
    %p97 = por %p95, %p96
    %s99 = sadd.s32 %s98, 1
    %p102 = scmp.eq.s32.totalorder %s12, 1
    %p103 = scmp.ne.s32.totalorder %s98, %s100
    %p104 = scmp.eq.s32.totalorder %s12, 0
    %p105 = por %p103, %p104
    %p106 = scmp.ne.s32.totalorder %s98, %s100
    %p107 = scmp.eq.s32.totalorder %s17, 1
    %p108 = por %p106, %p107
    %p109 = scmp.ne.s32.totalorder %s100, %s101
    %p110 = scmp.eq.s32.totalorder %s17, 0
    %p111 = por %p109, %p110
    %p112 = scmp.ne.s32.totalorder %s100, %s101
    %p113 = scmp.eq.s32.totalorder %s18, 1
    %p114 = por %p112, %p113
    %p116 = scmp.ne.s32.totalorder %s101, %s115
    %p117 = scmp.eq.s32.totalorder %s18, 0
    %p118 = por %p116, %p117
    %s119 = ssub.s32 %s12, %s19
    %p120 = scmp.eq.s32.totalorder %s119, 0
    %s122 = sadd.s32 %s121, 1
    %s123 = scalar_select %p120, %s121, %s122
    %p126 = pneg %p120
    %p127 = scmp.eq.s32.totalorder %s12, 1
    %p128 = por %p126, %p127
    %p129 = scmp.ne.s32.totalorder %s121, %s124
    %p130 = scmp.eq.s32.totalorder %s12, 0
    %p131 = por %p129, %p130
    %p132 = scmp.ne.s32.totalorder %s121, %s124
    %p133 = scmp.eq.s32.totalorder %s17, 1
    %p134 = por %p132, %p133
    %p135 = scmp.ne.s32.totalorder %s124, %s125
    %p136 = scmp.eq.s32.totalorder %s17, 0
    %p137 = por %p135, %p136
    %p138 = scmp.ne.s32.totalorder %s124, %s125
    %p139 = scmp.eq.s32.totalorder %s18, 1
    %p140 = por %p138, %p139
    %p142 = scmp.ne.s32.totalorder %s125, %s141
    %p143 = scmp.eq.s32.totalorder %s18, 0
    %p144 = por %p142, %p143
    %s145 = ssub.s32 %s12, %s19
    %p146 = scmp.eq.s32.totalorder %s145, 0
    %s148 = sadd.s32 %s147, 1
    %s149 = scalar_select %p146, %s147, %s148
    %p152 = pneg %p146
    %p153 = scmp.eq.s32.totalorder %s12, 1
    %p154 = por %p152, %p153
    %p155 = scmp.ne.s32.totalorder %s147, %s150
    %p156 = scmp.eq.s32.totalorder %s12, 0
    %p157 = por %p155, %p156
    %p158 = scmp.ne.s32.totalorder %s147, %s150
    %p159 = scmp.eq.s32.totalorder %s17, 1
    %p160 = por %p158, %p159
    %p161 = scmp.ne.s32.totalorder %s150, %s151
    %p162 = scmp.eq.s32.totalorder %s17, 0
    %p163 = por %p161, %p162
    %p164 = scmp.ne.s32.totalorder %s150, %s151
    %p165 = scmp.eq.s32.totalorder %s18, 1
    %p166 = por %p164, %p165
    %p168 = scmp.ne.s32.totalorder %s151, %s167
    %p169 = scmp.eq.s32.totalorder %s18, 0
    %p170 = por %p168, %p169
    %s171 = ssub.s32 %s12, %s19
    %p172 = scmp.eq.s32.totalorder %s171, 0
    %s174 = sadd.s32 %s173, 1
    %s175 = scalar_select %p172, %s173, %s174
    %p178 = pneg %p172
    %p179 = scmp.eq.s32.totalorder %s12, 1
    %p180 = por %p178, %p179
    %p181 = scmp.ne.s32.totalorder %s173, %s176
    %p182 = scmp.eq.s32.totalorder %s12, 0
    %p183 = por %p181, %p182
    %p184 = scmp.ne.s32.totalorder %s173, %s176
    %p185 = scmp.eq.s32.totalorder %s17, 1
    %p186 = por %p184, %p185
    %p187 = scmp.ne.s32.totalorder %s176, %s177
    %p188 = scmp.eq.s32.totalorder %s17, 0
    %p189 = por %p187, %p188
    %p190 = scmp.ne.s32.totalorder %s176, %s177
    %p191 = scmp.eq.s32.totalorder %s18, 1
    %p192 = por %p190, %p191
    %p194 = scmp.ne.s32.totalorder %s177, %s193
    %p195 = scmp.eq.s32.totalorder %s18, 0
    %p196 = por %p194, %p195
    %p197 = scmp.le.s32.totalorder 1, %s12
    %p198 = scmp.lt.s32.totalorder %s12, 3
    %p199 = pnand %p197, %p198
    %p200 = pneg %p199
    // Predicated region
    $region9: #{wavlm_wrapper_forward.17} parent=5 // pred_check
      _
    $region10: #{wavlm_wrapper_forward.17} parent=5 // pred_check_branch
      %202 = sbr.rel (%p199) target = $region12
    $region11: #{wavlm_wrapper_forward.17} parent=5 // pred_region
      %s203 = ssub.s32 %s12, 1
      // Predicated region
      $region13: #{wavlm_wrapper_forward.17} parent=11 // pred_check
        %p204 = pneg %p111
      $region14: #{wavlm_wrapper_forward.17} parent=11 // pred_check_branch
        %206 = sbr.rel (%p204) target = $region16
      $region15: #{wavlm_wrapper_forward.17} parent=11 // pred_region
        _
      $region16: #{wavlm_wrapper_forward.17} parent=11 // pred_fallthru
        _
    $region12: #{wavlm_wrapper_forward.17} parent=5 // pred_fallthru
      _
    %p207 = scmp.lt.s32.totalorder %s12, 2
    // Predicated region
    $region17: #{wavlm_wrapper_forward.17} parent=5 // pred_check
      %p208 = pneg %p207
    $region18: #{wavlm_wrapper_forward.17} parent=5 // pred_check_branch
      %210 = sbr.rel (%p208) target = $region20
    $region19: #{wavlm_wrapper_forward.17} parent=5 // pred_region
      // Predicated region
      $region21: #{wavlm_wrapper_forward.17} parent=19 // pred_check
        %p211 = pneg %p32
      $region22: #{wavlm_wrapper_forward.17} parent=19 // pred_check_branch
        %213 = sbr.rel (%p211) target = $region24
      $region23: #{wavlm_wrapper_forward.17} parent=19 // pred_region
        %p214 = scmp.lt.s32.totalorder %s12, 1
        %s215 = scalar_select %p214, %s12, 1
        %s216 = smul.addr %s215, 4
        %s217 = smul.addr %s216, 8
        %s218 = scalar_lea.vmem %s0, %s217
      $region24: #{wavlm_wrapper_forward.17} parent=19 // pred_fallthru
        _
      // Predicated region
      $region25: #{wavlm_wrapper_forward.17} parent=19 // pred_check
        %p219 = pneg %p58
      $region26: #{wavlm_wrapper_forward.17} parent=19 // pred_check_branch
        %221 = sbr.rel (%p219) target = $region28
      $region27: #{wavlm_wrapper_forward.17} parent=19 // pred_region
        %p222 = scmp.lt.s32.totalorder %s12, 1
        %s223 = scalar_select %p222, %s12, 1
        %s224 = smul.addr %s223, 4
        %s225 = smul.addr %s224, 8
        %s226 = scalar_lea.vmem %s1, %s225
      $region28: #{wavlm_wrapper_forward.17} parent=19 // pred_fallthru
        _
      // Predicated region
      $region29: #{wavlm_wrapper_forward.17} parent=19 // pred_check
        %p227 = pneg %p84
      $region30: #{wavlm_wrapper_forward.17} parent=19 // pred_check_branch
        %229 = sbr.rel (%p227) target = $region32
      $region31: #{wavlm_wrapper_forward.17} parent=19 // pred_region
        %p230 = scmp.lt.s32.totalorder %s12, 1
        %s231 = scalar_select %p230, %s12, 1
        %s232 = smul.addr %s231, 4
        %s233 = smul.addr %s232, 8
        %s234 = scalar_lea.vmem %s2, %s233
      $region32: #{wavlm_wrapper_forward.17} parent=19 // pred_fallthru
        _
      // Predicated region
      $region33: #{wavlm_wrapper_forward.17} parent=19 // pred_check
        %p235 = pneg %p131
      $region34: #{wavlm_wrapper_forward.17} parent=19 // pred_check_branch
        %237 = sbr.rel (%p235) target = $region36
      $region35: #{wavlm_wrapper_forward.17} parent=19 // pred_region
        %p238 = scmp.lt.s32.totalorder %s12, 1
        %s239 = scalar_select %p238, %s12, 1
        %s240 = smul.addr %s239, 4
        %s241 = smul.addr %s240, 8
        %s242 = scalar_lea.vmem %s4, %s241
      $region36: #{wavlm_wrapper_forward.17} parent=19 // pred_fallthru
        _
      // Predicated region
      $region37: #{wavlm_wrapper_forward.17} parent=19 // pred_check
        %p243 = pneg %p157
      $region38: #{wavlm_wrapper_forward.17} parent=19 // pred_check_branch
        %245 = sbr.rel (%p243) target = $region40
      $region39: #{wavlm_wrapper_forward.17} parent=19 // pred_region
        %p246 = scmp.lt.s32.totalorder %s12, 1
        %s247 = scalar_select %p246, %s12, 1
        %s248 = scalar_lea.vmem %s5, %s247
      $region40: #{wavlm_wrapper_forward.17} parent=19 // pred_fallthru
        _
    $region20: #{wavlm_wrapper_forward.17} parent=5 // pred_fallthru
      _
    %p249 = scmp.le.s32.totalorder 1, %s12
    %p250 = scmp.lt.s32.totalorder %s12, 3
    %p251 = pnand %p249, %p250
    %p252 = pneg %p251
    // Predicated region
    $region41: #{wavlm_wrapper_forward.17} parent=5 // pred_check
      _
    $region42: #{wavlm_wrapper_forward.17} parent=5 // pred_check_branch
      %254 = sbr.rel (%p251) target = $region44
    $region43: #{wavlm_wrapper_forward.17} parent=5 // pred_region
      %s255 = ssub.s32 %s12, 1
      %p256 = scmp.lt.s32.totalorder %s17, 1
      %s257 = scalar_select %p256, %s17, 1
      %s258 = smul.addr %s257, 4
      %s259 = smul.addr %s258, 8
      %s260 = scalar_lea.vmem %s0, %s259
      %p261 = pneg %p38
      %p262 = pneg %p35
      %p263 = scmp.lt.s32.totalorder %s17, 1
      %s264 = scalar_select %p263, %s17, 1
      %s265 = smul.addr %s264, 4
      %s266 = smul.addr %s265, 8
      %s267 = scalar_lea.vmem %s1, %s266
      %p268 = pneg %p64
      %p269 = pneg %p61
      %p270 = scmp.lt.s32.totalorder %s17, 1
      %s271 = scalar_select %p270, %s17, 1
      %s272 = smul.addr %s271, 4
      %s273 = smul.addr %s272, 8
      %s274 = scalar_lea.vmem %s2, %s273
      %p275 = pneg %p90
      %p276 = pneg %p87
      %p277 = pneg %p111
      %p278 = pneg %p108
      %p279 = scmp.lt.s32.totalorder %s17, 1
      %s280 = scalar_select %p279, %s17, 1
      %s281 = smul.addr %s280, 4
      %s282 = smul.addr %s281, 8
      %s283 = scalar_lea.vmem %s4, %s282
      %p284 = pneg %p137
      %p285 = pneg %p134
      %p286 = scmp.lt.s32.totalorder %s17, 1
      %s287 = scalar_select %p286, %s17, 1
      %s288 = scalar_lea.vmem %s5, %s287
      %p289 = pneg %p163
      %p290 = pneg %p160
      %p291 = pneg %p189
      %p292 = pneg %p186
      %p293 = scmp.lt.s32.totalorder %s17, 1
      %s294 = scalar_select %p293, %s17, 1
      %s295 = smul.addr %s294, 4
      %s296 = smul.addr %s295, 8
      %s297 = scalar_lea.vmem %s6, %s296
      %p298 = scmp.lt.s32.totalorder %s17, 1
      %s299 = scalar_select %p298, %s17, 1
      %s300 = smul.addr %s299, 4
      %s301 = smul.addr %s300, 8
      %s302 = scalar_lea.vmem %s0, %s301
      %p303 = scmp.lt.s32.totalorder %s17, 1
      %s304 = scalar_select %p303, %s17, 1
      %s305 = smul.addr %s304, 4
      %s306 = smul.addr %s305, 8
      %s307 = scalar_lea.vmem %s1, %s306
      %p308 = scmp.lt.s32.totalorder %s17, 1
      %s309 = scalar_select %p308, %s17, 1
      %s310 = smul.addr %s309, 4
      %s311 = smul.addr %s310, 8
      %s312 = scalar_lea.vmem %s2, %s311
      %p313 = scmp.lt.s32.totalorder %s17, 1
      %s314 = scalar_select %p313, %s17, 1
      %s315 = smul.addr %s314, 4
      %s316 = smul.addr %s315, 8
      %s317 = scalar_lea.vmem %s4, %s316
      %p318 = scmp.lt.s32.totalorder %s17, 1
      %s319 = scalar_select %p318, %s17, 1
      %s320 = scalar_lea.vmem %s5, %s319
      %p321 = scmp.lt.s32.totalorder %s17, 1
      %s322 = scalar_select %p321, %s17, 1
      %s323 = smul.addr %s322, 4
      %s324 = smul.addr %s323, 8
      %s325 = scalar_lea.vmem %s6, %s324
      %v327 = vld [vmem:[%s302] sm:$0xff]
      %v328 = vld [vmem:[%s302 + $0x8] sm:$0xff]
      %v329 = vld [vmem:[%s302 + $0x10] sm:$0xff]
      %v330 = vld [vmem:[%s302 + $0x18] sm:$0xff]
      %v331 = vpack.c.bf16 %v327, %v327
      %v332 = vpack.c.bf16 %v328, %v328
      %v333 = vpack.c.bf16 %v329, %v329
      %v334 = vpack.c.bf16 %v330, %v330
      %v335 = vld [vmem:[%s307] sm:$0xff]
      %v336 = vld [vmem:[%s307 + $0x8] sm:$0xff]
      %v337 = vld [vmem:[%s307 + $0x10] sm:$0xff]
      %v338 = vld [vmem:[%s307 + $0x18] sm:$0xff]
      %v339 = vpack.c.bf16 %v335, %v335
      %v340 = vpack.c.bf16 %v336, %v336
      %v341 = vpack.c.bf16 %v337, %v337
      %v342 = vpack.c.bf16 %v338, %v338
      %v343 = vld [vmem:[%s312] sm:$0xff]
      %v344 = vld [vmem:[%s312 + $0x8] sm:$0xff]
      %v345 = vld [vmem:[%s312 + $0x10] sm:$0xff]
      %v346 = vld [vmem:[%s312 + $0x18] sm:$0xff]
      %v347 = vpack.c.bf16 %v343, %v343
      %v348 = vpack.c.bf16 %v344, %v344
      %v349 = vpack.c.bf16 %v345, %v345
      %v350 = vpack.c.bf16 %v346, %v346
      %v351 = vld [vmem:[%s3] sm:$0xff]
      %v352 = vld [vmem:[%s3 + $0x8] sm:$0xff]
      %v353 = vld [vmem:[%s3 + $0x10] sm:$0xff]
      %v354 = vld [vmem:[%s3 + $0x18] sm:$0xff]
      %v355 = vld [vmem:[%s317] sm:$0xff]
      %v356 = vld [vmem:[%s317 + $0x8] sm:$0xff]
      %v357 = vld [vmem:[%s317 + $0x10] sm:$0xff]
      %v358 = vld [vmem:[%s317 + $0x18] sm:$0xff]
      %v359 = vld [vmem:[%s320] sm:$0x1]
      %361 = vset.pattern.permute.xlu0 0
      %362 = vperm.xlu0 %361, %v355
      %v363 = vpop.permute.xlu0 %362
      %366 = vset.pattern.permute.xlu0 0
      %367 = vperm.xlu0 %366, %v356
      %v368 = vpop.permute.xlu0 %367
      %371 = vset.pattern.permute.xlu0 0
      %372 = vperm.xlu0 %371, %v357
      %v373 = vpop.permute.xlu0 %372
      %376 = vset.pattern.permute.xlu0 0
      %377 = vperm.xlu0 %376, %v358
      %v378 = vpop.permute.xlu0 %377
      %v380 = vmul.f32 %v363, %v351
      %v381 = vmul.f32 %v368, %v352
      %v382 = vmul.f32 %v373, %v353
      %v383 = vmul.f32 %v378, %v354
      %vm384 = vcmask 64512
      %v386 = vsel %vm384, %v331, 0
      %v389 = vsel %vm384, %v339, 0
      %391 = vmatprep.subr.bf16.mxu0 0
      %392 = vmatpush1.bf16.xpose.msra.mxu0 %v389
      %393 = vmatprep.subr.bf16.mxu0 0
      %394 = vmatpush1.bf16.xpose.msra.mxu0 0
      %395 = vmatprep.subr.bf16.mxu0 0
      %396 = vmatpush1.bf16.xpose.msra.mxu0 0
      %397 = vmatprep.subr.bf16.mxu0 0
      %398 = vmatpush1.bf16.xpose.msra.mxu0 0
      %399 = vmatprep.subr.bf16.mxu0 0
      %400 = vmatpush1.bf16.xpose.msra.mxu0 0
      %401 = vmatprep.subr.bf16.mxu0 0
      %402 = vmatpush1.bf16.xpose.msra.mxu0 0
      %403 = vmatprep.subr.bf16.mxu0 0
      %404 = vmatpush1.bf16.xpose.msra.mxu0 0
      %405 = vmatprep.subr.bf16.mxu0 0
      %406 = vmatpush1.bf16.xpose.msra.mxu0 0
      %407 = vmatprep.subr.bf16.mxu0 0
      %408 = vmatpush1.bf16.xpose.msra.mxu0 0
      %409 = vmatprep.subr.bf16.mxu0 0
      %410 = vmatpush1.bf16.xpose.msra.mxu0 0
      %411 = vmatprep.subr.bf16.mxu0 0
      %412 = vmatpush1.bf16.xpose.msra.mxu0 0
      %413 = vmatprep.subr.bf16.mxu0 0
      %414 = vmatpush1.bf16.xpose.msra.mxu0 0
      %415 = vmatprep.subr.bf16.mxu0 0
      %416 = vmatpush1.bf16.xpose.msra.mxu0 0
      %417 = vmatprep.subr.bf16.mxu0 0
      %418 = vmatpush1.bf16.xpose.msra.mxu0 0
      %419 = vmatprep.subr.bf16.mxu0 0
      %420 = vmatpush1.bf16.xpose.msra.mxu0 0
      %421 = vmatprep.subr.bf16.mxu0 0
      %422 = vmatpush1.bf16.xpose.msra.mxu0 0
      %423 = vmatprep.mubr.bf16.mxu0 0
      %424 = vmatmul.mubr.bf16.gmra.mrb[0].mxu0 %v386
      %v425 = vpop.f32.mrb[0].mxu0
      %v426 = vadd.f32 %v380, %v425
      %v427 = vpop.f32.mrb[0].mxu0
      %v428 = vpop.f32.mrb[0].mxu0
      %v429 = vpop.f32.mrb[0].mxu0
      %430 = vdwg.mxu0
      %v432 = vsel %vm384, %v332, 0
      %v435 = vsel %vm384, %v340, 0
      %437 = vmatprep.subr.bf16.mxu0 0
      %438 = vmatpush1.bf16.xpose.msra.mxu0 %v435
      %439 = vmatprep.subr.bf16.mxu0 0
      %440 = vmatpush1.bf16.xpose.msra.mxu0 0
      %441 = vmatprep.subr.bf16.mxu0 0
      %442 = vmatpush1.bf16.xpose.msra.mxu0 0
      %443 = vmatprep.subr.bf16.mxu0 0
      %444 = vmatpush1.bf16.xpose.msra.mxu0 0
      %445 = vmatprep.subr.bf16.mxu0 0
      %446 = vmatpush1.bf16.xpose.msra.mxu0 0
      %447 = vmatprep.subr.bf16.mxu0 0
      %448 = vmatpush1.bf16.xpose.msra.mxu0 0
      %449 = vmatprep.subr.bf16.mxu0 0
      %450 = vmatpush1.bf16.xpose.msra.mxu0 0
      %451 = vmatprep.subr.bf16.mxu0 0
      %452 = vmatpush1.bf16.xpose.msra.mxu0 0
      %453 = vmatprep.subr.bf16.mxu0 0
      %454 = vmatpush1.bf16.xpose.msra.mxu0 0
      %455 = vmatprep.subr.bf16.mxu0 0
      %456 = vmatpush1.bf16.xpose.msra.mxu0 0
      %457 = vmatprep.subr.bf16.mxu0 0
      %458 = vmatpush1.bf16.xpose.msra.mxu0 0
      %459 = vmatprep.subr.bf16.mxu0 0
      %460 = vmatpush1.bf16.xpose.msra.mxu0 0
      %461 = vmatprep.subr.bf16.mxu0 0
      %462 = vmatpush1.bf16.xpose.msra.mxu0 0
      %463 = vmatprep.subr.bf16.mxu0 0
      %464 = vmatpush1.bf16.xpose.msra.mxu0 0
      %465 = vmatprep.subr.bf16.mxu0 0
      %466 = vmatpush1.bf16.xpose.msra.mxu0 0
      %467 = vmatprep.subr.bf16.mxu0 0
      %468 = vmatpush1.bf16.xpose.msra.mxu0 0
      %469 = vmatprep.mubr.bf16.mxu0 0
      %470 = vmatmul.mubr.bf16.gmra.mrb[0].mxu0 %v432
      %v471 = vpop.f32.mrb[0].mxu0
      %v472 = vadd.f32 %v381, %v471
      %v473 = vpop.f32.mrb[0].mxu0
      %v474 = vpop.f32.mrb[0].mxu0
      %v475 = vpop.f32.mrb[0].mxu0
      %476 = vdwg.mxu0
      %v478 = vsel %vm384, %v333, 0
      %v481 = vsel %vm384, %v341, 0
      %483 = vmatprep.subr.bf16.mxu0 0
      %484 = vmatpush1.bf16.xpose.msra.mxu0 %v481
      %485 = vmatprep.subr.bf16.mxu0 0
      %486 = vmatpush1.bf16.xpose.msra.mxu0 0
      %487 = vmatprep.subr.bf16.mxu0 0
      %488 = vmatpush1.bf16.xpose.msra.mxu0 0
      %489 = vmatprep.subr.bf16.mxu0 0
      %490 = vmatpush1.bf16.xpose.msra.mxu0 0
      %491 = vmatprep.subr.bf16.mxu0 0
      %492 = vmatpush1.bf16.xpose.msra.mxu0 0
      %493 = vmatprep.subr.bf16.mxu0 0
      %494 = vmatpush1.bf16.xpose.msra.mxu0 0
      %495 = vmatprep.subr.bf16.mxu0 0
      %496 = vmatpush1.bf16.xpose.msra.mxu0 0
      %497 = vmatprep.subr.bf16.mxu0 0
      %498 = vmatpush1.bf16.xpose.msra.mxu0 0
      %499 = vmatprep.subr.bf16.mxu0 0
      %500 = vmatpush1.bf16.xpose.msra.mxu0 0
      %501 = vmatprep.subr.bf16.mxu0 0
      %502 = vmatpush1.bf16.xpose.msra.mxu0 0
      %503 = vmatprep.subr.bf16.mxu0 0
      %504 = vmatpush1.bf16.xpose.msra.mxu0 0
      %505 = vmatprep.subr.bf16.mxu0 0
      %506 = vmatpush1.bf16.xpose.msra.mxu0 0
      %507 = vmatprep.subr.bf16.mxu0 0
      %508 = vmatpush1.bf16.xpose.msra.mxu0 0
      %509 = vmatprep.subr.bf16.mxu0 0
      %510 = vmatpush1.bf16.xpose.msra.mxu0 0
      %511 = vmatprep.subr.bf16.mxu0 0
      %512 = vmatpush1.bf16.xpose.msra.mxu0 0
      %513 = vmatprep.subr.bf16.mxu0 0
      %514 = vmatpush1.bf16.xpose.msra.mxu0 0
      %515 = vmatprep.mubr.bf16.mxu0 0
      %516 = vmatmul.mubr.bf16.gmra.mrb[0].mxu0 %v478
      %v517 = vpop.f32.mrb[0].mxu0
      %v518 = vadd.f32 %v382, %v517
      %v519 = vpop.f32.mrb[0].mxu0
      %v520 = vpop.f32.mrb[0].mxu0
      %v521 = vpop.f32.mrb[0].mxu0
      %522 = vdwg.mxu0
      %v524 = vsel %vm384, %v334, 0
      %v527 = vsel %vm384, %v342, 0
      %529 = vmatprep.subr.bf16.mxu0 0
      %530 = vmatpush1.bf16.xpose.msra.mxu0 %v527
      %531 = vmatprep.subr.bf16.mxu0 0
      %532 = vmatpush1.bf16.xpose.msra.mxu0 0
      %533 = vmatprep.subr.bf16.mxu0 0
      %534 = vmatpush1.bf16.xpose.msra.mxu0 0
      %535 = vmatprep.subr.bf16.mxu0 0
      %536 = vmatpush1.bf16.xpose.msra.mxu0 0
      %537 = vmatprep.subr.bf16.mxu0 0
      %538 = vmatpush1.bf16.xpose.msra.mxu0 0
      %539 = vmatprep.subr.bf16.mxu0 0
      %540 = vmatpush1.bf16.xpose.msra.mxu0 0
      %541 = vmatprep.subr.bf16.mxu0 0
      %542 = vmatpush1.bf16.xpose.msra.mxu0 0
      %543 = vmatprep.subr.bf16.mxu0 0
      %544 = vmatpush1.bf16.xpose.msra.mxu0 0
      %545 = vmatprep.subr.bf16.mxu0 0
      %546 = vmatpush1.bf16.xpose.msra.mxu0 0
      %547 = vmatprep.subr.bf16.mxu0 0
      %548 = vmatpush1.bf16.xpose.msra.mxu0 0
      %549 = vmatprep.subr.bf16.mxu0 0
      %550 = vmatpush1.bf16.xpose.msra.mxu0 0
      %551 = vmatprep.subr.bf16.mxu0 0
      %552 = vmatpush1.bf16.xpose.msra.mxu0 0
      %553 = vmatprep.subr.bf16.mxu0 0
      %554 = vmatpush1.bf16.xpose.msra.mxu0 0
      %555 = vmatprep.subr.bf16.mxu0 0
      %556 = vmatpush1.bf16.xpose.msra.mxu0 0
      %557 = vmatprep.subr.bf16.mxu0 0
      %558 = vmatpush1.bf16.xpose.msra.mxu0 0
      %559 = vmatprep.subr.bf16.mxu0 0
      %560 = vmatpush1.bf16.xpose.msra.mxu0 0
      %561 = vmatprep.mubr.bf16.mxu0 0
      %562 = vmatmul.mubr.bf16.gmra.mrb[0].mxu0 %v524
      %v563 = vpop.f32.mrb[0].mxu0
      %v564 = vadd.f32 %v383, %v563
      %v565 = vpop.f32.mrb[0].mxu0
      %v566 = vpop.f32.mrb[0].mxu0
      %v567 = vpop.f32.mrb[0].mxu0
      %568 = vdwg.mxu0
      %v570 = vlaneseq
      %v571 = vshrl.u32 %v570, 7
      %v572 = vsub.s32 0, %v571
      %v573 = vrot.slane %v359, %v572
      %v575 = vadd.f32 %v426, %v573
      %v576 = vadd.f32 %v472, %v573
      %v577 = vadd.f32 %v518, %v573
      %v578 = vadd.f32 %v564, %v573
      %v579 = vsel %vm384, %v575, -inf
      %580 = vmax.xlane.f32.xlu0 %v579
      %v581 = vpop.xlane.xlu0 %580
      %v582 = vsel %vm384, %v576, -inf
      %583 = vmax.xlane.f32.xlu0 %v582
      %v584 = vpop.xlane.xlu0 %583
      %v585 = vsel %vm384, %v577, -inf
      %586 = vmax.xlane.f32.xlu0 %v585
      %v587 = vpop.xlane.xlu0 %586
      %v588 = vsel %vm384, %v578, -inf
      %589 = vmax.xlane.f32.xlu0 %v588
      %v590 = vpop.xlane.xlu0 %589
      %v591 = vsub.f32 %v575, %v581
      %v592 = vsub.f32 %v576, %v584
      %v593 = vsub.f32 %v577, %v587
      %v594 = vsub.f32 %v578, %v590
      %v595 = vmul.f32 %v591, 1.442695
      %v596 = vpow.pop %v595
      %v597 = vmul.f32 %v592, 1.442695
      %v598 = vpow.pop %v597
      %v599 = vmul.f32 %v593, 1.442695
      %v600 = vpow.pop %v599
      %v601 = vmul.f32 %v594, 1.442695
      %v602 = vpow.pop %v601
      %v603 = vsel %vm384, %v596, 0.0
      %604 = vadd.xlane.f32.xlu0 %v603
      %v605 = vpop.xlane.xlu0 %604
      %v606 = vsel %vm384, %v598, 0.0
      %607 = vadd.xlane.f32.xlu0 %v606
      %v608 = vpop.xlane.xlu0 %607
      %v609 = vsel %vm384, %v600, 0.0
      %610 = vadd.xlane.f32.xlu0 %v609
      %v611 = vpop.xlane.xlu0 %610
      %v612 = vsel %vm384, %v602, 0.0
      %613 = vadd.xlane.f32.xlu0 %v612
      %v614 = vpop.xlane.xlu0 %613
      %v615 = vrcp.pop %v605
      %v616 = vrcp.pop %v608
      %v617 = vrcp.pop %v611
      %v618 = vrcp.pop %v614
      %v619 = vmul.f32 %v596, %v615
      %v620 = vmul.f32 %v598, %v616
      %v621 = vmul.f32 %v600, %v617
      %v622 = vmul.f32 %v602, %v618
      %v623 = vpack.c.bf16 %v619, %v619
      %v624 = vpack.c.bf16 %v620, %v620
      %v625 = vpack.c.bf16 %v621, %v621
      %v626 = vpack.c.bf16 %v622, %v622
      %v628 = vsel %vm384, %v623, 0
      %vm630 = vcmask 1043456
      %v632 = vsel %vm630, %v347, 0
      %634 = vmatprep.subr.bf16.mxu0 0
      %635 = vmatpush1.bf16.msra.mxu0 %v632
      %636 = vmatprep.subr.bf16.mxu0 0
      %637 = vmatpush1.bf16.msra.mxu0 0
      %638 = vmatprep.subr.bf16.mxu0 0
      %639 = vmatpush1.bf16.msra.mxu0 0
      %640 = vmatprep.subr.bf16.mxu0 0
      %641 = vmatpush1.bf16.msra.mxu0 0
      %642 = vmatprep.subr.bf16.mxu0 0
      %643 = vmatpush1.bf16.msra.mxu0 0
      %644 = vmatprep.subr.bf16.mxu0 0
      %645 = vmatpush1.bf16.msra.mxu0 0
      %646 = vmatprep.subr.bf16.mxu0 0
      %647 = vmatpush1.bf16.msra.mxu0 0
      %648 = vmatprep.subr.bf16.mxu0 0
      %649 = vmatpush1.bf16.msra.mxu0 0
      %650 = vmatprep.subr.bf16.mxu0 0
      %651 = vmatpush1.bf16.msra.mxu0 0
      %652 = vmatprep.subr.bf16.mxu0 0
      %653 = vmatpush1.bf16.msra.mxu0 0
      %654 = vmatprep.subr.bf16.mxu0 0
      %655 = vmatpush1.bf16.msra.mxu0 0
      %656 = vmatprep.subr.bf16.mxu0 0
      %657 = vmatpush1.bf16.msra.mxu0 0
      %658 = vmatprep.subr.bf16.mxu0 0
      %659 = vmatpush1.bf16.msra.mxu0 0
      %660 = vmatprep.subr.bf16.mxu0 0
      %661 = vmatpush1.bf16.msra.mxu0 0
      %662 = vmatprep.subr.bf16.mxu0 0
      %663 = vmatpush1.bf16.msra.mxu0 0
      %664 = vmatprep.subr.bf16.mxu0 0
      %665 = vmatpush1.bf16.msra.mxu0 0
      %666 = vmatprep.mubr.bf16.mxu0 0
      %667 = vmatmul.mubr.bf16.gmra.mrb[0].mxu0 %v628
      %v668 = vpop.f32.mrb[0].mxu0
      %v669 = vadd.f32 0.0, %v668
      %v670 = vpop.f32.mrb[0].mxu0
      %v671 = vpop.f32.mrb[0].mxu0
      %v672 = vpop.f32.mrb[0].mxu0
      %673 = vdwg.mxu0
      %v675 = vsel %vm384, %v624, 0
      %v678 = vsel %vm630, %v348, 0
      %680 = vmatprep.subr.bf16.mxu0 0
      %681 = vmatpush1.bf16.msra.mxu0 %v678
      %682 = vmatprep.subr.bf16.mxu0 0
      %683 = vmatpush1.bf16.msra.mxu0 0
      %684 = vmatprep.subr.bf16.mxu0 0
      %685 = vmatpush1.bf16.msra.mxu0 0
      %686 = vmatprep.subr.bf16.mxu0 0
      %687 = vmatpush1.bf16.msra.mxu0 0
      %688 = vmatprep.subr.bf16.mxu0 0
      %689 = vmatpush1.bf16.msra.mxu0 0
      %690 = vmatprep.subr.bf16.mxu0 0
      %691 = vmatpush1.bf16.msra.mxu0 0
      %692 = vmatprep.subr.bf16.mxu0 0
      %693 = vmatpush1.bf16.msra.mxu0 0
      %694 = vmatprep.subr.bf16.mxu0 0
      %695 = vmatpush1.bf16.msra.mxu0 0
      %696 = vmatprep.subr.bf16.mxu0 0
      %697 = vmatpush1.bf16.msra.mxu0 0
      %698 = vmatprep.subr.bf16.mxu0 0
      %699 = vmatpush1.bf16.msra.mxu0 0
      %700 = vmatprep.subr.bf16.mxu0 0
      %701 = vmatpush1.bf16.msra.mxu0 0
      %702 = vmatprep.subr.bf16.mxu0 0
      %703 = vmatpush1.bf16.msra.mxu0 0
      %704 = vmatprep.subr.bf16.mxu0 0
      %705 = vmatpush1.bf16.msra.mxu0 0
      %706 = vmatprep.subr.bf16.mxu0 0
      %707 = vmatpush1.bf16.msra.mxu0 0
      %708 = vmatprep.subr.bf16.mxu0 0
      %709 = vmatpush1.bf16.msra.mxu0 0
      %710 = vmatprep.subr.bf16.mxu0 0
      %711 = vmatpush1.bf16.msra.mxu0 0
      %712 = vmatprep.mubr.bf16.mxu0 0
      %713 = vmatmul.mubr.bf16.gmra.mrb[0].mxu0 %v675
      %v714 = vpop.f32.mrb[0].mxu0
      %v715 = vadd.f32 0.0, %v714
      %v716 = vpop.f32.mrb[0].mxu0
      %v717 = vpop.f32.mrb[0].mxu0
      %v718 = vpop.f32.mrb[0].mxu0
      %719 = vdwg.mxu0
      %v721 = vsel %vm384, %v625, 0
      %v724 = vsel %vm630, %v349, 0
      %726 = vmatprep.subr.bf16.mxu0 0
      %727 = vmatpush1.bf16.msra.mxu0 %v724
      %728 = vmatprep.subr.bf16.mxu0 0
      %729 = vmatpush1.bf16.msra.mxu0 0
      %730 = vmatprep.subr.bf16.mxu0 0
      %731 = vmatpush1.bf16.msra.mxu0 0
      %732 = vmatprep.subr.bf16.mxu0 0
      %733 = vmatpush1.bf16.msra.mxu0 0
      %734 = vmatprep.subr.bf16.mxu0 0
      %735 = vmatpush1.bf16.msra.mxu0 0
      %736 = vmatprep.subr.bf16.mxu0 0
      %737 = vmatpush1.bf16.msra.mxu0 0
      %738 = vmatprep.subr.bf16.mxu0 0
      %739 = vmatpush1.bf16.msra.mxu0 0
      %740 = vmatprep.subr.bf16.mxu0 0
      %741 = vmatpush1.bf16.msra.mxu0 0
      %742 = vmatprep.subr.bf16.mxu0 0
      %743 = vmatpush1.bf16.msra.mxu0 0
      %744 = vmatprep.subr.bf16.mxu0 0
      %745 = vmatpush1.bf16.msra.mxu0 0
      %746 = vmatprep.subr.bf16.mxu0 0
      %747 = vmatpush1.bf16.msra.mxu0 0
      %748 = vmatprep.subr.bf16.mxu0 0
      %749 = vmatpush1.bf16.msra.mxu0 0
      %750 = vmatprep.subr.bf16.mxu0 0
      %751 = vmatpush1.bf16.msra.mxu0 0
      %752 = vmatprep.subr.bf16.mxu0 0
      %753 = vmatpush1.bf16.msra.mxu0 0
      %754 = vmatprep.subr.bf16.mxu0 0
      %755 = vmatpush1.bf16.msra.mxu0 0
      %756 = vmatprep.subr.bf16.mxu0 0
      %757 = vmatpush1.bf16.msra.mxu0 0
      %758 = vmatprep.mubr.bf16.mxu0 0
      %759 = vmatmul.mubr.bf16.gmra.mrb[0].mxu0 %v721
      %v760 = vpop.f32.mrb[0].mxu0
      %v761 = vadd.f32 0.0, %v760
      %v762 = vpop.f32.mrb[0].mxu0
      %v763 = vpop.f32.mrb[0].mxu0
      %v764 = vpop.f32.mrb[0].mxu0
      %765 = vdwg.mxu0
      %v767 = vsel %vm384, %v626, 0
      %v770 = vsel %vm630, %v350, 0
      %772 = vmatprep.subr.bf16.mxu0 0
      %773 = vmatpush1.bf16.msra.mxu0 %v770
      %774 = vmatprep.subr.bf16.mxu0 0
      %775 = vmatpush1.bf16.msra.mxu0 0
      %776 = vmatprep.subr.bf16.mxu0 0
      %777 = vmatpush1.bf16.msra.mxu0 0
      %778 = vmatprep.subr.bf16.mxu0 0
      %779 = vmatpush1.bf16.msra.mxu0 0
      %780 = vmatprep.subr.bf16.mxu0 0
      %781 = vmatpush1.bf16.msra.mxu0 0
      %782 = vmatprep.subr.bf16.mxu0 0
      %783 = vmatpush1.bf16.msra.mxu0 0
      %784 = vmatprep.subr.bf16.mxu0 0
      %785 = vmatpush1.bf16.msra.mxu0 0
      %786 = vmatprep.subr.bf16.mxu0 0
      %787 = vmatpush1.bf16.msra.mxu0 0
      %788 = vmatprep.subr.bf16.mxu0 0
      %789 = vmatpush1.bf16.msra.mxu0 0
      %790 = vmatprep.subr.bf16.mxu0 0
      %791 = vmatpush1.bf16.msra.mxu0 0
      %792 = vmatprep.subr.bf16.mxu0 0
      %793 = vmatpush1.bf16.msra.mxu0 0
      %794 = vmatprep.subr.bf16.mxu0 0
      %795 = vmatpush1.bf16.msra.mxu0 0
      %796 = vmatprep.subr.bf16.mxu0 0
      %797 = vmatpush1.bf16.msra.mxu0 0
      %798 = vmatprep.subr.bf16.mxu0 0
      %799 = vmatpush1.bf16.msra.mxu0 0
      %800 = vmatprep.subr.bf16.mxu0 0
      %801 = vmatpush1.bf16.msra.mxu0 0
      %802 = vmatprep.subr.bf16.mxu0 0
      %803 = vmatpush1.bf16.msra.mxu0 0
      %804 = vmatprep.mubr.bf16.mxu0 0
      %805 = vmatmul.mubr.bf16.gmra.mrb[0].mxu0 %v767
      %v806 = vpop.f32.mrb[0].mxu0
      %v807 = vadd.f32 0.0, %v806
      %v808 = vpop.f32.mrb[0].mxu0
      %v809 = vpop.f32.mrb[0].mxu0
      %v810 = vpop.f32.mrb[0].mxu0
      %811 = vdwg.mxu0
      %812 = vst.msk [vmem:[%s325] sm:$0xff] %vm384, %v669
      %813 = vst.msk [vmem:[%s325 + $0x8] sm:$0xff] %vm384, %v715
      %814 = vst.msk [vmem:[%s325 + $0x10] sm:$0xff] %vm384, %v761
      %815 = vst.msk [vmem:[%s325 + $0x18] sm:$0xff] %vm384, %v807
      %p816 = scmp.lt.s32.totalorder %s17, 1
      %s817 = scalar_select %p816, %s17, 1
      %s818 = smul.addr %s817, 4
      %s819 = smul.addr %s818, 8
      %s820 = scalar_lea.vmem %s6, %s819
      // Predicated region
      $region45: #{wavlm_wrapper_forward.17} parent=43 // pred_check
        %p821 = pneg %p186
      $region46: #{wavlm_wrapper_forward.17} parent=43 // pred_check_branch
        %823 = sbr.rel (%p821) target = $region48
      $region47: #{wavlm_wrapper_forward.17} parent=43 // pred_region
        _
      $region48: #{wavlm_wrapper_forward.17} parent=43 // pred_fallthru
        _
    $region44: #{wavlm_wrapper_forward.17} parent=5 // pred_fallthru
      _
    %p824 = scmp.le.s32.totalorder 2, %s12
    // Predicated region
    $region49: #{wavlm_wrapper_forward.17} parent=5 // pred_check
      %p825 = pneg %p824
    $region50: #{wavlm_wrapper_forward.17} parent=5 // pred_check_branch
      %827 = sbr.rel (%p825) target = $region52
    $region51: #{wavlm_wrapper_forward.17} parent=5 // pred_region
      %s828 = ssub.s32 %s12, 2
      // Predicated region
      $region53: #{wavlm_wrapper_forward.17} parent=51 // pred_check
        %p829 = pneg %p192
      $region54: #{wavlm_wrapper_forward.17} parent=51 // pred_check_branch
        %831 = sbr.rel (%p829) target = $region56
      $region55: #{wavlm_wrapper_forward.17} parent=51 // pred_region
        %p832 = scmp.lt.s32.totalorder %s18, 1
        %s833 = scalar_select %p832, %s18, 1
        %s834 = smul.addr %s833, 4
        %s835 = smul.addr %s834, 8
        %s836 = scalar_lea.vmem %s6, %s835
      $region56: #{wavlm_wrapper_forward.17} parent=51 // pred_fallthru
        _
    $region52: #{wavlm_wrapper_forward.17} parent=5 // pred_fallthru
      _
  $region6: #{wavlm_wrapper_forward.17} parent=0 // loop_footer
    %s16 = sadd.s32 1, %s12
  $region7: #{wavlm_wrapper_forward.17} parent=0 // loop_footer_branch
    %11 = sbr.rel target = $region3
  $region8: #{wavlm_wrapper_forward.17} parent=0 // loop_exit
    _

// kernel: wavlm_wrapper_forward.20
$region0: #{wavlm_wrapper_forward.20}
  #allocation0 [shape = 'u32[]', space=smem, size = 0x4, offset = 0x4, fixed_abs, tag = 'smem constant byte address 0x4 - core index']
  #allocation1 [shape = 'u32[144,128]{1,0:T(1,128)}', space=vmem, size = 0x12000, scoped, tag = 'internal scratch']
  #allocation2 [shape = 'f32[16,32]{1,0:T(8,128)}', space=vmem, size = 0x2000, scoped, tag = 'scratch operand']
  %s0 = inlined_call_operand.vmem [shape: f32[16,32], index: 0, kind: input, shape index: {}]
  %s1 = inlined_call_operand.vmem [shape: bf16[32,64], index: 1, kind: input, shape index: {}]
  %s2 = inlined_call_operand.vmem [shape: f32[1,64], index: 2, kind: input, shape index: {}]
  %s3 = inlined_call_operand.vmem [shape: bf16[64,32], index: 3, kind: input, shape index: {}]
  %s4 = inlined_call_operand.vmem [shape: f32[1,32], index: 4, kind: input, shape index: {}]
  %s5 = inlined_call_operand.vmem [shape: f32[16,32], index: 5, kind: output, shape index: {}]
  %s6 = sld [smem:[#allocation0]]
  $region38: #{wavlm_wrapper_forward.20} parent=0
    _
  %s8 = ssub.s32 1, %s6
  %s9 = scalar_select 0, %s8, %s6
  // Predicated region
  $region2: #{wavlm_wrapper_forward.20} parent=0 // pred_check
    _
  $region3: #{wavlm_wrapper_forward.20} parent=0 // pred_check_branch
    %11 = sbr.rel (0) target = $region5
  $region4: #{wavlm_wrapper_forward.20} parent=0 // pred_region
    _
  $region5: #{wavlm_wrapper_forward.20} parent=0 // pred_fallthru
    _
  // Predicated region
  $region6: #{wavlm_wrapper_forward.20} parent=0 // pred_check
    _
  $region7: #{wavlm_wrapper_forward.20} parent=0 // pred_check_branch
    %13 = sbr.rel (0) target = $region9
  $region8: #{wavlm_wrapper_forward.20} parent=0 // pred_region
    _
  $region9: #{wavlm_wrapper_forward.20} parent=0 // pred_fallthru
    _
  // Predicated region
  $region10: #{wavlm_wrapper_forward.20} parent=0 // pred_check
    _
  $region11: #{wavlm_wrapper_forward.20} parent=0 // pred_check_branch
    %15 = sbr.rel (0) target = $region13
  $region12: #{wavlm_wrapper_forward.20} parent=0 // pred_region
    _
  $region13: #{wavlm_wrapper_forward.20} parent=0 // pred_fallthru
    _
  // Predicated region
  $region14: #{wavlm_wrapper_forward.20} parent=0 // pred_check
    _
  $region15: #{wavlm_wrapper_forward.20} parent=0 // pred_check_branch
    %17 = sbr.rel (0) target = $region17
  $region16: #{wavlm_wrapper_forward.20} parent=0 // pred_region
    _
  $region17: #{wavlm_wrapper_forward.20} parent=0 // pred_fallthru
    _
  // Predicated region
  $region18: #{wavlm_wrapper_forward.20} parent=0 // pred_check
    _
  $region19: #{wavlm_wrapper_forward.20} parent=0 // pred_check_branch
    %19 = sbr.rel (0) target = $region21
  $region20: #{wavlm_wrapper_forward.20} parent=0 // pred_region
    _
  $region21: #{wavlm_wrapper_forward.20} parent=0 // pred_fallthru
    _
  %p21 = scmp.eq.s32.totalorder 0, 0
  // Predicated region
  $region22: #{wavlm_wrapper_forward.20} parent=0 // pred_check
    %p22 = pneg %p21
  $region23: #{wavlm_wrapper_forward.20} parent=0 // pred_check_branch
    %24 = sbr.rel (%p22) target = $region25
  $region24: #{wavlm_wrapper_forward.20} parent=0 // pred_region
    %vm25 = vcmask 261120
    %26 = vst.msk [vmem:[#allocation2] sm:$0xff] %vm25, 0.0
    %27 = vst.msk [vmem:[#allocation2 + $0x8] sm:$0xff] %vm25, 0.0
  $region25: #{wavlm_wrapper_forward.20} parent=0 // pred_fallthru
    _
  %v28 = vld [vmem:[%s0] sm:$0xff]
  %v29 = vld [vmem:[%s0 + $0x8] sm:$0xff]
  %v30 = vpack.c.bf16 %v29, %v28
  %v31 = vld [vmem:[%s1] sm:$0xf]
  %v32 = vld [vmem:[%s1 + $0x4] sm:$0xf]
  %v33 = vld [vmem:[%s1 + $0x8] sm:$0xf]
  %v34 = vld [vmem:[%s1 + $0xc] sm:$0xf]
  %v35 = vld [vmem:[%s2] sm:$0x1]
  %v37 = vlaneseq
  %v38 = vshrl.u32 %v37, 7
  %v39 = vsub.s32 0, %v38
  %v40 = vrot.slane %v35, %v39
  %v46 = vunpack.c.l.b16 %v31
  %v47 = vunpack.c.l.b16 %v32
  %v48 = vunpack.c.l.b16 %v33
  %v49 = vunpack.c.l.b16 %v34
  %v50 = vpack.c.b16 %v47, %v46
  %v51 = vpack.c.b16 %v49, %v48
  %vm54 = vcmask 261120
  %v56 = vsel %vm54, %v30, 0
  %58 = vmatprep.subr.bf16.mxu0 0
  %59 = vmatpush1.bf16.msra.mxu0 %v50
  %60 = vmatprep.subr.bf16.mxu0 0
  %61 = vmatpush1.bf16.msra.mxu0 %v51
  %62 = vmatprep.subr.bf16.mxu0 0
  %63 = vmatpush1.bf16.msra.mxu0 0
  %64 = vmatprep.subr.bf16.mxu0 0
  %65 = vmatpush1.bf16.msra.mxu0 0
  %66 = vmatprep.subr.bf16.mxu0 0
  %67 = vmatpush1.bf16.msra.mxu0 0
  %68 = vmatprep.subr.bf16.mxu0 0
  %69 = vmatpush1.bf16.msra.mxu0 0
  %70 = vmatprep.subr.bf16.mxu0 0
  %71 = vmatpush1.bf16.msra.mxu0 0
  %72 = vmatprep.subr.bf16.mxu0 0
  %73 = vmatpush1.bf16.msra.mxu0 0
  %74 = vmatprep.subr.bf16.mxu0 0
  %75 = vmatpush1.bf16.msra.mxu0 0
  %76 = vmatprep.subr.bf16.mxu0 0
  %77 = vmatpush1.bf16.msra.mxu0 0
  %78 = vmatprep.subr.bf16.mxu0 0
  %79 = vmatpush1.bf16.msra.mxu0 0
  %80 = vmatprep.subr.bf16.mxu0 0
  %81 = vmatpush1.bf16.msra.mxu0 0
  %82 = vmatprep.subr.bf16.mxu0 0
  %83 = vmatpush1.bf16.msra.mxu0 0
  %84 = vmatprep.subr.bf16.mxu0 0
  %85 = vmatpush1.bf16.msra.mxu0 0
  %86 = vmatprep.subr.bf16.mxu0 0
  %87 = vmatpush1.bf16.msra.mxu0 0
  %88 = vmatprep.subr.bf16.mxu0 0
  %89 = vmatpush1.bf16.msra.mxu0 0
  %90 = vmatprep.mubr.bf16.mxu0 0
  %91 = vmatmul.mubr.bf16.gmra.mrb[0].mxu0 %v56
  %v92 = vpop.f32.mrb[0].mxu0
  %v93 = vadd.f32 %v40, %v92
  %v94 = vpop.f32.mrb[0].mxu0
  %v95 = vpop.f32.mrb[0].mxu0
  %v96 = vadd.f32 %v40, %v95
  %v97 = vpop.f32.mrb[0].mxu0
  %98 = vdwg.mxu0
  %v99 = vmul.f32 %v93, 0.5
  %v100 = vmul.f32 %v96, 0.5
  %v101 = vmul.f32 %v93, 0.70710677
  %v102 = vmul.f32 %v96, 0.70710677
  %v103 = verf.f32.pop %v101
  %v104 = verf.f32.pop %v102
  %v105 = vadd.f32 %v103, 1.0
  %v106 = vadd.f32 %v104, 1.0
  %v107 = vmul.f32 %v99, %v105
  %v108 = vmul.f32 %v100, %v106
  %v109 = vld [vmem:[#allocation2] sm:$0xff]
  %v110 = vld [vmem:[#allocation2 + $0x8] sm:$0xff]
  %v111 = vpack.c.bf16 %v108, %v107
  %v112 = vld [vmem:[%s3] sm:$0xf]
  %v113 = vld [vmem:[%s3 + $0x4] sm:$0xf]
  %v114 = vld [vmem:[%s3 + $0x8] sm:$0xf]
  %v115 = vld [vmem:[%s3 + $0xc] sm:$0xf]
  %v116 = vld [vmem:[%s3 + $0x10] sm:$0xf]
  %v117 = vld [vmem:[%s3 + $0x14] sm:$0xf]
  %v118 = vld [vmem:[%s3 + $0x18] sm:$0xf]
  %v119 = vld [vmem:[%s3 + $0x1c] sm:$0xf]
  %v128 = vunpack.c.l.b16 %v112
  %v129 = vunpack.c.l.b16 %v113
  %v130 = vunpack.c.l.b16 %v114
  %v131 = vunpack.c.l.b16 %v115
  %v132 = vunpack.c.l.b16 %v116
  %v133 = vunpack.c.l.b16 %v117
  %v134 = vunpack.c.l.b16 %v118
  %v135 = vunpack.c.l.b16 %v119
  %v136 = vpack.c.b16 %v129, %v128
  %v137 = vpack.c.b16 %v131, %v130
  %v138 = vpack.c.b16 %v133, %v132
  %v139 = vpack.c.b16 %v135, %v134
  %vm144 = vcmask 523264
  %v146 = vsel %vm144, %v111, 0
  %148 = vmatprep.subr.bf16.mxu0 0
  %149 = vmatpush1.bf16.msra.mxu0 %v136
  %150 = vmatprep.subr.bf16.mxu0 0
  %151 = vmatpush1.bf16.msra.mxu0 %v137
  %152 = vmatprep.subr.bf16.mxu0 0
  %153 = vmatpush1.bf16.msra.mxu0 %v138
  %154 = vmatprep.subr.bf16.mxu0 0
  %155 = vmatpush1.bf16.msra.mxu0 %v139
  %156 = vmatprep.subr.bf16.mxu0 0
  %157 = vmatpush1.bf16.msra.mxu0 0
  %158 = vmatprep.subr.bf16.mxu0 0
  %159 = vmatpush1.bf16.msra.mxu0 0
  %160 = vmatprep.subr.bf16.mxu0 0
  %161 = vmatpush1.bf16.msra.mxu0 0
  %162 = vmatprep.subr.bf16.mxu0 0
  %163 = vmatpush1.bf16.msra.mxu0 0
  %164 = vmatprep.subr.bf16.mxu0 0
  %165 = vmatpush1.bf16.msra.mxu0 0
  %166 = vmatprep.subr.bf16.mxu0 0
  %167 = vmatpush1.bf16.msra.mxu0 0
  %168 = vmatprep.subr.bf16.mxu0 0
  %169 = vmatpush1.bf16.msra.mxu0 0
  %170 = vmatprep.subr.bf16.mxu0 0
  %171 = vmatpush1.bf16.msra.mxu0 0
  %172 = vmatprep.subr.bf16.mxu0 0
  %173 = vmatpush1.bf16.msra.mxu0 0
  %174 = vmatprep.subr.bf16.mxu0 0
  %175 = vmatpush1.bf16.msra.mxu0 0
  %176 = vmatprep.subr.bf16.mxu0 0
  %177 = vmatpush1.bf16.msra.mxu0 0
  %178 = vmatprep.subr.bf16.mxu0 0
  %179 = vmatpush1.bf16.msra.mxu0 0
  %180 = vmatprep.mubr.bf16.mxu0 0
  %181 = vmatmul.mubr.bf16.gmra.mrb[0].mxu0 %v146
  %v182 = vpop.f32.mrb[0].mxu0
  %v183 = vadd.f32 0.0, %v182
  %v184 = vpop.f32.mrb[0].mxu0
  %v185 = vpop.f32.mrb[0].mxu0
  %v186 = vadd.f32 0.0, %v185
  %v187 = vpop.f32.mrb[0].mxu0
  %188 = vdwg.mxu0
  %v189 = vadd.f32 %v109, %v183
  %v190 = vadd.f32 %v110, %v186
  %191 = vst.msk [vmem:[#allocation2] sm:$0xff] %vm54, %v189
  %192 = vst.msk [vmem:[#allocation2 + $0x8] sm:$0xff] %vm54, %v190
  // Predicated region
  $region26: #{wavlm_wrapper_forward.20} parent=0 // pred_check
    %p193 = pneg %p21
  $region27: #{wavlm_wrapper_forward.20} parent=0 // pred_check_branch
    %195 = sbr.rel (%p193) target = $region29
  $region28: #{wavlm_wrapper_forward.20} parent=0 // pred_region
    %v196 = vld [vmem:[#allocation2] sm:$0xff]
    %v197 = vld [vmem:[#allocation2 + $0x8] sm:$0xff]
    %v198 = vld [vmem:[%s4] sm:$0x1]
    %v200 = vlaneseq
    %v201 = vshrl.u32 %v200, 7
    %v202 = vsub.s32 0, %v201
    %v203 = vrot.slane %v198, %v202
    %v205 = vadd.f32 %v196, %v203
    %v206 = vadd.f32 %v197, %v203
    %207 = vst.msk [vmem:[%s5] sm:$0xff] %vm54, %v205
    %208 = vst.msk [vmem:[%s5 + $0x8] sm:$0xff] %vm54, %v206
  $region29: #{wavlm_wrapper_forward.20} parent=0 // pred_fallthru
    _
  // Predicated region
  $region30: #{wavlm_wrapper_forward.20} parent=0 // pred_check
    _
  $region31: #{wavlm_wrapper_forward.20} parent=0 // pred_check_branch
    %210 = sbr.rel (0) target = $region33
  $region32: #{wavlm_wrapper_forward.20} parent=0 // pred_region
    _
  $region33: #{wavlm_wrapper_forward.20} parent=0 // pred_fallthru
    _
  // Predicated region
  $region34: #{wavlm_wrapper_forward.20} parent=0 // pred_check
    _
  $region35: #{wavlm_wrapper_forward.20} parent=0 // pred_check_branch
    %212 = sbr.rel (0) target = $region37
  $region36: #{wavlm_wrapper_forward.20} parent=0 // pred_region
    _
  $region37: #{wavlm_wrapper_forward.20} parent=0 // pred_fallthru
    _

</llo_original>
